<compile_context>
chip_gen: v5e
topology: v5e:2x2
jax: 0.10.0
libtpu: 0.0.40
codegen_flags: <defaults>
</compile_context>

<pallas_src>
import functools

import jax
import jax.numpy as jnp
from jax import lax
from jax.experimental import pallas as pl
from jax.experimental.pallas import tpu as pltpu

BN_EPS = 1e-5
LEAKY_SLOPE = 0.1
INPUT_H = 16                    # cfg.input_h
LANE = 128                      # lane width / channel padding target
VMEM_LIMIT = 32 * 1024 * 1024   # safe on v5e/v6e/v7x scoped VMEM budgets


# ----------------------------------------------------------------------------
# Small helpers
# ----------------------------------------------------------------------------
def _round_up(x, m):
    return (x + m - 1) // m * m


def _choose_tm(mp):
    # prefer >=2 grid steps with 256-row tiles, else 128, else one block
    if mp % 256 == 0 and mp >= 512:
        return 256
    if mp % 128 == 0:
        return 128
    return mp  # mp is always a multiple of 8


def _pad_rows(a, mp):
    m = a.shape[0]
    return a if m == mp else jnp.pad(a, ((0, mp - m), (0, 0)))


def _pad_last(x, target):
    c = x.shape[-1]
    if c == target:
        return x
    return jnp.pad(x, [(0, 0)] * (x.ndim - 1) + [(0, target - c)])


# ----------------------------------------------------------------------------
# Pallas kernels
# ----------------------------------------------------------------------------
def _conv_mm_kernel(*refs, k_sizes, leaky, has_res):
    """Fused (sum_i A_i @ W_i) * scale + bias (+ residual) (+ LeakyReLU)."""
    n_in = len(k_sizes)
    a_refs = refs[:n_in]
    w_ref = refs[n_in]
    scale_ref = refs[n_in + 1]
    bias_ref = refs[n_in + 2]
    res_ref = refs[n_in + 3] if has_res else None
    o_ref = refs[-1]

    acc = None
    off = 0
    for a_ref, k in zip(a_refs, k_sizes):
        part = jnp.dot(a_ref[...], w_ref[pl.ds(off, k), :],
                       preferred_element_type=jnp.float32)
        acc = part if acc is None else acc + part
        off += k
    y = acc * scale_ref[...] + bias_ref[...]
    if has_res:
        # Residual added after the folded-BN affine; only used for the
        # bottleneck skip, which has no trailing activation.
        y = y + res_ref[...]
    if leaky:
        y = jnp.where(y > 0.0, y, LEAKY_SLOPE * y)
    o_ref[...] = y


def _max_kernel(*refs):
    o_ref = refs[-1]
    m = refs[0][...]
    for r in refs[1:-1]:
        m = jnp.maximum(m, r[...])
    o_ref[...] = m


def _add_kernel(a_ref, b_ref, o_ref):
    o_ref[...] = a_ref[...] + b_ref[...]


def _yolo_kernel(p_ref, offx_ref, offy_ref, aw_ref, ah_ref, o_ref, *, stride):
    # p: (A, D, Ml) with D = 5 + num_classes; lane axis = B*G*G tile.
    p = p_ref[...]
    sig = 1.0 / (1.0 + jnp.exp(-p))
    # Softmax over the *anchor* axis -- this matches the reference's
    # torch.softmax(prediction[..., 5:], dim=1) on the (B, A, G, G, D) layout.
    m = jnp.max(p, axis=0, keepdims=True)
    e = jnp.exp(p - m)
    cls = e / jnp.sum(e, axis=0, keepdims=True)
    ex = e * jnp.exp(m)            # == exp(p); reuses the e = exp(p - m) pass
    bx = (sig + offx_ref[...]) * stride
    by = (sig + offy_ref[...]) * stride
    bw = ex * aw_ref[...] * stride
    bh = ex * ah_ref[...] * stride
    row = lax.broadcasted_iota(jnp.int32, p.shape, 1)
    out = jnp.where(row == 0, bx,
          jnp.where(row == 1, by,
          jnp.where(row == 2, bw,
          jnp.where(row == 3, bh,
          jnp.where(row == 4, sig, cls)))))
    o_ref[...] = out


# ----------------------------------------------------------------------------
# pallas_call wrappers (tiled over rows, parallel grid)
# ----------------------------------------------------------------------------
def _fused_conv_call(a_list, w, scale_p, bias_p, res2d, leaky):
    m = a_list[0].shape[0]
    mp = _round_up(m, 8)
    tm = _choose_tm(mp)
    a_list = [_pad_rows(a, mp) for a in a_list]
    k_sizes = tuple(int(a.shape[1]) for a in a_list)
    ktot = int(w.shape[0])
    has_res = res2d is not None

    in_specs = [pl.BlockSpec((tm, k), lambda i: (i, 0)) for k in k_sizes]
    in_specs += [pl.BlockSpec((ktot, LANE), lambda i: (0, 0)),
                 pl.BlockSpec((1, LANE), lambda i: (0, 0)),
                 pl.BlockSpec((1, LANE), lambda i: (0, 0))]
    args = list(a_list) + [w, scale_p, bias_p]
    if has_res:
        in_specs.append(pl.BlockSpec((tm, LANE), lambda i: (i, 0)))
        args.append(_pad_rows(res2d, mp))

    flops = 2 * mp * ktot * LANE
    bytes_acc = 4 * (mp * ktot + ktot * LANE +
                     mp * LANE * (2 if has_res else 1))
    out = pl.pallas_call(
        functools.partial(_conv_mm_kernel, k_sizes=k_sizes, leaky=leaky,
                          has_res=has_res),
        grid=(mp // tm,),
        in_specs=in_specs,
        out_specs=pl.BlockSpec((tm, LANE), lambda i: (i, 0)),
        out_shape=jax.ShapeDtypeStruct((mp, LANE), jnp.float32),
        compiler_params=pltpu.CompilerParams(
            dimension_semantics=("parallel",), vmem_limit_bytes=VMEM_LIMIT),
        cost_estimate=pl.CostEstimate(flops=flops, transcendentals=0,
                                      bytes_accessed=bytes_acc),
    )(*args)
    return out[:m] if mp != m else out


def _tiled_elementwise_call(kernel, args2d):
    m, c = args2d[0].shape
    mp = _round_up(m, 8)
    tm = _choose_tm(mp)
    args2d = [_pad_rows(a, mp) for a in args2d]
    out = pl.pallas_call(
        kernel,
        grid=(mp // tm,),
        in_specs=[pl.BlockSpec((tm, c), lambda i: (i, 0)) for _ in args2d],
        out_specs=pl.BlockSpec((tm, c), lambda i: (i, 0)),
        out_shape=jax.ShapeDtypeStruct((mp, c), jnp.float32),
        compiler_params=pltpu.CompilerParams(
            dimension_semantics=("parallel",), vmem_limit_bytes=VMEM_LIMIT),
        cost_estimate=pl.CostEstimate(
            flops=mp * c * len(args2d), transcendentals=0,
            bytes_accessed=4 * mp * c * (len(args2d) + 1)),
    )(*args2d)
    return out[:m] if mp != m else out


# ----------------------------------------------------------------------------
# Layer wrappers (glue in JAX, compute in Pallas)
# Feature maps are (data (N, H, W, 128), real_channel_count) tuples.
# ----------------------------------------------------------------------------
def bn_fold(bn):
    scale = bn["gamma"] / jnp.sqrt(bn["var"] + BN_EPS)
    bias = bn["beta"] - bn["mean"] * scale
    return scale, bias


def _pad_affine(scale, bias):
    cout = scale.shape[0]
    if cout < LANE:
        scale = jnp.concatenate([scale, jnp.ones((LANE - cout,), jnp.float32)])
        bias = jnp.concatenate([bias, jnp.zeros((LANE - cout,), jnp.float32)])
    return scale.reshape(1, LANE), bias.reshape(1, LANE)


def pointwise_conv(fm_in, w, scale, bias, leaky, residual=None):
    """1x1 conv over lane-padded maps.  Accepts a list of maps (fused route
    concat) and an optional residual map (fused bottleneck skip)."""
    fms = fm_in if isinstance(fm_in, list) else [fm_in]
    datas = [f[0] for f in fms]
    creals = [f[1] for f in fms]
    n, h, wd, _ = datas[0].shape
    m = n * h * wd
    a_list = [d.reshape(m, LANE) for d in datas]

    cout = int(w.shape[-1])
    w2 = w.reshape(-1, cout)
    blocks = []
    off = 0
    for c in creals:
        wb = jnp.zeros((LANE, LANE), jnp.float32)
        wb = wb.at[:c, :cout].set(w2[off:off + c])
        blocks.append(wb)
        off += c
    wpad = jnp.concatenate(blocks, axis=0) if len(blocks) > 1 else blocks[0]

    scale_p, bias_p = _pad_affine(scale, bias)
    res2d = residual[0].reshape(m, LANE) if residual is not None else None
    out = _fused_conv_call(a_list, wpad, scale_p, bias_p, res2d, leaky)
    return out.reshape(n, h, wd, LANE), cout


def _im2col(xr, ks, stride, pad):
    n, h, w, c = xr.shape
    xp = jnp.pad(xr, ((0, 0), (pad, pad), (pad, pad), (0, 0)))
    oh = (h + 2 * pad - ks) // stride + 1
    ow = (w + 2 * pad - ks) // stride + 1
    cols = []
    for kh in range(ks):
        for kw in range(ks):
            cols.append(xp[:, kh:kh + (oh - 1) * stride + 1:stride,
                              kw:kw + (ow - 1) * stride + 1:stride, :])
    a = jnp.concatenate(cols, axis=-1).reshape(n * oh * ow, ks * ks * c)
    return a, oh, ow


def spatial_conv(fm, w_dense, cout, scale, bias, ks, stride, pad, leaky):
    """ks x ks conv (standard or depthwise-expanded weight) via im2col over the
    real channels only, with the contraction dim padded to a 128 multiple."""
    # TODO(synk): at production channel widths replace the XLA im2col with
    # in-kernel patch extraction + a K-axis grid with a VMEM accumulator.
    data, c = fm
    n = data.shape[0]
    xr = data[..., :c]
    a, oh, ow = _im2col(xr, ks, stride, pad)
    k = a.shape[1]
    kp = _round_up(k, LANE)
    a = _pad_last(a, kp)
    wpad = jnp.zeros((kp, LANE), jnp.float32).at[:k, :cout].set(w_dense)
    scale_p, bias_p = _pad_affine(scale, bias)
    out = _fused_conv_call([a], wpad, scale_p, bias_p, None, leaky)
    return out.reshape(n, oh, ow, LANE), cout


def _dw_dense_weight(w_dw):
    # (3, 3, c) depthwise filter -> dense (9*c, c) block-diagonal weight
    c = w_dw.shape[-1]
    eye = jnp.eye(c, dtype=jnp.float32)
    wd = w_dw.reshape(9, c, 1) * eye[None, :, :]
    return wd.reshape(9 * c, c)


def maxpool(fm, size, stride):
    data, c = fm
    if size == 2 and stride == 1:
        data = jnp.pad(data, ((0, 0), (0, 1), (0, 1), (0, 0)))  # ZeroPad2d
    n, h, w, _ = data.shape
    oh = (h - size) // stride + 1
    ow = (w - size) // stride + 1
    taps = [data[:, kh:kh + (oh - 1) * stride + 1:stride,
                    kw:kw + (ow - 1) * stride + 1:stride, :].reshape(
                n * oh * ow, LANE)
            for kh in range(size) for kw in range(size)]
    out = _tiled_elementwise_call(_max_kernel, taps)
    return out.reshape(n, oh, ow, LANE), c


def residual_add(fm_a, fm_b):
    da, _ = fm_a
    db, cb = fm_b
    m = da.shape[0] * da.shape[1] * da.shape[2]
    out = _tiled_elementwise_call(
        _add_kernel, [da.reshape(m, LANE), db.reshape(m, LANE)])
    return out.reshape(da.shape), cb


def upsample_nearest(fm, s):
    # TODO(synk): fuse the nearest-upsample gather into the consuming conv's
    # index_map instead of materialising the repeated map in HBM.
    data, c = fm
    data = jnp.repeat(jnp.repeat(data, s, axis=1), s, axis=2)
    return data, c


def yolo_head(fm, anchors, num_classes, inp_dim):
    data, _ = fm
    b, g, _, _ = data.shape
    a = len(anchors)
    d = 5 + num_classes
    stride = inp_dim / g
    m = b * g * g

    x = data[..., :a * d]
    # (B, G, G, A, D) -> (A, D, B*G*G): large dim on the lane axis
    p = x.reshape(b, g, g, a, d).transpose(3, 4, 0, 1, 2).reshape(a, d, m)

    jj = jnp.arange(g, dtype=jnp.float32)
    offx = jnp.broadcast_to(jj[None, :], (g, g))
    offy = jnp.broadcast_to(jj[:, None], (g, g))
    offx = jnp.broadcast_to(offx[None], (b, g, g)).reshape(1, 1, m)
    offy = jnp.broadcast_to(offy[None], (b, g, g)).reshape(1, 1, m)
    sa = jnp.array(anchors, dtype=jnp.float32) / stride
    aw = sa[:, 0].reshape(a, 1, 1)
    ah = sa[:, 1].reshape(a, 1, 1)

    mp = _round_up(m, LANE)
    if mp != m:
        p = jnp.pad(p, ((0, 0), (0, 0), (0, mp - m)))
        offx = jnp.pad(offx, ((0, 0), (0, 0), (0, mp - m)))
        offy = jnp.pad(offy, ((0, 0), (0, 0), (0, mp - m)))
    tml = 256 if (mp % 256 == 0 and mp >= 512) else 128

    out = pl.pallas_call(
        functools.partial(_yolo_kernel, stride=float(stride)),
        grid=(mp // tml,),
        in_specs=[pl.BlockSpec((a, d, tml), lambda i: (0, 0, i)),
                  pl.BlockSpec((1, 1, tml), lambda i: (0, 0, i)),
                  pl.BlockSpec((1, 1, tml), lambda i: (0, 0, i)),
                  pl.BlockSpec((a, 1, 1), lambda i: (0, 0, 0)),
                  pl.BlockSpec((a, 1, 1), lambda i: (0, 0, 0))],
        out_specs=pl.BlockSpec((a, d, tml), lambda i: (0, 0, i)),
        out_shape=jax.ShapeDtypeStruct((a, d, mp), jnp.float32),
        compiler_params=pltpu.CompilerParams(
            dimension_semantics=("parallel",), vmem_limit_bytes=VMEM_LIMIT),
        cost_estimate=pl.CostEstimate(flops=20 * a * d * mp,
                                      transcendentals=3 * a * d * mp,
                                      bytes_accessed=8 * a * d * mp),
    )(p, offx, offy, aw, ah)
    out = out[:, :, :m]
    # back to torch ordering: (B, A*G*G, D)
    out = out.reshape(a, d, b, g * g).transpose(2, 0, 3, 1).reshape(
        b, a * g * g, d)
    return out


# ----------------------------------------------------------------------------
# Synthetic cfg (blocks) mirroring the YOLOv3 cfg-dict format
# ----------------------------------------------------------------------------
BLOCKS = [
    {"type": "net"},
    {"type": "convolutional", "batch_normalize": "1", "filters": "8", "size": "3",
     "stride": "1", "activation": "leaky"},                                   # 0
    {"type": "convolutional", "batch_normalize": "1", "filters": "8", "size": "3",
     "stride": "1", "activation": "leaky"},                                   # 1
    {"type": "shortcut", "from": "0"},                                        # 2
    {"type": "maxpool", "size": "2", "stride": "2"},                          # 3
    {"type": "convolutional_dw", "filters": "16", "stride": "1"},             # 4
    {"type": "bottleneck", "expand": "2", "filters": "16", "stride": "1",
     "skip": "1"},                                                            # 5
    {"type": "convolutional", "batch_normalize": "0", "filters": "21", "size": "1",
     "stride": "1", "activation": "linear"},                                  # 6
    {"type": "yolo", "mask": "0,1,2", "anchors": "10,13, 16,30, 33,23",
     "classes": "2"},                                                         # 7
    {"type": "route", "layers": "5"},                                         # 8
    {"type": "convolutional", "batch_normalize": "1", "filters": "4", "size": "1",
     "stride": "1", "activation": "leaky"},                                   # 9
    {"type": "upsample", "stride": "2"},                                      # 10
    {"type": "route", "layers": "10,2"},                                      # 11
    {"type": "convolutional", "batch_normalize": "0", "filters": "21", "size": "1",
     "stride": "1", "activation": "linear"},                                  # 12
    {"type": "yolo", "mask": "0,1,2", "anchors": "10,13, 16,30, 33,23",
     "classes": "2"},                                                         # 13
]


# ----------------------------------------------------------------------------
# Deterministic parameter initialization (shapes per create_modules)
# ----------------------------------------------------------------------------
def _init_conv_w(key, kh, kw, cin, cout):
    return 0.1 * jax.random.normal(key, (kh, kw, cin, cout), dtype=jnp.float32)


def _init_bn(key, c):
    k1, k2, k3, k4 = jax.random.split(key, 4)
    return {
        "gamma": 1.0 + 0.1 * jax.random.normal(k1, (c,), dtype=jnp.float32),
        "beta": 0.1 * jax.random.normal(k2, (c,), dtype=jnp.float32),
        "mean": 0.1 * jax.random.normal(k3, (c,), dtype=jnp.float32),
        "var": 1.0 + 0.1 * jax.random.uniform(k4, (c,), dtype=jnp.float32),
    }


def create_params(blocks, key):
    prev_filters = 3
    output_filters = []
    params = []
    for block in blocks[1:]:
        t = block["type"]
        key, sub = jax.random.split(key)
        p = {}
        filters = prev_filters
        if t == "convolutional":
            bn = int(block["batch_normalize"])
            filters = int(block["filters"])
            ks = int(block["size"])
            k1, k2 = jax.random.split(sub)
            p["w"] = _init_conv_w(k1, ks, ks, prev_filters, filters)
            if bn:
                p["bn"] = _init_bn(k2, filters)
            else:
                p["bias"] = 0.1 * jax.random.normal(k2, (filters,), dtype=jnp.float32)
        elif t == "convolutional_dw":
            filters = int(block["filters"])
            k1, k2, k3, k4 = jax.random.split(sub, 4)
            p["dw_w"] = 0.1 * jax.random.normal(k1, (3, 3, prev_filters), dtype=jnp.float32)
            p["dw_bn"] = _init_bn(k2, prev_filters)
            p["pw_w"] = _init_conv_w(k3, 1, 1, prev_filters, filters)
            p["pw_bn"] = _init_bn(k4, filters)
        elif t == "bottleneck":
            expand = int(block["expand"])
            filters = int(block["filters"])
            mid = prev_filters * expand
            k1, k2, k3, k4, k5, k6 = jax.random.split(sub, 6)
            p["pw1_w"] = _init_conv_w(k1, 1, 1, prev_filters, mid)
            p["bn1"] = _init_bn(k2, mid)
            p["dw_w"] = 0.1 * jax.random.normal(k3, (3, 3, mid), dtype=jnp.float32)
            p["bn2"] = _init_bn(k4, mid)
            p["pw2_w"] = _init_conv_w(k5, 1, 1, mid, filters)
            p["bn3"] = _init_bn(k6, filters)
        elif t == "route":
            idxs = [int(i) for i in block["layers"].split(",")]
            filters = sum(output_filters[i] for i in idxs)
        elif t == "shortcut":
            filters = output_filters[int(block["from"])]
        params.append(p)
        prev_filters = filters
        output_filters.append(filters)
    return params


# ----------------------------------------------------------------------------
# YOLOv3 forward (targets=None inference path)
# ----------------------------------------------------------------------------
def _materialize(fm):
    if isinstance(fm, list):
        reals = [f[0][..., :f[1]] for f in fm]
        cat = jnp.concatenate(reals, axis=-1)
        return _pad_last(cat, LANE), cat.shape[-1]
    return fm


def yolov3_forward(blocks, params, x_nchw):
    x = jnp.transpose(x_nchw, (0, 2, 3, 1)).astype(jnp.float32)  # NCHW -> NHWC
    fm = (_pad_last(x, LANE), x.shape[-1])
    layer_outputs = []
    yolo_outputs = []
    for block, p in zip(blocks[1:], params):
        t = block["type"]
        if t == "convolutional":
            bnorm = int(block["batch_normalize"])
            filters = int(block["filters"])
            ks = int(block["size"])
            stride = int(block["stride"])
            pad = (ks - 1) // 2
            leaky = block["activation"] == "leaky"
            if bnorm:
                scale, bias = bn_fold(p["bn"])
            else:
                scale = jnp.ones((filters,), jnp.float32)
                bias = p["bias"]
            if ks == 1:
                fm = pointwise_conv(fm, p["w"], scale, bias, leaky)
            else:
                src = _materialize(fm)
                wd = p["w"].reshape(ks * ks * src[1], filters)
                fm = spatial_conv(src, wd, filters, scale, bias,
                                  ks, stride, pad, leaky)
        elif t == "convolutional_dw":
            stride = int(block["stride"])
            src = _materialize(fm)
            s, b = bn_fold(p["dw_bn"])
            fm = spatial_conv(src, _dw_dense_weight(p["dw_w"]), src[1], s, b,
                              3, stride, 1, True)
            s, b = bn_fold(p["pw_bn"])
            fm = pointwise_conv(fm, p["pw_w"], s, b, True)
        elif t == "bottleneck":
            expand = int(block["expand"])
            stride = int(block["stride"])
            skip = int(block["skip"])
            inp = _materialize(fm)
            h = inp
            if expand != 1:
                s, b = bn_fold(p["bn1"])
                h = pointwise_conv(h, p["pw1_w"], s, b, True)
            s, b = bn_fold(p["bn2"])
            h = spatial_conv(h, _dw_dense_weight(p["dw_w"]), h[1], s, b,
                             3, stride, 1, True)
            s, b = bn_fold(p["bn3"])
            # residual add fused into the final pointwise conv's epilogue
            res = inp if skip else None
            fm = pointwise_conv(h, p["pw2_w"], s, b, False, residual=res)
        elif t == "upsample":
            fm = upsample_nearest(_materialize(fm), int(block["stride"]))
        elif t == "maxpool":
            fm = maxpool(_materialize(fm), int(block["size"]),
                         int(block["stride"]))
        elif t == "route":
            idxs = [int(i) for i in block["layers"].split(",")]
            srcs = [layer_outputs[i] for i in idxs]
            # defer the channel concat: the consuming 1x1 conv fuses it
            fm = srcs[0] if len(srcs) == 1 else list(srcs)
        elif t == "shortcut":
            # TODO(synk): could be fused into the preceding conv's epilogue when
            # the intermediate activation is not referenced elsewhere.
            fm = residual_add(layer_outputs[-1],
                              layer_outputs[int(block["from"])])
        elif t == "yolo":
            anchor_index = [int(i) for i in block["mask"].split(",")]
            av = [int(v) for v in block["anchors"].split(",")]
            anchors = [(av[i], av[i + 1]) for i in range(0, len(av), 2)]
            anchors = [anchors[i] for i in anchor_index]
            num_classes = int(block["classes"])
            det = yolo_head(_materialize(fm), anchors, num_classes, INPUT_H)
            yolo_outputs.append(det)
            fm = det
        layer_outputs.append(fm)
    return jnp.concatenate(yolo_outputs, axis=1)


if __name__ == "__main__":
    key = jax.random.PRNGKey(0)
    kx, kp = jax.random.split(key)
    x = jax.random.normal(kx, (2, 3, INPUT_H, INPUT_H), dtype=jnp.float32)
    params = create_params(BLOCKS, kp)
    fwd = jax.jit(lambda prms, inp: yolov3_forward(BLOCKS, prms, inp))
    out = jax.block_until_ready(fwd(params, x))
    expected = (2, 3 * 8 * 8 + 3 * 16 * 16, 5 + 2)  # (B, sum A*grid^2, 5+classes)
    assert out.shape == expected, (out.shape, expected)
    assert bool(jnp.all(jnp.isfinite(out)))
    print("KERNEL_OK")
</pallas_src>

<mosaic_0001>
module attributes {stable_mosaic.version = 11 : i64} {
  func.func @_conv_mm_kernel(%arg0: i32, %arg1: memref<256x128xf32, #tpu.memory_space<vmem>>, %arg2: memref<128x128xf32, #tpu.memory_space<vmem>>, %arg3: memref<1x128xf32, #tpu.memory_space<vmem>>, %arg4: memref<1x128xf32, #tpu.memory_space<vmem>>, %arg5: memref<256x128xf32, #tpu.memory_space<vmem>>) attributes {dimension_semantics = [#tpu.dimension_semantics<parallel>], iteration_bounds = array<i64: 2>, scalar_prefetch = 0 : i64, scratch_operands = 0 : i64, tpu.core_type = #tpu.core_type<tc>, window_params = [{transform_indices = @transform_0, window_bounds = array<i64: 256, 128>}, {pipeline_mode = #tpu.pipeline_mode<synchronous>, transform_indices = @transform_1, window_bounds = array<i64: 128, 128>}, {pipeline_mode = #tpu.pipeline_mode<synchronous>, transform_indices = @transform_2, window_bounds = array<i64: 1, 128>}, {pipeline_mode = #tpu.pipeline_mode<synchronous>, transform_indices = @transform_3, window_bounds = array<i64: 1, 128>}, {transform_indices = @transform_4, window_bounds = array<i64: 256, 128>}]} {
    %c0 = arith.constant 0 : index
    %c0_0 = arith.constant 0 : index
    %0 = vector.load %arg1[%c0, %c0_0] : memref<256x128xf32, #tpu.memory_space<vmem>>, vector<256x128xf32>
    %c0_1 = arith.constant 0 : index
    %c0_2 = arith.constant 0 : index
    %1 = vector.load %arg2[%c0_1, %c0_2] : memref<128x128xf32, #tpu.memory_space<vmem>>, vector<128x128xf32>
    %cst = arith.constant dense<0.000000e+00> : vector<256x128xf32>
    %2 = tpu.matmul %0, %1, %cst {dimension_numbers = #tpu.dot_dimension_numbers<[1], [0], [0], [1], [0, 0, 1, 1], [], []>} : vector<256x128xf32>, vector<128x128xf32>, vector<256x128xf32> -> vector<256x128xf32>
    %c0_3 = arith.constant 0 : index
    %c0_4 = arith.constant 0 : index
    %3 = vector.load %arg3[%c0_3, %c0_4] : memref<1x128xf32, #tpu.memory_space<vmem>>, vector<1x128xf32>
    %4 = vector.broadcast %3 : vector<1x128xf32> to vector<256x128xf32>
    %5 = arith.mulf %2, %4 : vector<256x128xf32>
    %c0_5 = arith.constant 0 : index
    %c0_6 = arith.constant 0 : index
    %6 = vector.load %arg4[%c0_5, %c0_6] : memref<1x128xf32, #tpu.memory_space<vmem>>, vector<1x128xf32>
    %7 = vector.broadcast %6 : vector<1x128xf32> to vector<256x128xf32>
    %8 = arith.addf %5, %7 : vector<256x128xf32>
    %cst_7 = arith.constant 0.000000e+00 : f32
    %9 = vector.broadcast %cst_7 : f32 to vector<256x128xf32>
    %10 = arith.cmpf ogt, %8, %9 : vector<256x128xf32>
    %cst_8 = arith.constant 1.000000e-01 : f32
    %11 = vector.broadcast %cst_8 : f32 to vector<256x128xf32>
    %12 = arith.mulf %11, %8 : vector<256x128xf32>
    %13 = arith.select %10, %8, %12 : vector<256x128xi1>, vector<256x128xf32>
    %c0_9 = arith.constant 0 : index
    %c0_10 = arith.constant 0 : index
    %14 = vector.load %arg5[%c0_9, %c0_10] : memref<256x128xf32, #tpu.memory_space<vmem>>, vector<256x128xf32>
    tpu.vector_store %arg5[%c0_9, %c0_10], %13 {strides = array<i32>} : memref<256x128xf32, #tpu.memory_space<vmem>>, vector<256x128xf32>,
    return
  }
  func.func @transform_0(%arg0: i32) -> (i32, i32) {
    %c0_i32 = arith.constant 0 : i32
    %c0_i32_0 = arith.constant 0 : i32
    return %arg0, %c0_i32 : i32, i32
  }
  func.func @transform_1(%arg0: i32) -> (i32, i32) {
    %c0_i32 = arith.constant 0 : i32
    %c0_i32_0 = arith.constant 0 : i32
    %c0_i32_1 = arith.constant 0 : i32
    return %c0_i32, %c0_i32_0 : i32, i32
  }
  func.func @transform_2(%arg0: i32) -> (i32, i32) {
    %c0_i32 = arith.constant 0 : i32
    %c0_i32_0 = arith.constant 0 : i32
    %c0_i32_1 = arith.constant 0 : i32
    return %c0_i32, %c0_i32_0 : i32, i32
  }
  func.func @transform_3(%arg0: i32) -> (i32, i32) {
    %c0_i32 = arith.constant 0 : i32
    %c0_i32_0 = arith.constant 0 : i32
    %c0_i32_1 = arith.constant 0 : i32
    return %c0_i32, %c0_i32_0 : i32, i32
  }
  func.func @transform_4(%arg0: i32) -> (i32, i32) {
    %c0_i32 = arith.constant 0 : i32
    %c0_i32_0 = arith.constant 0 : i32
    return %arg0, %c0_i32 : i32, i32
  }
}

module attributes {stable_mosaic.version = 11 : i64} {
  func.func @_add_kernel(%arg0: i32, %arg1: memref<256x128xf32, #tpu.memory_space<vmem>>, %arg2: memref<256x128xf32, #tpu.memory_space<vmem>>, %arg3: memref<256x128xf32, #tpu.memory_space<vmem>>) attributes {dimension_semantics = [#tpu.dimension_semantics<parallel>], iteration_bounds = array<i64: 2>, scalar_prefetch = 0 : i64, scratch_operands = 0 : i64, tpu.core_type = #tpu.core_type<tc>, window_params = [{transform_indices = @transform_0, window_bounds = array<i64: 256, 128>}, {transform_indices = @transform_1, window_bounds = array<i64: 256, 128>}, {transform_indices = @transform_2, window_bounds = array<i64: 256, 128>}]} {
    %c0 = arith.constant 0 : index
    %c0_0 = arith.constant 0 : index
    %0 = vector.load %arg1[%c0, %c0_0] : memref<256x128xf32, #tpu.memory_space<vmem>>, vector<256x128xf32>
    %c0_1 = arith.constant 0 : index
    %c0_2 = arith.constant 0 : index
    %1 = vector.load %arg2[%c0_1, %c0_2] : memref<256x128xf32, #tpu.memory_space<vmem>>, vector<256x128xf32>
    %2 = arith.addf %0, %1 : vector<256x128xf32>
    %c0_3 = arith.constant 0 : index
    %c0_4 = arith.constant 0 : index
    %3 = vector.load %arg3[%c0_3, %c0_4] : memref<256x128xf32, #tpu.memory_space<vmem>>, vector<256x128xf32>
    tpu.vector_store %arg3[%c0_3, %c0_4], %2 {strides = array<i32>} : memref<256x128xf32, #tpu.memory_space<vmem>>, vector<256x128xf32>,
    return
  }
  func.func @transform_0(%arg0: i32) -> (i32, i32) {
    %c0_i32 = arith.constant 0 : i32
    %c0_i32_0 = arith.constant 0 : i32
    return %arg0, %c0_i32 : i32, i32
  }
  func.func @transform_1(%arg0: i32) -> (i32, i32) {
    %c0_i32 = arith.constant 0 : i32
    %c0_i32_0 = arith.constant 0 : i32
    return %arg0, %c0_i32 : i32, i32
  }
  func.func @transform_2(%arg0: i32) -> (i32, i32) {
    %c0_i32 = arith.constant 0 : i32
    %c0_i32_0 = arith.constant 0 : i32
    return %arg0, %c0_i32 : i32, i32
  }
}

module attributes {stable_mosaic.version = 11 : i64} {
  func.func @_max_kernel(%arg0: i32, %arg1: memref<128x128xf32, #tpu.memory_space<vmem>>, %arg2: memref<128x128xf32, #tpu.memory_space<vmem>>, %arg3: memref<128x128xf32, #tpu.memory_space<vmem>>, %arg4: memref<128x128xf32, #tpu.memory_space<vmem>>, %arg5: memref<128x128xf32, #tpu.memory_space<vmem>>) attributes {dimension_semantics = [#tpu.dimension_semantics<parallel>], iteration_bounds = array<i64: 1>, scalar_prefetch = 0 : i64, scratch_operands = 0 : i64, tpu.core_type = #tpu.core_type<tc>, window_params = [{transform_indices = @transform_0, window_bounds = array<i64: 128, 128>}, {transform_indices = @transform_1, window_bounds = array<i64: 128, 128>}, {transform_indices = @transform_2, window_bounds = array<i64: 128, 128>}, {transform_indices = @transform_3, window_bounds = array<i64: 128, 128>}, {transform_indices = @transform_4, window_bounds = array<i64: 128, 128>}]} {
    %c0 = arith.constant 0 : index
    %c0_0 = arith.constant 0 : index
    %0 = vector.load %arg1[%c0, %c0_0] : memref<128x128xf32, #tpu.memory_space<vmem>>, vector<128x128xf32>
    %c0_1 = arith.constant 0 : index
    %c0_2 = arith.constant 0 : index
    %1 = vector.load %arg2[%c0_1, %c0_2] : memref<128x128xf32, #tpu.memory_space<vmem>>, vector<128x128xf32>
    %2 = arith.maximumf %0, %1 : vector<128x128xf32>
    %c0_3 = arith.constant 0 : index
    %c0_4 = arith.constant 0 : index
    %3 = vector.load %arg3[%c0_3, %c0_4] : memref<128x128xf32, #tpu.memory_space<vmem>>, vector<128x128xf32>
    %4 = arith.maximumf %2, %3 : vector<128x128xf32>
    %c0_5 = arith.constant 0 : index
    %c0_6 = arith.constant 0 : index
    %5 = vector.load %arg4[%c0_5, %c0_6] : memref<128x128xf32, #tpu.memory_space<vmem>>, vector<128x128xf32>
    %6 = arith.maximumf %4, %5 : vector<128x128xf32>
    %c0_7 = arith.constant 0 : index
    %c0_8 = arith.constant 0 : index
    %7 = vector.load %arg5[%c0_7, %c0_8] : memref<128x128xf32, #tpu.memory_space<vmem>>, vector<128x128xf32>
    tpu.vector_store %arg5[%c0_7, %c0_8], %6 {strides = array<i32>} : memref<128x128xf32, #tpu.memory_space<vmem>>, vector<128x128xf32>,
    return
  }
  func.func @transform_0(%arg0: i32) -> (i32, i32) {
    %c0_i32 = arith.constant 0 : i32
    %c0_i32_0 = arith.constant 0 : i32
    return %arg0, %c0_i32 : i32, i32
  }
  func.func @transform_1(%arg0: i32) -> (i32, i32) {
    %c0_i32 = arith.constant 0 : i32
    %c0_i32_0 = arith.constant 0 : i32
    return %arg0, %c0_i32 : i32, i32
  }
  func.func @transform_2(%arg0: i32) -> (i32, i32) {
    %c0_i32 = arith.constant 0 : i32
    %c0_i32_0 = arith.constant 0 : i32
    return %arg0, %c0_i32 : i32, i32
  }
  func.func @transform_3(%arg0: i32) -> (i32, i32) {
    %c0_i32 = arith.constant 0 : i32
    %c0_i32_0 = arith.constant 0 : i32
    return %arg0, %c0_i32 : i32, i32
  }
  func.func @transform_4(%arg0: i32) -> (i32, i32) {
    %c0_i32 = arith.constant 0 : i32
    %c0_i32_0 = arith.constant 0 : i32
    return %arg0, %c0_i32 : i32, i32
  }
}

module attributes {stable_mosaic.version = 11 : i64} {
  func.func @_conv_mm_kernel(%arg0: i32, %arg1: memref<128x128xf32, #tpu.memory_space<vmem>>, %arg2: memref<128x128xf32, #tpu.memory_space<vmem>>, %arg3: memref<1x128xf32, #tpu.memory_space<vmem>>, %arg4: memref<1x128xf32, #tpu.memory_space<vmem>>, %arg5: memref<128x128xf32, #tpu.memory_space<vmem>>) attributes {dimension_semantics = [#tpu.dimension_semantics<parallel>], iteration_bounds = array<i64: 1>, scalar_prefetch = 0 : i64, scratch_operands = 0 : i64, tpu.core_type = #tpu.core_type<tc>, window_params = [{transform_indices = @transform_0, window_bounds = array<i64: 128, 128>}, {pipeline_mode = #tpu.pipeline_mode<synchronous>, transform_indices = @transform_1, window_bounds = array<i64: 128, 128>}, {pipeline_mode = #tpu.pipeline_mode<synchronous>, transform_indices = @transform_2, window_bounds = array<i64: 1, 128>}, {pipeline_mode = #tpu.pipeline_mode<synchronous>, transform_indices = @transform_3, window_bounds = array<i64: 1, 128>}, {transform_indices = @transform_4, window_bounds = array<i64: 128, 128>}]} {
    %c0 = arith.constant 0 : index
    %c0_0 = arith.constant 0 : index
    %0 = vector.load %arg1[%c0, %c0_0] : memref<128x128xf32, #tpu.memory_space<vmem>>, vector<128x128xf32>
    %c0_1 = arith.constant 0 : index
    %c0_2 = arith.constant 0 : index
    %1 = vector.load %arg2[%c0_1, %c0_2] : memref<128x128xf32, #tpu.memory_space<vmem>>, vector<128x128xf32>
    %cst = arith.constant dense<0.000000e+00> : vector<128x128xf32>
    %2 = tpu.matmul %0, %1, %cst {dimension_numbers = #tpu.dot_dimension_numbers<[1], [0], [0], [1], [0, 0, 1, 1], [], []>} : vector<128x128xf32>, vector<128x128xf32>, vector<128x128xf32> -> vector<128x128xf32>
    %c0_3 = arith.constant 0 : index
    %c0_4 = arith.constant 0 : index
    %3 = vector.load %arg3[%c0_3, %c0_4] : memref<1x128xf32, #tpu.memory_space<vmem>>, vector<1x128xf32>
    %4 = vector.broadcast %3 : vector<1x128xf32> to vector<128x128xf32>
    %5 = arith.mulf %2, %4 : vector<128x128xf32>
    %c0_5 = arith.constant 0 : index
    %c0_6 = arith.constant 0 : index
    %6 = vector.load %arg4[%c0_5, %c0_6] : memref<1x128xf32, #tpu.memory_space<vmem>>, vector<1x128xf32>
    %7 = vector.broadcast %6 : vector<1x128xf32> to vector<128x128xf32>
    %8 = arith.addf %5, %7 : vector<128x128xf32>
    %cst_7 = arith.constant 0.000000e+00 : f32
    %9 = vector.broadcast %cst_7 : f32 to vector<128x128xf32>
    %10 = arith.cmpf ogt, %8, %9 : vector<128x128xf32>
    %cst_8 = arith.constant 1.000000e-01 : f32
    %11 = vector.broadcast %cst_8 : f32 to vector<128x128xf32>
    %12 = arith.mulf %11, %8 : vector<128x128xf32>
    %13 = arith.select %10, %8, %12 : vector<128x128xi1>, vector<128x128xf32>
    %c0_9 = arith.constant 0 : index
    %c0_10 = arith.constant 0 : index
    %14 = vector.load %arg5[%c0_9, %c0_10] : memref<128x128xf32, #tpu.memory_space<vmem>>, vector<128x128xf32>
    tpu.vector_store %arg5[%c0_9, %c0_10], %13 {strides = array<i32>} : memref<128x128xf32, #tpu.memory_space<vmem>>, vector<128x128xf32>,
    return
  }
  func.func @transform_0(%arg0: i32) -> (i32, i32) {
    %c0_i32 = arith.constant 0 : i32
    %c0_i32_0 = arith.constant 0 : i32
    return %arg0, %c0_i32 : i32, i32
  }
  func.func @transform_1(%arg0: i32) -> (i32, i32) {
    %c0_i32 = arith.constant 0 : i32
    %c0_i32_0 = arith.constant 0 : i32
    %c0_i32_1 = arith.constant 0 : i32
    return %c0_i32, %c0_i32_0 : i32, i32
  }
  func.func @transform_2(%arg0: i32) -> (i32, i32) {
    %c0_i32 = arith.constant 0 : i32
    %c0_i32_0 = arith.constant 0 : i32
    %c0_i32_1 = arith.constant 0 : i32
    return %c0_i32, %c0_i32_0 : i32, i32
  }
  func.func @transform_3(%arg0: i32) -> (i32, i32) {
    %c0_i32 = arith.constant 0 : i32
    %c0_i32_0 = arith.constant 0 : i32
    %c0_i32_1 = arith.constant 0 : i32
    return %c0_i32, %c0_i32_0 : i32, i32
  }
  func.func @transform_4(%arg0: i32) -> (i32, i32) {
    %c0_i32 = arith.constant 0 : i32
    %c0_i32_0 = arith.constant 0 : i32
    return %arg0, %c0_i32 : i32, i32
  }
}

module attributes {stable_mosaic.version = 11 : i64} {
  func.func @_conv_mm_kernel(%arg0: i32, %arg1: memref<128x384xf32, #tpu.memory_space<vmem>>, %arg2: memref<384x128xf32, #tpu.memory_space<vmem>>, %arg3: memref<1x128xf32, #tpu.memory_space<vmem>>, %arg4: memref<1x128xf32, #tpu.memory_space<vmem>>, %arg5: memref<128x128xf32, #tpu.memory_space<vmem>>) attributes {dimension_semantics = [#tpu.dimension_semantics<parallel>], iteration_bounds = array<i64: 1>, scalar_prefetch = 0 : i64, scratch_operands = 0 : i64, tpu.core_type = #tpu.core_type<tc>, window_params = [{transform_indices = @transform_0, window_bounds = array<i64: 128, 384>}, {pipeline_mode = #tpu.pipeline_mode<synchronous>, transform_indices = @transform_1, window_bounds = array<i64: 384, 128>}, {pipeline_mode = #tpu.pipeline_mode<synchronous>, transform_indices = @transform_2, window_bounds = array<i64: 1, 128>}, {pipeline_mode = #tpu.pipeline_mode<synchronous>, transform_indices = @transform_3, window_bounds = array<i64: 1, 128>}, {transform_indices = @transform_4, window_bounds = array<i64: 128, 128>}]} {
    %c0 = arith.constant 0 : index
    %c0_0 = arith.constant 0 : index
    %0 = vector.load %arg1[%c0, %c0_0] : memref<128x384xf32, #tpu.memory_space<vmem>>, vector<128x384xf32>
    %c0_1 = arith.constant 0 : index
    %c0_2 = arith.constant 0 : index
    %1 = vector.load %arg2[%c0_1, %c0_2] : memref<384x128xf32, #tpu.memory_space<vmem>>, vector<384x128xf32>
    %cst = arith.constant dense<0.000000e+00> : vector<128x128xf32>
    %2 = tpu.matmul %0, %1, %cst {dimension_numbers = #tpu.dot_dimension_numbers<[1], [0], [0], [1], [0, 0, 1, 1], [], []>} : vector<128x384xf32>, vector<384x128xf32>, vector<128x128xf32> -> vector<128x128xf32>
    %c0_3 = arith.constant 0 : index
    %c0_4 = arith.constant 0 : index
    %3 = vector.load %arg3[%c0_3, %c0_4] : memref<1x128xf32, #tpu.memory_space<vmem>>, vector<1x128xf32>
    %4 = vector.broadcast %3 : vector<1x128xf32> to vector<128x128xf32>
    %5 = arith.mulf %2, %4 : vector<128x128xf32>
    %c0_5 = arith.constant 0 : index
    %c0_6 = arith.constant 0 : index
    %6 = vector.load %arg4[%c0_5, %c0_6] : memref<1x128xf32, #tpu.memory_space<vmem>>, vector<1x128xf32>
    %7 = vector.broadcast %6 : vector<1x128xf32> to vector<128x128xf32>
    %8 = arith.addf %5, %7 : vector<128x128xf32>
    %cst_7 = arith.constant 0.000000e+00 : f32
    %9 = vector.broadcast %cst_7 : f32 to vector<128x128xf32>
    %10 = arith.cmpf ogt, %8, %9 : vector<128x128xf32>
    %cst_8 = arith.constant 1.000000e-01 : f32
    %11 = vector.broadcast %cst_8 : f32 to vector<128x128xf32>
    %12 = arith.mulf %11, %8 : vector<128x128xf32>
    %13 = arith.select %10, %8, %12 : vector<128x128xi1>, vector<128x128xf32>
    %c0_9 = arith.constant 0 : index
    %c0_10 = arith.constant 0 : index
    %14 = vector.load %arg5[%c0_9, %c0_10] : memref<128x128xf32, #tpu.memory_space<vmem>>, vector<128x128xf32>
    tpu.vector_store %arg5[%c0_9, %c0_10], %13 {strides = array<i32>} : memref<128x128xf32, #tpu.memory_space<vmem>>, vector<128x128xf32>,
    return
  }
  func.func @transform_0(%arg0: i32) -> (i32, i32) {
    %c0_i32 = arith.constant 0 : i32
    %c0_i32_0 = arith.constant 0 : i32
    return %arg0, %c0_i32 : i32, i32
  }
  func.func @transform_1(%arg0: i32) -> (i32, i32) {
    %c0_i32 = arith.constant 0 : i32
    %c0_i32_0 = arith.constant 0 : i32
    %c0_i32_1 = arith.constant 0 : i32
    return %c0_i32, %c0_i32_0 : i32, i32
  }
  func.func @transform_2(%arg0: i32) -> (i32, i32) {
    %c0_i32 = arith.constant 0 : i32
    %c0_i32_0 = arith.constant 0 : i32
    %c0_i32_1 = arith.constant 0 : i32
    return %c0_i32, %c0_i32_0 : i32, i32
  }
  func.func @transform_3(%arg0: i32) -> (i32, i32) {
    %c0_i32 = arith.constant 0 : i32
    %c0_i32_0 = arith.constant 0 : i32
    %c0_i32_1 = arith.constant 0 : i32
    return %c0_i32, %c0_i32_0 : i32, i32
  }
  func.func @transform_4(%arg0: i32) -> (i32, i32) {
    %c0_i32 = arith.constant 0 : i32
    %c0_i32_0 = arith.constant 0 : i32
    return %arg0, %c0_i32 : i32, i32
  }
}

module attributes {stable_mosaic.version = 11 : i64} {
  func.func @_conv_mm_kernel(%arg0: i32, %arg1: memref<128x128xf32, #tpu.memory_space<vmem>>, %arg2: memref<128x128xf32, #tpu.memory_space<vmem>>, %arg3: memref<1x128xf32, #tpu.memory_space<vmem>>, %arg4: memref<1x128xf32, #tpu.memory_space<vmem>>, %arg5: memref<128x128xf32, #tpu.memory_space<vmem>>, %arg6: memref<128x128xf32, #tpu.memory_space<vmem>>) attributes {dimension_semantics = [#tpu.dimension_semantics<parallel>], iteration_bounds = array<i64: 1>, scalar_prefetch = 0 : i64, scratch_operands = 0 : i64, tpu.core_type = #tpu.core_type<tc>, window_params = [{transform_indices = @transform_0, window_bounds = array<i64: 128, 128>}, {pipeline_mode = #tpu.pipeline_mode<synchronous>, transform_indices = @transform_1, window_bounds = array<i64: 128, 128>}, {pipeline_mode = #tpu.pipeline_mode<synchronous>, transform_indices = @transform_2, window_bounds = array<i64: 1, 128>}, {pipeline_mode = #tpu.pipeline_mode<synchronous>, transform_indices = @transform_3, window_bounds = array<i64: 1, 128>}, {transform_indices = @transform_4, window_bounds = array<i64: 128, 128>}, {transform_indices = @transform_5, window_bounds = array<i64: 128, 128>}]} {
    %c0 = arith.constant 0 : index
    %c0_0 = arith.constant 0 : index
    %0 = vector.load %arg1[%c0, %c0_0] : memref<128x128xf32, #tpu.memory_space<vmem>>, vector<128x128xf32>
    %c0_1 = arith.constant 0 : index
    %c0_2 = arith.constant 0 : index
    %1 = vector.load %arg2[%c0_1, %c0_2] : memref<128x128xf32, #tpu.memory_space<vmem>>, vector<128x128xf32>
    %cst = arith.constant dense<0.000000e+00> : vector<128x128xf32>
    %2 = tpu.matmul %0, %1, %cst {dimension_numbers = #tpu.dot_dimension_numbers<[1], [0], [0], [1], [0, 0, 1, 1], [], []>} : vector<128x128xf32>, vector<128x128xf32>, vector<128x128xf32> -> vector<128x128xf32>
    %c0_3 = arith.constant 0 : index
    %c0_4 = arith.constant 0 : index
    %3 = vector.load %arg3[%c0_3, %c0_4] : memref<1x128xf32, #tpu.memory_space<vmem>>, vector<1x128xf32>
    %4 = vector.broadcast %3 : vector<1x128xf32> to vector<128x128xf32>
    %5 = arith.mulf %2, %4 : vector<128x128xf32>
    %c0_5 = arith.constant 0 : index
    %c0_6 = arith.constant 0 : index
    %6 = vector.load %arg4[%c0_5, %c0_6] : memref<1x128xf32, #tpu.memory_space<vmem>>, vector<1x128xf32>
    %7 = vector.broadcast %6 : vector<1x128xf32> to vector<128x128xf32>
    %8 = arith.addf %5, %7 : vector<128x128xf32>
    %c0_7 = arith.constant 0 : index
    %c0_8 = arith.constant 0 : index
    %9 = vector.load %arg5[%c0_7, %c0_8] : memref<128x128xf32, #tpu.memory_space<vmem>>, vector<128x128xf32>
    %10 = arith.addf %8, %9 : vector<128x128xf32>
    %c0_9 = arith.constant 0 : index
    %c0_10 = arith.constant 0 : index
    %11 = vector.load %arg6[%c0_9, %c0_10] : memref<128x128xf32, #tpu.memory_space<vmem>>, vector<128x128xf32>
    tpu.vector_store %arg6[%c0_9, %c0_10], %10 {strides = array<i32>} : memref<128x128xf32, #tpu.memory_space<vmem>>, vector<128x128xf32>,
    return
  }
  func.func @transform_0(%arg0: i32) -> (i32, i32) {
    %c0_i32 = arith.constant 0 : i32
    %c0_i32_0 = arith.constant 0 : i32
    return %arg0, %c0_i32 : i32, i32
  }
  func.func @transform_1(%arg0: i32) -> (i32, i32) {
    %c0_i32 = arith.constant 0 : i32
    %c0_i32_0 = arith.constant 0 : i32
    %c0_i32_1 = arith.constant 0 : i32
    return %c0_i32, %c0_i32_0 : i32, i32
  }
  func.func @transform_2(%arg0: i32) -> (i32, i32) {
    %c0_i32 = arith.constant 0 : i32
    %c0_i32_0 = arith.constant 0 : i32
    %c0_i32_1 = arith.constant 0 : i32
    return %c0_i32, %c0_i32_0 : i32, i32
  }
  func.func @transform_3(%arg0: i32) -> (i32, i32) {
    %c0_i32 = arith.constant 0 : i32
    %c0_i32_0 = arith.constant 0 : i32
    %c0_i32_1 = arith.constant 0 : i32
    return %c0_i32, %c0_i32_0 : i32, i32
  }
  func.func @transform_4(%arg0: i32) -> (i32, i32) {
    %c0_i32 = arith.constant 0 : i32
    %c0_i32_0 = arith.constant 0 : i32
    return %arg0, %c0_i32 : i32, i32
  }
  func.func @transform_5(%arg0: i32) -> (i32, i32) {
    %c0_i32 = arith.constant 0 : i32
    %c0_i32_0 = arith.constant 0 : i32
    return %arg0, %c0_i32 : i32, i32
  }
}

module attributes {stable_mosaic.version = 11 : i64} {
  func.func @_conv_mm_kernel(%arg0: i32, %arg1: memref<256x128xf32, #tpu.memory_space<vmem>>, %arg2: memref<256x128xf32, #tpu.memory_space<vmem>>, %arg3: memref<256x128xf32, #tpu.memory_space<vmem>>, %arg4: memref<1x128xf32, #tpu.memory_space<vmem>>, %arg5: memref<1x128xf32, #tpu.memory_space<vmem>>, %arg6: memref<256x128xf32, #tpu.memory_space<vmem>>) attributes {dimension_semantics = [#tpu.dimension_semantics<parallel>], iteration_bounds = array<i64: 2>, scalar_prefetch = 0 : i64, scratch_operands = 0 : i64, tpu.core_type = #tpu.core_type<tc>, window_params = [{transform_indices = @transform_0, window_bounds = array<i64: 256, 128>}, {transform_indices = @transform_1, window_bounds = array<i64: 256, 128>}, {pipeline_mode = #tpu.pipeline_mode<synchronous>, transform_indices = @transform_2, window_bounds = array<i64: 256, 128>}, {pipeline_mode = #tpu.pipeline_mode<synchronous>, transform_indices = @transform_3, window_bounds = array<i64: 1, 128>}, {pipeline_mode = #tpu.pipeline_mode<synchronous>, transform_indices = @transform_4, window_bounds = array<i64: 1, 128>}, {transform_indices = @transform_5, window_bounds = array<i64: 256, 128>}]} {
    %c0 = arith.constant 0 : index
    %c0_0 = arith.constant 0 : index
    %0 = vector.load %arg1[%c0, %c0_0] : memref<256x128xf32, #tpu.memory_space<vmem>>, vector<256x128xf32>
    %c0_1 = arith.constant 0 : index
    %c0_2 = arith.constant 0 : index
    %1 = vector.load %arg3[%c0_1, %c0_2] : memref<256x128xf32, #tpu.memory_space<vmem>>, vector<128x128xf32>
    %cst = arith.constant dense<0.000000e+00> : vector<256x128xf32>
    %2 = tpu.matmul %0, %1, %cst {dimension_numbers = #tpu.dot_dimension_numbers<[1], [0], [0], [1], [0, 0, 1, 1], [], []>} : vector<256x128xf32>, vector<128x128xf32>, vector<256x128xf32> -> vector<256x128xf32>
    %c0_3 = arith.constant 0 : index
    %c0_4 = arith.constant 0 : index
    %3 = vector.load %arg2[%c0_3, %c0_4] : memref<256x128xf32, #tpu.memory_space<vmem>>, vector<256x128xf32>
    %c128 = arith.constant 128 : index
    %c0_5 = arith.constant 0 : index
    %4 = vector.load %arg3[%c128, %c0_5] : memref<256x128xf32, #tpu.memory_space<vmem>>, vector<128x128xf32>
    %cst_6 = arith.constant dense<0.000000e+00> : vector<256x128xf32>
    %5 = tpu.matmul %3, %4, %cst_6 {dimension_numbers = #tpu.dot_dimension_numbers<[1], [0], [0], [1], [0, 0, 1, 1], [], []>} : vector<256x128xf32>, vector<128x128xf32>, vector<256x128xf32> -> vector<256x128xf32>
    %6 = arith.addf %2, %5 : vector<256x128xf32>
    %c0_7 = arith.constant 0 : index
    %c0_8 = arith.constant 0 : index
    %7 = vector.load %arg4[%c0_7, %c0_8] : memref<1x128xf32, #tpu.memory_space<vmem>>, vector<1x128xf32>
    %8 = vector.broadcast %7 : vector<1x128xf32> to vector<256x128xf32>
    %9 = arith.mulf %6, %8 : vector<256x128xf32>
    %c0_9 = arith.constant 0 : index
    %c0_10 = arith.constant 0 : index
    %10 = vector.load %arg5[%c0_9, %c0_10] : memref<1x128xf32, #tpu.memory_space<vmem>>, vector<1x128xf32>
    %11 = vector.broadcast %10 : vector<1x128xf32> to vector<256x128xf32>
    %12 = arith.addf %9, %11 : vector<256x128xf32>
    %c0_11 = arith.constant 0 : index
    %c0_12 = arith.constant 0 : index
    %13 = vector.load %arg6[%c0_11, %c0_12] : memref<256x128xf32, #tpu.memory_space<vmem>>, vector<256x128xf32>
    tpu.vector_store %arg6[%c0_11, %c0_12], %12 {strides = array<i32>} : memref<256x128xf32, #tpu.memory_space<vmem>>, vector<256x128xf32>,
    return
  }
  func.func @transform_0(%arg0: i32) -> (i32, i32) {
    %c0_i32 = arith.constant 0 : i32
    %c0_i32_0 = arith.constant 0 : i32
    return %arg0, %c0_i32 : i32, i32
  }
  func.func @transform_1(%arg0: i32) -> (i32, i32) {
    %c0_i32 = arith.constant 0 : i32
    %c0_i32_0 = arith.constant 0 : i32
    return %arg0, %c0_i32 : i32, i32
  }
  func.func @transform_2(%arg0: i32) -> (i32, i32) {
    %c0_i32 = arith.constant 0 : i32
    %c0_i32_0 = arith.constant 0 : i32
    %c0_i32_1 = arith.constant 0 : i32
    return %c0_i32, %c0_i32_0 : i32, i32
  }
  func.func @transform_3(%arg0: i32) -> (i32, i32) {
    %c0_i32 = arith.constant 0 : i32
    %c0_i32_0 = arith.constant 0 : i32
    %c0_i32_1 = arith.constant 0 : i32
    return %c0_i32, %c0_i32_0 : i32, i32
  }
  func.func @transform_4(%arg0: i32) -> (i32, i32) {
    %c0_i32 = arith.constant 0 : i32
    %c0_i32_0 = arith.constant 0 : i32
    %c0_i32_1 = arith.constant 0 : i32
    return %c0_i32, %c0_i32_0 : i32, i32
  }
  func.func @transform_5(%arg0: i32) -> (i32, i32) {
    %c0_i32 = arith.constant 0 : i32
    %c0_i32_0 = arith.constant 0 : i32
    return %arg0, %c0_i32 : i32, i32
  }
}

module attributes {stable_mosaic.version = 11 : i64} {
  func.func @_yolo_kernel(%arg0: i32, %arg1: memref<3x7x256xf32, #tpu.memory_space<vmem>>, %arg2: memref<1x1x256xf32, #tpu.memory_space<vmem>>, %arg3: memref<1x1x256xf32, #tpu.memory_space<vmem>>, %arg4: memref<3x1x1xf32, #tpu.memory_space<vmem>>, %arg5: memref<3x1x1xf32, #tpu.memory_space<vmem>>, %arg6: memref<3x7x256xf32, #tpu.memory_space<vmem>>) attributes {dimension_semantics = [#tpu.dimension_semantics<parallel>], iteration_bounds = array<i64: 2>, scalar_prefetch = 0 : i64, scratch_operands = 0 : i64, tpu.core_type = #tpu.core_type<tc>, window_params = [{transform_indices = @transform_0, window_bounds = array<i64: 3, 7, 256>}, {transform_indices = @transform_1, window_bounds = array<i64: 1, 1, 256>}, {transform_indices = @transform_2, window_bounds = array<i64: 1, 1, 256>}, {pipeline_mode = #tpu.pipeline_mode<synchronous>, transform_indices = @transform_3, window_bounds = array<i64: 3, 1, 1>}, {pipeline_mode = #tpu.pipeline_mode<synchronous>, transform_indices = @transform_4, window_bounds = array<i64: 3, 1, 1>}, {transform_indices = @transform_5, window_bounds = array<i64: 3, 7, 256>}]} {
    %c0 = arith.constant 0 : index
    %c0_0 = arith.constant 0 : index
    %c0_1 = arith.constant 0 : index
    %0 = vector.load %arg1[%c0, %c0_0, %c0_1] : memref<3x7x256xf32, #tpu.memory_space<vmem>>, vector<3x7x256xf32>
    %cst = arith.constant 0.000000e+00 : f32
    %1 = vector.broadcast %cst : f32 to vector<3x7x256xf32>
    %2 = arith.subf %1, %0 : vector<3x7x256xf32>
    %3 = math.exp %2 : vector<3x7x256xf32>
    %cst_2 = arith.constant 1.000000e+00 : f32
    %4 = vector.broadcast %cst_2 : f32 to vector<3x7x256xf32>
    %5 = arith.addf %4, %3 : vector<3x7x256xf32>
    %cst_3 = arith.constant 1.000000e+00 : f32
    %6 = vector.broadcast %cst_3 : f32 to vector<3x7x256xf32>
    %7 = arith.divf %6, %5 : vector<3x7x256xf32>
    %cst_4 = arith.constant dense<0xFF800000> : vector<7x256xf32>
    %8 = vector.multi_reduction <maximumf>, %0, %cst_4 [0] : vector<3x7x256xf32> to vector<7x256xf32>
    %9 = vector.shape_cast %8 : vector<7x256xf32> to vector<1x7x256xf32>
    %10 = vector.broadcast %9 : vector<1x7x256xf32> to vector<3x7x256xf32>
    %11 = arith.subf %0, %10 : vector<3x7x256xf32>
    %12 = math.exp %11 : vector<3x7x256xf32>
    %cst_5 = arith.constant dense<0.000000e+00> : vector<7x256xf32>
    %13 = vector.multi_reduction <add>, %12, %cst_5 [0] : vector<3x7x256xf32> to vector<7x256xf32>
    %14 = vector.shape_cast %13 : vector<7x256xf32> to vector<1x7x256xf32>
    %15 = vector.broadcast %14 : vector<1x7x256xf32> to vector<3x7x256xf32>
    %16 = arith.divf %12, %15 : vector<3x7x256xf32>
    %17 = math.exp %9 : vector<1x7x256xf32>
    %18 = vector.broadcast %17 : vector<1x7x256xf32> to vector<3x7x256xf32>
    %19 = arith.mulf %12, %18 : vector<3x7x256xf32>
    %c0_6 = arith.constant 0 : index
    %c0_7 = arith.constant 0 : index
    %c0_8 = arith.constant 0 : index
    %20 = vector.load %arg2[%c0_6, %c0_7, %c0_8] : memref<1x1x256xf32, #tpu.memory_space<vmem>>, vector<1x1x256xf32>
    %21 = vector.broadcast %20 : vector<1x1x256xf32> to vector<3x7x256xf32>
    %22 = arith.addf %7, %21 : vector<3x7x256xf32>
    %cst_9 = arith.constant 1.000000e+00 : f32
    %23 = vector.broadcast %cst_9 : f32 to vector<3x7x256xf32>
    %24 = arith.mulf %22, %23 : vector<3x7x256xf32>
    %c0_10 = arith.constant 0 : index
    %c0_11 = arith.constant 0 : index
    %c0_12 = arith.constant 0 : index
    %25 = vector.load %arg3[%c0_10, %c0_11, %c0_12] : memref<1x1x256xf32, #tpu.memory_space<vmem>>, vector<1x1x256xf32>
    %26 = vector.broadcast %25 : vector<1x1x256xf32> to vector<3x7x256xf32>
    %27 = arith.addf %7, %26 : vector<3x7x256xf32>
    %cst_13 = arith.constant 1.000000e+00 : f32
    %28 = vector.broadcast %cst_13 : f32 to vector<3x7x256xf32>
    %29 = arith.mulf %27, %28 : vector<3x7x256xf32>
    %c0_14 = arith.constant 0 : index
    %c0_15 = arith.constant 0 : index
    %c0_16 = arith.constant 0 : index
    %30 = vector.load %arg4[%c0_14, %c0_15, %c0_16] : memref<3x1x1xf32, #tpu.memory_space<vmem>>, vector<3x1x1xf32>
    %31 = vector.broadcast %30 : vector<3x1x1xf32> to vector<3x7x256xf32>
    %32 = arith.mulf %19, %31 : vector<3x7x256xf32>
    %cst_17 = arith.constant 1.000000e+00 : f32
    %33 = vector.broadcast %cst_17 : f32 to vector<3x7x256xf32>
    %34 = arith.mulf %32, %33 : vector<3x7x256xf32>
    %c0_18 = arith.constant 0 : index
    %c0_19 = arith.constant 0 : index
    %c0_20 = arith.constant 0 : index
    %35 = vector.load %arg5[%c0_18, %c0_19, %c0_20] : memref<3x1x1xf32, #tpu.memory_space<vmem>>, vector<3x1x1xf32>
    %36 = vector.broadcast %35 : vector<3x1x1xf32> to vector<3x7x256xf32>
    %37 = arith.mulf %19, %36 : vector<3x7x256xf32>
    %cst_21 = arith.constant 1.000000e+00 : f32
    %38 = vector.broadcast %cst_21 : f32 to vector<3x7x256xf32>
    %39 = arith.mulf %37, %38 : vector<3x7x256xf32>
    %40 = tpu.iota {dimensions = array<i32: 1>} : vector<3x7x256xi32>
    %c0_i32 = arith.constant 0 : i32
    %41 = vector.broadcast %c0_i32 : i32 to vector<3x7x256xi32>
    %42 = arith.cmpi eq, %40, %41 : vector<3x7x256xi32>
    %c1_i32 = arith.constant 1 : i32
    %43 = vector.broadcast %c1_i32 : i32 to vector<3x7x256xi32>
    %44 = arith.cmpi eq, %40, %43 : vector<3x7x256xi32>
    %c2_i32 = arith.constant 2 : i32
    %45 = vector.broadcast %c2_i32 : i32 to vector<3x7x256xi32>
    %46 = arith.cmpi eq, %40, %45 : vector<3x7x256xi32>
    %c3_i32 = arith.constant 3 : i32
    %47 = vector.broadcast %c3_i32 : i32 to vector<3x7x256xi32>
    %48 = arith.cmpi eq, %40, %47 : vector<3x7x256xi32>
    %c4_i32 = arith.constant 4 : i32
    %49 = vector.broadcast %c4_i32 : i32 to vector<3x7x256xi32>
    %50 = arith.cmpi eq, %40, %49 : vector<3x7x256xi32>
    %51 = arith.select %50, %7, %16 : vector<3x7x256xi1>, vector<3x7x256xf32>
    %52 = arith.select %48, %39, %51 : vector<3x7x256xi1>, vector<3x7x256xf32>
    %53 = arith.select %46, %34, %52 : vector<3x7x256xi1>, vector<3x7x256xf32>
    %54 = arith.select %44, %29, %53 : vector<3x7x256xi1>, vector<3x7x256xf32>
    %55 = arith.select %42, %24, %54 : vector<3x7x256xi1>, vector<3x7x256xf32>
    %c0_22 = arith.constant 0 : index
    %c0_23 = arith.constant 0 : index
    %c0_24 = arith.constant 0 : index
    %56 = vector.load %arg6[%c0_22, %c0_23, %c0_24] : memref<3x7x256xf32, #tpu.memory_space<vmem>>, vector<3x7x256xf32>
    tpu.vector_store %arg6[%c0_22, %c0_23, %c0_24], %55 {strides = array<i32>} : memref<3x7x256xf32, #tpu.memory_space<vmem>>, vector<3x7x256xf32>,
    return
  }
  func.func @transform_0(%arg0: i32) -> (i32, i32, i32) {
    %c0_i32 = arith.constant 0 : i32
    %c0_i32_0 = arith.constant 0 : i32
    %c0_i32_1 = arith.constant 0 : i32
    return %c0_i32, %c0_i32_0, %arg0 : i32, i32, i32
  }
  func.func @transform_1(%arg0: i32) -> (i32, i32, i32) {
    %c0_i32 = arith.constant 0 : i32
    %c0_i32_0 = arith.constant 0 : i32
    %c0_i32_1 = arith.constant 0 : i32
    return %c0_i32, %c0_i32_0, %arg0 : i32, i32, i32
  }
  func.func @transform_2(%arg0: i32) -> (i32, i32, i32) {
    %c0_i32 = arith.constant 0 : i32
    %c0_i32_0 = arith.constant 0 : i32
    %c0_i32_1 = arith.constant 0 : i32
    return %c0_i32, %c0_i32_0, %arg0 : i32, i32, i32
  }
  func.func @transform_3(%arg0: i32) -> (i32, i32, i32) {
    %c0_i32 = arith.constant 0 : i32
    %c0_i32_0 = arith.constant 0 : i32
    %c0_i32_1 = arith.constant 0 : i32
    %c0_i32_2 = arith.constant 0 : i32
    return %c0_i32, %c0_i32_0, %c0_i32_1 : i32, i32, i32
  }
  func.func @transform_4(%arg0: i32) -> (i32, i32, i32) {
    %c0_i32 = arith.constant 0 : i32
    %c0_i32_0 = arith.constant 0 : i32
    %c0_i32_1 = arith.constant 0 : i32
    %c0_i32_2 = arith.constant 0 : i32
    return %c0_i32, %c0_i32_0, %c0_i32_1 : i32, i32, i32
  }
  func.func @transform_5(%arg0: i32) -> (i32, i32, i32) {
    %c0_i32 = arith.constant 0 : i32
    %c0_i32_0 = arith.constant 0 : i32
    %c0_i32_1 = arith.constant 0 : i32
    return %c0_i32, %c0_i32_0, %arg0 : i32, i32, i32
  }
}

module attributes {stable_mosaic.version = 11 : i64} {
  func.func @_conv_mm_kernel(%arg0: i32, %arg1: memref<128x128xf32, #tpu.memory_space<vmem>>, %arg2: memref<128x128xf32, #tpu.memory_space<vmem>>, %arg3: memref<1x128xf32, #tpu.memory_space<vmem>>, %arg4: memref<1x128xf32, #tpu.memory_space<vmem>>, %arg5: memref<128x128xf32, #tpu.memory_space<vmem>>) attributes {dimension_semantics = [#tpu.dimension_semantics<parallel>], iteration_bounds = array<i64: 1>, scalar_prefetch = 0 : i64, scratch_operands = 0 : i64, tpu.core_type = #tpu.core_type<tc>, window_params = [{transform_indices = @transform_0, window_bounds = array<i64: 128, 128>}, {pipeline_mode = #tpu.pipeline_mode<synchronous>, transform_indices = @transform_1, window_bounds = array<i64: 128, 128>}, {pipeline_mode = #tpu.pipeline_mode<synchronous>, transform_indices = @transform_2, window_bounds = array<i64: 1, 128>}, {pipeline_mode = #tpu.pipeline_mode<synchronous>, transform_indices = @transform_3, window_bounds = array<i64: 1, 128>}, {transform_indices = @transform_4, window_bounds = array<i64: 128, 128>}]} {
    %c0 = arith.constant 0 : index
    %c0_0 = arith.constant 0 : index
    %0 = vector.load %arg1[%c0, %c0_0] : memref<128x128xf32, #tpu.memory_space<vmem>>, vector<128x128xf32>
    %c0_1 = arith.constant 0 : index
    %c0_2 = arith.constant 0 : index
    %1 = vector.load %arg2[%c0_1, %c0_2] : memref<128x128xf32, #tpu.memory_space<vmem>>, vector<128x128xf32>
    %cst = arith.constant dense<0.000000e+00> : vector<128x128xf32>
    %2 = tpu.matmul %0, %1, %cst {dimension_numbers = #tpu.dot_dimension_numbers<[1], [0], [0], [1], [0, 0, 1, 1], [], []>} : vector<128x128xf32>, vector<128x128xf32>, vector<128x128xf32> -> vector<128x128xf32>
    %c0_3 = arith.constant 0 : index
    %c0_4 = arith.constant 0 : index
    %3 = vector.load %arg3[%c0_3, %c0_4] : memref<1x128xf32, #tpu.memory_space<vmem>>, vector<1x128xf32>
    %4 = vector.broadcast %3 : vector<1x128xf32> to vector<128x128xf32>
    %5 = arith.mulf %2, %4 : vector<128x128xf32>
    %c0_5 = arith.constant 0 : index
    %c0_6 = arith.constant 0 : index
    %6 = vector.load %arg4[%c0_5, %c0_6] : memref<1x128xf32, #tpu.memory_space<vmem>>, vector<1x128xf32>
    %7 = vector.broadcast %6 : vector<1x128xf32> to vector<128x128xf32>
    %8 = arith.addf %5, %7 : vector<128x128xf32>
    %c0_7 = arith.constant 0 : index
    %c0_8 = arith.constant 0 : index
    %9 = vector.load %arg5[%c0_7, %c0_8] : memref<128x128xf32, #tpu.memory_space<vmem>>, vector<128x128xf32>
    tpu.vector_store %arg5[%c0_7, %c0_8], %8 {strides = array<i32>} : memref<128x128xf32, #tpu.memory_space<vmem>>, vector<128x128xf32>,
    return
  }
  func.func @transform_0(%arg0: i32) -> (i32, i32) {
    %c0_i32 = arith.constant 0 : i32
    %c0_i32_0 = arith.constant 0 : i32
    return %arg0, %c0_i32 : i32, i32
  }
  func.func @transform_1(%arg0: i32) -> (i32, i32) {
    %c0_i32 = arith.constant 0 : i32
    %c0_i32_0 = arith.constant 0 : i32
    %c0_i32_1 = arith.constant 0 : i32
    return %c0_i32, %c0_i32_0 : i32, i32
  }
  func.func @transform_2(%arg0: i32) -> (i32, i32) {
    %c0_i32 = arith.constant 0 : i32
    %c0_i32_0 = arith.constant 0 : i32
    %c0_i32_1 = arith.constant 0 : i32
    return %c0_i32, %c0_i32_0 : i32, i32
  }
  func.func @transform_3(%arg0: i32) -> (i32, i32) {
    %c0_i32 = arith.constant 0 : i32
    %c0_i32_0 = arith.constant 0 : i32
    %c0_i32_1 = arith.constant 0 : i32
    return %c0_i32, %c0_i32_0 : i32, i32
  }
  func.func @transform_4(%arg0: i32) -> (i32, i32) {
    %c0_i32 = arith.constant 0 : i32
    %c0_i32_0 = arith.constant 0 : i32
    return %arg0, %c0_i32 : i32, i32
  }
}

module attributes {stable_mosaic.version = 11 : i64} {
  func.func @_yolo_kernel(%arg0: i32, %arg1: memref<3x7x128xf32, #tpu.memory_space<vmem>>, %arg2: memref<1x1x128xf32, #tpu.memory_space<vmem>>, %arg3: memref<1x1x128xf32, #tpu.memory_space<vmem>>, %arg4: memref<3x1x1xf32, #tpu.memory_space<vmem>>, %arg5: memref<3x1x1xf32, #tpu.memory_space<vmem>>, %arg6: memref<3x7x128xf32, #tpu.memory_space<vmem>>) attributes {dimension_semantics = [#tpu.dimension_semantics<parallel>], iteration_bounds = array<i64: 1>, scalar_prefetch = 0 : i64, scratch_operands = 0 : i64, tpu.core_type = #tpu.core_type<tc>, window_params = [{transform_indices = @transform_0, window_bounds = array<i64: 3, 7, 128>}, {transform_indices = @transform_1, window_bounds = array<i64: 1, 1, 128>}, {transform_indices = @transform_2, window_bounds = array<i64: 1, 1, 128>}, {pipeline_mode = #tpu.pipeline_mode<synchronous>, transform_indices = @transform_3, window_bounds = array<i64: 3, 1, 1>}, {pipeline_mode = #tpu.pipeline_mode<synchronous>, transform_indices = @transform_4, window_bounds = array<i64: 3, 1, 1>}, {transform_indices = @transform_5, window_bounds = array<i64: 3, 7, 128>}]} {
    %c0 = arith.constant 0 : index
    %c0_0 = arith.constant 0 : index
    %c0_1 = arith.constant 0 : index
    %0 = vector.load %arg1[%c0, %c0_0, %c0_1] : memref<3x7x128xf32, #tpu.memory_space<vmem>>, vector<3x7x128xf32>
    %cst = arith.constant 0.000000e+00 : f32
    %1 = vector.broadcast %cst : f32 to vector<3x7x128xf32>
    %2 = arith.subf %1, %0 : vector<3x7x128xf32>
    %3 = math.exp %2 : vector<3x7x128xf32>
    %cst_2 = arith.constant 1.000000e+00 : f32
    %4 = vector.broadcast %cst_2 : f32 to vector<3x7x128xf32>
    %5 = arith.addf %4, %3 : vector<3x7x128xf32>
    %cst_3 = arith.constant 1.000000e+00 : f32
    %6 = vector.broadcast %cst_3 : f32 to vector<3x7x128xf32>
    %7 = arith.divf %6, %5 : vector<3x7x128xf32>
    %cst_4 = arith.constant dense<0xFF800000> : vector<7x128xf32>
    %8 = vector.multi_reduction <maximumf>, %0, %cst_4 [0] : vector<3x7x128xf32> to vector<7x128xf32>
    %9 = vector.shape_cast %8 : vector<7x128xf32> to vector<1x7x128xf32>
    %10 = vector.broadcast %9 : vector<1x7x128xf32> to vector<3x7x128xf32>
    %11 = arith.subf %0, %10 : vector<3x7x128xf32>
    %12 = math.exp %11 : vector<3x7x128xf32>
    %cst_5 = arith.constant dense<0.000000e+00> : vector<7x128xf32>
    %13 = vector.multi_reduction <add>, %12, %cst_5 [0] : vector<3x7x128xf32> to vector<7x128xf32>
    %14 = vector.shape_cast %13 : vector<7x128xf32> to vector<1x7x128xf32>
    %15 = vector.broadcast %14 : vector<1x7x128xf32> to vector<3x7x128xf32>
    %16 = arith.divf %12, %15 : vector<3x7x128xf32>
    %17 = math.exp %9 : vector<1x7x128xf32>
    %18 = vector.broadcast %17 : vector<1x7x128xf32> to vector<3x7x128xf32>
    %19 = arith.mulf %12, %18 : vector<3x7x128xf32>
    %c0_6 = arith.constant 0 : index
    %c0_7 = arith.constant 0 : index
    %c0_8 = arith.constant 0 : index
    %20 = vector.load %arg2[%c0_6, %c0_7, %c0_8] : memref<1x1x128xf32, #tpu.memory_space<vmem>>, vector<1x1x128xf32>
    %21 = vector.broadcast %20 : vector<1x1x128xf32> to vector<3x7x128xf32>
    %22 = arith.addf %7, %21 : vector<3x7x128xf32>
    %cst_9 = arith.constant 2.000000e+00 : f32
    %23 = vector.broadcast %cst_9 : f32 to vector<3x7x128xf32>
    %24 = arith.mulf %22, %23 : vector<3x7x128xf32>
    %c0_10 = arith.constant 0 : index
    %c0_11 = arith.constant 0 : index
    %c0_12 = arith.constant 0 : index
    %25 = vector.load %arg3[%c0_10, %c0_11, %c0_12] : memref<1x1x128xf32, #tpu.memory_space<vmem>>, vector<1x1x128xf32>
    %26 = vector.broadcast %25 : vector<1x1x128xf32> to vector<3x7x128xf32>
    %27 = arith.addf %7, %26 : vector<3x7x128xf32>
    %cst_13 = arith.constant 2.000000e+00 : f32
    %28 = vector.broadcast %cst_13 : f32 to vector<3x7x128xf32>
    %29 = arith.mulf %27, %28 : vector<3x7x128xf32>
    %c0_14 = arith.constant 0 : index
    %c0_15 = arith.constant 0 : index
    %c0_16 = arith.constant 0 : index
    %30 = vector.load %arg4[%c0_14, %c0_15, %c0_16] : memref<3x1x1xf32, #tpu.memory_space<vmem>>, vector<3x1x1xf32>
    %31 = vector.broadcast %30 : vector<3x1x1xf32> to vector<3x7x128xf32>
    %32 = arith.mulf %19, %31 : vector<3x7x128xf32>
    %cst_17 = arith.constant 2.000000e+00 : f32
    %33 = vector.broadcast %cst_17 : f32 to vector<3x7x128xf32>
    %34 = arith.mulf %32, %33 : vector<3x7x128xf32>
    %c0_18 = arith.constant 0 : index
    %c0_19 = arith.constant 0 : index
    %c0_20 = arith.constant 0 : index
    %35 = vector.load %arg5[%c0_18, %c0_19, %c0_20] : memref<3x1x1xf32, #tpu.memory_space<vmem>>, vector<3x1x1xf32>
    %36 = vector.broadcast %35 : vector<3x1x1xf32> to vector<3x7x128xf32>
    %37 = arith.mulf %19, %36 : vector<3x7x128xf32>
    %cst_21 = arith.constant 2.000000e+00 : f32
    %38 = vector.broadcast %cst_21 : f32 to vector<3x7x128xf32>
    %39 = arith.mulf %37, %38 : vector<3x7x128xf32>
    %40 = tpu.iota {dimensions = array<i32: 1>} : vector<3x7x128xi32>
    %c0_i32 = arith.constant 0 : i32
    %41 = vector.broadcast %c0_i32 : i32 to vector<3x7x128xi32>
    %42 = arith.cmpi eq, %40, %41 : vector<3x7x128xi32>
    %c1_i32 = arith.constant 1 : i32
    %43 = vector.broadcast %c1_i32 : i32 to vector<3x7x128xi32>
    %44 = arith.cmpi eq, %40, %43 : vector<3x7x128xi32>
    %c2_i32 = arith.constant 2 : i32
    %45 = vector.broadcast %c2_i32 : i32 to vector<3x7x128xi32>
    %46 = arith.cmpi eq, %40, %45 : vector<3x7x128xi32>
    %c3_i32 = arith.constant 3 : i32
    %47 = vector.broadcast %c3_i32 : i32 to vector<3x7x128xi32>
    %48 = arith.cmpi eq, %40, %47 : vector<3x7x128xi32>
    %c4_i32 = arith.constant 4 : i32
    %49 = vector.broadcast %c4_i32 : i32 to vector<3x7x128xi32>
    %50 = arith.cmpi eq, %40, %49 : vector<3x7x128xi32>
    %51 = arith.select %50, %7, %16 : vector<3x7x128xi1>, vector<3x7x128xf32>
    %52 = arith.select %48, %39, %51 : vector<3x7x128xi1>, vector<3x7x128xf32>
    %53 = arith.select %46, %34, %52 : vector<3x7x128xi1>, vector<3x7x128xf32>
    %54 = arith.select %44, %29, %53 : vector<3x7x128xi1>, vector<3x7x128xf32>
    %55 = arith.select %42, %24, %54 : vector<3x7x128xi1>, vector<3x7x128xf32>
    %c0_22 = arith.constant 0 : index
    %c0_23 = arith.constant 0 : index
    %c0_24 = arith.constant 0 : index
    %56 = vector.load %arg6[%c0_22, %c0_23, %c0_24] : memref<3x7x128xf32, #tpu.memory_space<vmem>>, vector<3x7x128xf32>
    tpu.vector_store %arg6[%c0_22, %c0_23, %c0_24], %55 {strides = array<i32>} : memref<3x7x128xf32, #tpu.memory_space<vmem>>, vector<3x7x128xf32>,
    return
  }
  func.func @transform_0(%arg0: i32) -> (i32, i32, i32) {
    %c0_i32 = arith.constant 0 : i32
    %c0_i32_0 = arith.constant 0 : i32
    %c0_i32_1 = arith.constant 0 : i32
    return %c0_i32, %c0_i32_0, %arg0 : i32, i32, i32
  }
  func.func @transform_1(%arg0: i32) -> (i32, i32, i32) {
    %c0_i32 = arith.constant 0 : i32
    %c0_i32_0 = arith.constant 0 : i32
    %c0_i32_1 = arith.constant 0 : i32
    return %c0_i32, %c0_i32_0, %arg0 : i32, i32, i32
  }
  func.func @transform_2(%arg0: i32) -> (i32, i32, i32) {
    %c0_i32 = arith.constant 0 : i32
    %c0_i32_0 = arith.constant 0 : i32
    %c0_i32_1 = arith.constant 0 : i32
    return %c0_i32, %c0_i32_0, %arg0 : i32, i32, i32
  }
  func.func @transform_3(%arg0: i32) -> (i32, i32, i32) {
    %c0_i32 = arith.constant 0 : i32
    %c0_i32_0 = arith.constant 0 : i32
    %c0_i32_1 = arith.constant 0 : i32
    %c0_i32_2 = arith.constant 0 : i32
    return %c0_i32, %c0_i32_0, %c0_i32_1 : i32, i32, i32
  }
  func.func @transform_4(%arg0: i32) -> (i32, i32, i32) {
    %c0_i32 = arith.constant 0 : i32
    %c0_i32_0 = arith.constant 0 : i32
    %c0_i32_1 = arith.constant 0 : i32
    %c0_i32_2 = arith.constant 0 : i32
    return %c0_i32, %c0_i32_0, %c0_i32_1 : i32, i32, i32
  }
  func.func @transform_5(%arg0: i32) -> (i32, i32, i32) {
    %c0_i32 = arith.constant 0 : i32
    %c0_i32_0 = arith.constant 0 : i32
    %c0_i32_1 = arith.constant 0 : i32
    return %c0_i32, %c0_i32_0, %arg0 : i32, i32, i32
  }
}

</mosaic_0001>

<llo_original>
// kernel: _lambda_.14
$region0: #{_lambda_.14}
  #allocation0 [shape = 'u32[]', space=smem, size = 0x4, offset = 0x4, fixed_abs, tag = 'smem constant byte address 0x4 - core index']
  #allocation1 [shape = 'u32[72,128]{1,0:T(1,128)}', space=vmem, size = 0x9000, scoped, tag = 'internal scratch']
  %s0 = inlined_call_operand.vmem [shape: f32[512,128], index: 0, kind: input, shape index: {}]
  %s1 = inlined_call_operand.vmem [shape: f32[128,128], index: 1, kind: input, shape index: {}]
  %s2 = inlined_call_operand.vmem [shape: f32[1,128], index: 2, kind: input, shape index: {}]
  %s3 = inlined_call_operand.vmem [shape: f32[1,128], index: 3, kind: input, shape index: {}]
  %s4 = inlined_call_operand.vmem [shape: f32[512,128], index: 4, kind: output, shape index: {}]
  %s5 = sld [smem:[#allocation0]]
  $region49: #{_lambda_.14} parent=0
    _
  %s7 = ssub.s32 1, %s5
  %s8 = scalar_select 0, %s7, %s5
  loop: start=0, step=1, limit=4
  $region2: #{_lambda_.14} parent=0 // loop_pre_header
    _
  $region3: #{_lambda_.14} parent=0 // loop_header
    %s10 = sphi 0, %s14
    %p11 = scmp.ge.s32.totalorder %s10, 4
    %s20 = sphi 0, %s22
    %s23 = sphi 0, %s20
    %s24 = sphi 0, %s23
    %s40 = sphi 0, %s24
    %s44 = sphi 0, %s44
    %s46 = sphi 0, %s44
    %s47 = sphi 0, %s46
    %s61 = sphi 0, %s47
    %s65 = sphi 0, %s65
    %s67 = sphi 0, %s65
    %s68 = sphi 0, %s67
    %s82 = sphi 0, %s68
    %s86 = sphi 0, %s86
    %s88 = sphi 0, %s86
    %s89 = sphi 0, %s88
    %s103 = sphi 0, %s89
    %s109 = sphi 0, %s111
    %s112 = sphi 0, %s109
    %s113 = sphi 0, %s112
    %s129 = sphi 0, %s113
  $region4: #{_lambda_.14} parent=0 // loop_header_branch
    %13 = sbr.rel (%p11) target = $region8
  $region5: #{_lambda_.14} parent=0 // loop_body
    %s15 = ssub.s32 %s10, 1
    %s16 = ssub.s32 %s10, 2
    %s17 = sadd.s32 %s10, 1
    %s18 = ssub.s32 %s10, %s17
    %p19 = scmp.eq.s32.totalorder %s18, 0
    %s21 = sadd.s32 %s20, 1
    %s22 = scalar_select %p19, %s20, %s21
    %p25 = pneg %p19
    %p26 = scmp.eq.s32.totalorder %s10, 1
    %p27 = por %p25, %p26
    %p28 = scmp.ne.s32.totalorder %s20, %s23
    %p29 = scmp.eq.s32.totalorder %s10, 0
    %p30 = por %p28, %p29
    %p31 = scmp.ne.s32.totalorder %s20, %s23
    %p32 = scmp.eq.s32.totalorder %s15, 1
    %p33 = por %p31, %p32
    %p34 = scmp.ne.s32.totalorder %s23, %s24
    %p35 = scmp.eq.s32.totalorder %s15, 0
    %p36 = por %p34, %p35
    %p37 = scmp.ne.s32.totalorder %s23, %s24
    %p38 = scmp.eq.s32.totalorder %s16, 1
    %p39 = por %p37, %p38
    %p41 = scmp.ne.s32.totalorder %s24, %s40
    %p42 = scmp.eq.s32.totalorder %s16, 0
    %p43 = por %p41, %p42
    %s45 = sadd.s32 %s44, 1
    %p48 = scmp.eq.s32.totalorder %s10, 1
    %p49 = scmp.ne.s32.totalorder %s44, %s46
    %p50 = scmp.eq.s32.totalorder %s10, 0
    %p51 = por %p49, %p50
    %p52 = scmp.ne.s32.totalorder %s44, %s46
    %p53 = scmp.eq.s32.totalorder %s15, 1
    %p54 = por %p52, %p53
    %p55 = scmp.ne.s32.totalorder %s46, %s47
    %p56 = scmp.eq.s32.totalorder %s15, 0
    %p57 = por %p55, %p56
    %p58 = scmp.ne.s32.totalorder %s46, %s47
    %p59 = scmp.eq.s32.totalorder %s16, 1
    %p60 = por %p58, %p59
    %p62 = scmp.ne.s32.totalorder %s47, %s61
    %p63 = scmp.eq.s32.totalorder %s16, 0
    %p64 = por %p62, %p63
    %s66 = sadd.s32 %s65, 1
    %p69 = scmp.eq.s32.totalorder %s10, 1
    %p70 = scmp.ne.s32.totalorder %s65, %s67
    %p71 = scmp.eq.s32.totalorder %s10, 0
    %p72 = por %p70, %p71
    %p73 = scmp.ne.s32.totalorder %s65, %s67
    %p74 = scmp.eq.s32.totalorder %s15, 1
    %p75 = por %p73, %p74
    %p76 = scmp.ne.s32.totalorder %s67, %s68
    %p77 = scmp.eq.s32.totalorder %s15, 0
    %p78 = por %p76, %p77
    %p79 = scmp.ne.s32.totalorder %s67, %s68
    %p80 = scmp.eq.s32.totalorder %s16, 1
    %p81 = por %p79, %p80
    %p83 = scmp.ne.s32.totalorder %s68, %s82
    %p84 = scmp.eq.s32.totalorder %s16, 0
    %p85 = por %p83, %p84
    %s87 = sadd.s32 %s86, 1
    %p90 = scmp.eq.s32.totalorder %s10, 1
    %p91 = scmp.ne.s32.totalorder %s86, %s88
    %p92 = scmp.eq.s32.totalorder %s10, 0
    %p93 = por %p91, %p92
    %p94 = scmp.ne.s32.totalorder %s86, %s88
    %p95 = scmp.eq.s32.totalorder %s15, 1
    %p96 = por %p94, %p95
    %p97 = scmp.ne.s32.totalorder %s88, %s89
    %p98 = scmp.eq.s32.totalorder %s15, 0
    %p99 = por %p97, %p98
    %p100 = scmp.ne.s32.totalorder %s88, %s89
    %p101 = scmp.eq.s32.totalorder %s16, 1
    %p102 = por %p100, %p101
    %p104 = scmp.ne.s32.totalorder %s89, %s103
    %p105 = scmp.eq.s32.totalorder %s16, 0
    %p106 = por %p104, %p105
    %s107 = ssub.s32 %s10, %s17
    %p108 = scmp.eq.s32.totalorder %s107, 0
    %s110 = sadd.s32 %s109, 1
    %s111 = scalar_select %p108, %s109, %s110
    %p114 = pneg %p108
    %p115 = scmp.eq.s32.totalorder %s10, 1
    %p116 = por %p114, %p115
    %p117 = scmp.ne.s32.totalorder %s109, %s112
    %p118 = scmp.eq.s32.totalorder %s10, 0
    %p119 = por %p117, %p118
    %p120 = scmp.ne.s32.totalorder %s109, %s112
    %p121 = scmp.eq.s32.totalorder %s15, 1
    %p122 = por %p120, %p121
    %p123 = scmp.ne.s32.totalorder %s112, %s113
    %p124 = scmp.eq.s32.totalorder %s15, 0
    %p125 = por %p123, %p124
    %p126 = scmp.ne.s32.totalorder %s112, %s113
    %p127 = scmp.eq.s32.totalorder %s16, 1
    %p128 = por %p126, %p127
    %p130 = scmp.ne.s32.totalorder %s113, %s129
    %p131 = scmp.eq.s32.totalorder %s16, 0
    %p132 = por %p130, %p131
    %p133 = scmp.le.s32.totalorder 1, %s10
    %p134 = scmp.lt.s32.totalorder %s10, 3
    %p135 = pnand %p133, %p134
    %p136 = pneg %p135
    // Predicated region
    $region9: #{_lambda_.14} parent=5 // pred_check
      _
    $region10: #{_lambda_.14} parent=5 // pred_check_branch
      %138 = sbr.rel (%p135) target = $region12
    $region11: #{_lambda_.14} parent=5 // pred_region
      %s139 = ssub.s32 %s10, 1
      // Predicated region
      $region13: #{_lambda_.14} parent=11 // pred_check
        %p140 = pneg %p57
      $region14: #{_lambda_.14} parent=11 // pred_check_branch
        %142 = sbr.rel (%p140) target = $region16
      $region15: #{_lambda_.14} parent=11 // pred_region
        _
      $region16: #{_lambda_.14} parent=11 // pred_fallthru
        _
      // Predicated region
      $region17: #{_lambda_.14} parent=11 // pred_check
        %p143 = pneg %p78
      $region18: #{_lambda_.14} parent=11 // pred_check_branch
        %145 = sbr.rel (%p143) target = $region20
      $region19: #{_lambda_.14} parent=11 // pred_region
        _
      $region20: #{_lambda_.14} parent=11 // pred_fallthru
        _
      // Predicated region
      $region21: #{_lambda_.14} parent=11 // pred_check
        %p146 = pneg %p99
      $region22: #{_lambda_.14} parent=11 // pred_check_branch
        %148 = sbr.rel (%p146) target = $region24
      $region23: #{_lambda_.14} parent=11 // pred_region
        _
      $region24: #{_lambda_.14} parent=11 // pred_fallthru
        _
    $region12: #{_lambda_.14} parent=5 // pred_fallthru
      _
    %p149 = scmp.lt.s32.totalorder %s10, 2
    // Predicated region
    $region25: #{_lambda_.14} parent=5 // pred_check
      %p150 = pneg %p149
    $region26: #{_lambda_.14} parent=5 // pred_check_branch
      %152 = sbr.rel (%p150) target = $region28
    $region27: #{_lambda_.14} parent=5 // pred_region
      // Predicated region
      $region29: #{_lambda_.14} parent=27 // pred_check
        %p153 = pneg %p30
      $region30: #{_lambda_.14} parent=27 // pred_check_branch
        %155 = sbr.rel (%p153) target = $region32
      $region31: #{_lambda_.14} parent=27 // pred_region
        %s156 = smul.u32 32, %s10
        %p157 = scmp.lt.s32.totalorder %s156, 63
        %s158 = scalar_select %p157, %s156, 63
        %s159 = smul.addr %s158, 8
        %s160 = scalar_lea.vmem %s0, %s159
        %s161 = smul.u32 32, %s10
      $region32: #{_lambda_.14} parent=27 // pred_fallthru
        _
    $region28: #{_lambda_.14} parent=5 // pred_fallthru
      _
    %p162 = scmp.le.s32.totalorder 1, %s10
    %p163 = scmp.lt.s32.totalorder %s10, 3
    %p164 = pnand %p162, %p163
    %p165 = pneg %p164
    // Predicated region
    $region33: #{_lambda_.14} parent=5 // pred_check
      _
    $region34: #{_lambda_.14} parent=5 // pred_check_branch
      %167 = sbr.rel (%p164) target = $region36
    $region35: #{_lambda_.14} parent=5 // pred_region
      %s168 = ssub.s32 %s10, 1
      %s169 = smul.u32 32, %s15
      %p170 = scmp.lt.s32.totalorder %s169, 63
      %s171 = scalar_select %p170, %s169, 63
      %s172 = smul.addr %s171, 8
      %s173 = scalar_lea.vmem %s0, %s172
      %p174 = pneg %p36
      %p175 = pneg %p33
      %p176 = pneg %p57
      %p177 = pneg %p54
      %p178 = pneg %p78
      %p179 = pneg %p75
      %p180 = pneg %p99
      %p181 = pneg %p96
      %p182 = pneg %p125
      %p183 = pneg %p122
      %s184 = smul.u32 32, %s15
      %p185 = scmp.lt.s32.totalorder %s184, 63
      %s186 = scalar_select %p185, %s184, 63
      %s187 = smul.addr %s186, 8
      %s188 = scalar_lea.vmem %s4, %s187
      %s189 = smul.u32 32, %s15
      %p190 = scmp.lt.s32.totalorder %s189, 63
      %s191 = scalar_select %p190, %s189, 63
      %s192 = smul.addr %s191, 8
      %s193 = scalar_lea.vmem %s0, %s192
      %s194 = smul.u32 32, %s15
      %s195 = smul.u32 32, %s15
      %p196 = scmp.lt.s32.totalorder %s195, 63
      %s197 = scalar_select %p196, %s195, 63
      %s198 = smul.addr %s197, 8
      %s199 = scalar_lea.vmem %s4, %s198
      %s200 = smul.u32 32, %s15
      %v201 = vld [vmem:[%s193] sm:$0xff]
      %v202 = vld [vmem:[%s193 + $0x8] sm:$0xff]
      %v203 = vld [vmem:[%s193 + $0x10] sm:$0xff]
      %v204 = vld [vmem:[%s193 + $0x18] sm:$0xff]
      %v205 = vld [vmem:[%s193 + $0x20] sm:$0xff]
      %v206 = vld [vmem:[%s193 + $0x28] sm:$0xff]
      %v207 = vld [vmem:[%s193 + $0x30] sm:$0xff]
      %v208 = vld [vmem:[%s193 + $0x38] sm:$0xff]
      %v209 = vld [vmem:[%s193 + $0x40] sm:$0xff]
      %v210 = vld [vmem:[%s193 + $0x48] sm:$0xff]
      %v211 = vld [vmem:[%s193 + $0x50] sm:$0xff]
      %v212 = vld [vmem:[%s193 + $0x58] sm:$0xff]
      %v213 = vld [vmem:[%s193 + $0x60] sm:$0xff]
      %v214 = vld [vmem:[%s193 + $0x68] sm:$0xff]
      %v215 = vld [vmem:[%s193 + $0x70] sm:$0xff]
      %v216 = vld [vmem:[%s193 + $0x78] sm:$0xff]
      %v217 = vld [vmem:[%s193 + $0x80] sm:$0xff]
      %v218 = vld [vmem:[%s193 + $0x88] sm:$0xff]
      %v219 = vld [vmem:[%s193 + $0x90] sm:$0xff]
      %v220 = vld [vmem:[%s193 + $0x98] sm:$0xff]
      %v221 = vld [vmem:[%s193 + $0xa0] sm:$0xff]
      %v222 = vld [vmem:[%s193 + $0xa8] sm:$0xff]
      %v223 = vld [vmem:[%s193 + $0xb0] sm:$0xff]
      %v224 = vld [vmem:[%s193 + $0xb8] sm:$0xff]
      %v225 = vld [vmem:[%s193 + $0xc0] sm:$0xff]
      %v226 = vld [vmem:[%s193 + $0xc8] sm:$0xff]
      %v227 = vld [vmem:[%s193 + $0xd0] sm:$0xff]
      %v228 = vld [vmem:[%s193 + $0xd8] sm:$0xff]
      %v229 = vld [vmem:[%s193 + $0xe0] sm:$0xff]
      %v230 = vld [vmem:[%s193 + $0xe8] sm:$0xff]
      %v231 = vld [vmem:[%s193 + $0xf0] sm:$0xff]
      %v232 = vld [vmem:[%s193 + $0xf8] sm:$0xff]
      %v233 = vld [vmem:[%s1] sm:$0xff]
      %v234 = vld [vmem:[%s1 + $0x8] sm:$0xff]
      %v235 = vld [vmem:[%s1 + $0x10] sm:$0xff]
      %v236 = vld [vmem:[%s1 + $0x18] sm:$0xff]
      %v237 = vld [vmem:[%s1 + $0x20] sm:$0xff]
      %v238 = vld [vmem:[%s1 + $0x28] sm:$0xff]
      %v239 = vld [vmem:[%s1 + $0x30] sm:$0xff]
      %v240 = vld [vmem:[%s1 + $0x38] sm:$0xff]
      %v241 = vld [vmem:[%s1 + $0x40] sm:$0xff]
      %v242 = vld [vmem:[%s1 + $0x48] sm:$0xff]
      %v243 = vld [vmem:[%s1 + $0x50] sm:$0xff]
      %v244 = vld [vmem:[%s1 + $0x58] sm:$0xff]
      %v245 = vld [vmem:[%s1 + $0x60] sm:$0xff]
      %v246 = vld [vmem:[%s1 + $0x68] sm:$0xff]
      %v247 = vld [vmem:[%s1 + $0x70] sm:$0xff]
      %v248 = vld [vmem:[%s1 + $0x78] sm:$0xff]
      %249 = vmatpush.msra.mxu0 %v248
      %250 = vmatpush.msra.mxu0 %v247
      %251 = vmatpush.msra.mxu0 %v246
      %252 = vmatpush.msra.mxu0 %v245
      %253 = vmatpush.msra.mxu0 %v244
      %254 = vmatpush.msra.mxu0 %v243
      %255 = vmatpush.msra.mxu0 %v242
      %256 = vmatpush.msra.mxu0 %v241
      %257 = vmatpush.msra.mxu0 %v240
      %258 = vmatpush.msra.mxu0 %v239
      %259 = vmatpush.msra.mxu0 %v238
      %260 = vmatpush.msra.mxu0 %v237
      %261 = vmatpush.msra.mxu0 %v236
      %262 = vmatpush.msra.mxu0 %v235
      %263 = vmatpush.msra.mxu0 %v234
      %264 = vmatpush.msra.mxu0 %v233
      %265 = vmatmul.f32.gmra.mxu0 %v201
      %v266 = vpop.f32.mrf.mxu0
      %v267 = vadd.f32 0.0, %v266
      %268 = vmatmul.f32.gmra.mxu0 %v202
      %v269 = vpop.f32.mrf.mxu0
      %v270 = vadd.f32 0.0, %v269
      %271 = vmatmul.f32.gmra.mxu0 %v203
      %v272 = vpop.f32.mrf.mxu0
      %v273 = vadd.f32 0.0, %v272
      %274 = vmatmul.f32.gmra.mxu0 %v204
      %v275 = vpop.f32.mrf.mxu0
      %v276 = vadd.f32 0.0, %v275
      %277 = vmatmul.f32.gmra.mxu0 %v205
      %v278 = vpop.f32.mrf.mxu0
      %v279 = vadd.f32 0.0, %v278
      %280 = vmatmul.f32.gmra.mxu0 %v206
      %v281 = vpop.f32.mrf.mxu0
      %v282 = vadd.f32 0.0, %v281
      %283 = vmatmul.f32.gmra.mxu0 %v207
      %v284 = vpop.f32.mrf.mxu0
      %v285 = vadd.f32 0.0, %v284
      %286 = vmatmul.f32.gmra.mxu0 %v208
      %v287 = vpop.f32.mrf.mxu0
      %v288 = vadd.f32 0.0, %v287
      %289 = vmatmul.f32.gmra.mxu0 %v209
      %v290 = vpop.f32.mrf.mxu0
      %v291 = vadd.f32 0.0, %v290
      %292 = vmatmul.f32.gmra.mxu0 %v210
      %v293 = vpop.f32.mrf.mxu0
      %v294 = vadd.f32 0.0, %v293
      %295 = vmatmul.f32.gmra.mxu0 %v211
      %v296 = vpop.f32.mrf.mxu0
      %v297 = vadd.f32 0.0, %v296
      %298 = vmatmul.f32.gmra.mxu0 %v212
      %v299 = vpop.f32.mrf.mxu0
      %v300 = vadd.f32 0.0, %v299
      %301 = vmatmul.f32.gmra.mxu0 %v213
      %v302 = vpop.f32.mrf.mxu0
      %v303 = vadd.f32 0.0, %v302
      %304 = vmatmul.f32.gmra.mxu0 %v214
      %v305 = vpop.f32.mrf.mxu0
      %v306 = vadd.f32 0.0, %v305
      %307 = vmatmul.f32.gmra.mxu0 %v215
      %v308 = vpop.f32.mrf.mxu0
      %v309 = vadd.f32 0.0, %v308
      %310 = vmatmul.f32.gmra.mxu0 %v216
      %v311 = vpop.f32.mrf.mxu0
      %v312 = vadd.f32 0.0, %v311
      %313 = vmatmul.f32.gmra.mxu0 %v217
      %v314 = vpop.f32.mrf.mxu0
      %v315 = vadd.f32 0.0, %v314
      %316 = vmatmul.f32.gmra.mxu0 %v218
      %v317 = vpop.f32.mrf.mxu0
      %v318 = vadd.f32 0.0, %v317
      %319 = vmatmul.f32.gmra.mxu0 %v219
      %v320 = vpop.f32.mrf.mxu0
      %v321 = vadd.f32 0.0, %v320
      %322 = vmatmul.f32.gmra.mxu0 %v220
      %v323 = vpop.f32.mrf.mxu0
      %v324 = vadd.f32 0.0, %v323
      %325 = vmatmul.f32.gmra.mxu0 %v221
      %v326 = vpop.f32.mrf.mxu0
      %v327 = vadd.f32 0.0, %v326
      %328 = vmatmul.f32.gmra.mxu0 %v222
      %v329 = vpop.f32.mrf.mxu0
      %v330 = vadd.f32 0.0, %v329
      %331 = vmatmul.f32.gmra.mxu0 %v223
      %v332 = vpop.f32.mrf.mxu0
      %v333 = vadd.f32 0.0, %v332
      %334 = vmatmul.f32.gmra.mxu0 %v224
      %v335 = vpop.f32.mrf.mxu0
      %v336 = vadd.f32 0.0, %v335
      %337 = vmatmul.f32.gmra.mxu0 %v225
      %v338 = vpop.f32.mrf.mxu0
      %v339 = vadd.f32 0.0, %v338
      %340 = vmatmul.f32.gmra.mxu0 %v226
      %v341 = vpop.f32.mrf.mxu0
      %v342 = vadd.f32 0.0, %v341
      %343 = vmatmul.f32.gmra.mxu0 %v227
      %v344 = vpop.f32.mrf.mxu0
      %v345 = vadd.f32 0.0, %v344
      %346 = vmatmul.f32.gmra.mxu0 %v228
      %v347 = vpop.f32.mrf.mxu0
      %v348 = vadd.f32 0.0, %v347
      %349 = vmatmul.f32.gmra.mxu0 %v229
      %v350 = vpop.f32.mrf.mxu0
      %v351 = vadd.f32 0.0, %v350
      %352 = vmatmul.f32.gmra.mxu0 %v230
      %v353 = vpop.f32.mrf.mxu0
      %v354 = vadd.f32 0.0, %v353
      %355 = vmatmul.f32.gmra.mxu0 %v231
      %v356 = vpop.f32.mrf.mxu0
      %v357 = vadd.f32 0.0, %v356
      %358 = vmatmul.f32.gmra.mxu0 %v232
      %v359 = vpop.f32.mrf.mxu0
      %v360 = vadd.f32 0.0, %v359
      %361 = vdwg.mxu0
      %v362 = vld [vmem:[%s2] sm:$0x1]
      %v364 = vperm.slane %v362, 0
      %v366 = vmul.f32 %v267, %v364
      %v367 = vmul.f32 %v270, %v364
      %v368 = vmul.f32 %v273, %v364
      %v369 = vmul.f32 %v276, %v364
      %v370 = vmul.f32 %v279, %v364
      %v371 = vmul.f32 %v282, %v364
      %v372 = vmul.f32 %v285, %v364
      %v373 = vmul.f32 %v288, %v364
      %v374 = vmul.f32 %v291, %v364
      %v375 = vmul.f32 %v294, %v364
      %v376 = vmul.f32 %v297, %v364
      %v377 = vmul.f32 %v300, %v364
      %v378 = vmul.f32 %v303, %v364
      %v379 = vmul.f32 %v306, %v364
      %v380 = vmul.f32 %v309, %v364
      %v381 = vmul.f32 %v312, %v364
      %v382 = vmul.f32 %v315, %v364
      %v383 = vmul.f32 %v318, %v364
      %v384 = vmul.f32 %v321, %v364
      %v385 = vmul.f32 %v324, %v364
      %v386 = vmul.f32 %v327, %v364
      %v387 = vmul.f32 %v330, %v364
      %v388 = vmul.f32 %v333, %v364
      %v389 = vmul.f32 %v336, %v364
      %v390 = vmul.f32 %v339, %v364
      %v391 = vmul.f32 %v342, %v364
      %v392 = vmul.f32 %v345, %v364
      %v393 = vmul.f32 %v348, %v364
      %v394 = vmul.f32 %v351, %v364
      %v395 = vmul.f32 %v354, %v364
      %v396 = vmul.f32 %v357, %v364
      %v397 = vmul.f32 %v360, %v364
      %v398 = vld [vmem:[%s3] sm:$0x1]
      %v400 = vperm.slane %v398, 0
      %v402 = vadd.f32 %v366, %v400
      %v403 = vadd.f32 %v367, %v400
      %v404 = vadd.f32 %v368, %v400
      %v405 = vadd.f32 %v369, %v400
      %v406 = vadd.f32 %v370, %v400
      %v407 = vadd.f32 %v371, %v400
      %v408 = vadd.f32 %v372, %v400
      %v409 = vadd.f32 %v373, %v400
      %v410 = vadd.f32 %v374, %v400
      %v411 = vadd.f32 %v375, %v400
      %v412 = vadd.f32 %v376, %v400
      %v413 = vadd.f32 %v377, %v400
      %v414 = vadd.f32 %v378, %v400
      %v415 = vadd.f32 %v379, %v400
      %v416 = vadd.f32 %v380, %v400
      %v417 = vadd.f32 %v381, %v400
      %v418 = vadd.f32 %v382, %v400
      %v419 = vadd.f32 %v383, %v400
      %v420 = vadd.f32 %v384, %v400
      %v421 = vadd.f32 %v385, %v400
      %v422 = vadd.f32 %v386, %v400
      %v423 = vadd.f32 %v387, %v400
      %v424 = vadd.f32 %v388, %v400
      %v425 = vadd.f32 %v389, %v400
      %v426 = vadd.f32 %v390, %v400
      %v427 = vadd.f32 %v391, %v400
      %v428 = vadd.f32 %v392, %v400
      %v429 = vadd.f32 %v393, %v400
      %v430 = vadd.f32 %v394, %v400
      %v431 = vadd.f32 %v395, %v400
      %v432 = vadd.f32 %v396, %v400
      %v433 = vadd.f32 %v397, %v400
      %vm434 = vcmp.gt.f32.partialorder %v402, 0.0
      %vm435 = vcmp.gt.f32.partialorder %v403, 0.0
      %vm436 = vcmp.gt.f32.partialorder %v404, 0.0
      %vm437 = vcmp.gt.f32.partialorder %v405, 0.0
      %vm438 = vcmp.gt.f32.partialorder %v406, 0.0
      %vm439 = vcmp.gt.f32.partialorder %v407, 0.0
      %vm440 = vcmp.gt.f32.partialorder %v408, 0.0
      %vm441 = vcmp.gt.f32.partialorder %v409, 0.0
      %vm442 = vcmp.gt.f32.partialorder %v410, 0.0
      %vm443 = vcmp.gt.f32.partialorder %v411, 0.0
      %vm444 = vcmp.gt.f32.partialorder %v412, 0.0
      %vm445 = vcmp.gt.f32.partialorder %v413, 0.0
      %vm446 = vcmp.gt.f32.partialorder %v414, 0.0
      %vm447 = vcmp.gt.f32.partialorder %v415, 0.0
      %vm448 = vcmp.gt.f32.partialorder %v416, 0.0
      %vm449 = vcmp.gt.f32.partialorder %v417, 0.0
      %vm450 = vcmp.gt.f32.partialorder %v418, 0.0
      %vm451 = vcmp.gt.f32.partialorder %v419, 0.0
      %vm452 = vcmp.gt.f32.partialorder %v420, 0.0
      %vm453 = vcmp.gt.f32.partialorder %v421, 0.0
      %vm454 = vcmp.gt.f32.partialorder %v422, 0.0
      %vm455 = vcmp.gt.f32.partialorder %v423, 0.0
      %vm456 = vcmp.gt.f32.partialorder %v424, 0.0
      %vm457 = vcmp.gt.f32.partialorder %v425, 0.0
      %vm458 = vcmp.gt.f32.partialorder %v426, 0.0
      %vm459 = vcmp.gt.f32.partialorder %v427, 0.0
      %vm460 = vcmp.gt.f32.partialorder %v428, 0.0
      %vm461 = vcmp.gt.f32.partialorder %v429, 0.0
      %vm462 = vcmp.gt.f32.partialorder %v430, 0.0
      %vm463 = vcmp.gt.f32.partialorder %v431, 0.0
      %vm464 = vcmp.gt.f32.partialorder %v432, 0.0
      %vm465 = vcmp.gt.f32.partialorder %v433, 0.0
      %v466 = vmul.f32 %v402, 0.1
      %v467 = vmul.f32 %v403, 0.1
      %v468 = vmul.f32 %v404, 0.1
      %v469 = vmul.f32 %v405, 0.1
      %v470 = vmul.f32 %v406, 0.1
      %v471 = vmul.f32 %v407, 0.1
      %v472 = vmul.f32 %v408, 0.1
      %v473 = vmul.f32 %v409, 0.1
      %v474 = vmul.f32 %v410, 0.1
      %v475 = vmul.f32 %v411, 0.1
      %v476 = vmul.f32 %v412, 0.1
      %v477 = vmul.f32 %v413, 0.1
      %v478 = vmul.f32 %v414, 0.1
      %v479 = vmul.f32 %v415, 0.1
      %v480 = vmul.f32 %v416, 0.1
      %v481 = vmul.f32 %v417, 0.1
      %v482 = vmul.f32 %v418, 0.1
      %v483 = vmul.f32 %v419, 0.1
      %v484 = vmul.f32 %v420, 0.1
      %v485 = vmul.f32 %v421, 0.1
      %v486 = vmul.f32 %v422, 0.1
      %v487 = vmul.f32 %v423, 0.1
      %v488 = vmul.f32 %v424, 0.1
      %v489 = vmul.f32 %v425, 0.1
      %v490 = vmul.f32 %v426, 0.1
      %v491 = vmul.f32 %v427, 0.1
      %v492 = vmul.f32 %v428, 0.1
      %v493 = vmul.f32 %v429, 0.1
      %v494 = vmul.f32 %v430, 0.1
      %v495 = vmul.f32 %v431, 0.1
      %v496 = vmul.f32 %v432, 0.1
      %v497 = vmul.f32 %v433, 0.1
      %v498 = vsel %vm434, %v402, %v466
      %v499 = vsel %vm435, %v403, %v467
      %v500 = vsel %vm436, %v404, %v468
      %v501 = vsel %vm437, %v405, %v469
      %v502 = vsel %vm438, %v406, %v470
      %v503 = vsel %vm439, %v407, %v471
      %v504 = vsel %vm440, %v408, %v472
      %v505 = vsel %vm441, %v409, %v473
      %v506 = vsel %vm442, %v410, %v474
      %v507 = vsel %vm443, %v411, %v475
      %v508 = vsel %vm444, %v412, %v476
      %v509 = vsel %vm445, %v413, %v477
      %v510 = vsel %vm446, %v414, %v478
      %v511 = vsel %vm447, %v415, %v479
      %v512 = vsel %vm448, %v416, %v480
      %v513 = vsel %vm449, %v417, %v481
      %v514 = vsel %vm450, %v418, %v482
      %v515 = vsel %vm451, %v419, %v483
      %v516 = vsel %vm452, %v420, %v484
      %v517 = vsel %vm453, %v421, %v485
      %v518 = vsel %vm454, %v422, %v486
      %v519 = vsel %vm455, %v423, %v487
      %v520 = vsel %vm456, %v424, %v488
      %v521 = vsel %vm457, %v425, %v489
      %v522 = vsel %vm458, %v426, %v490
      %v523 = vsel %vm459, %v427, %v491
      %v524 = vsel %vm460, %v428, %v492
      %v525 = vsel %vm461, %v429, %v493
      %v526 = vsel %vm462, %v430, %v494
      %v527 = vsel %vm463, %v431, %v495
      %v528 = vsel %vm464, %v432, %v496
      %v529 = vsel %vm465, %v433, %v497
      %530 = vst [vmem:[%s199] sm:$0xff] %v498
      %531 = vst [vmem:[%s199 + $0x8] sm:$0xff] %v499
      %532 = vst [vmem:[%s199 + $0x10] sm:$0xff] %v500
      %533 = vst [vmem:[%s199 + $0x18] sm:$0xff] %v501
      %534 = vst [vmem:[%s199 + $0x20] sm:$0xff] %v502
      %535 = vst [vmem:[%s199 + $0x28] sm:$0xff] %v503
      %536 = vst [vmem:[%s199 + $0x30] sm:$0xff] %v504
      %537 = vst [vmem:[%s199 + $0x38] sm:$0xff] %v505
      %538 = vst [vmem:[%s199 + $0x40] sm:$0xff] %v506
      %539 = vst [vmem:[%s199 + $0x48] sm:$0xff] %v507
      %540 = vst [vmem:[%s199 + $0x50] sm:$0xff] %v508
      %541 = vst [vmem:[%s199 + $0x58] sm:$0xff] %v509
      %542 = vst [vmem:[%s199 + $0x60] sm:$0xff] %v510
      %543 = vst [vmem:[%s199 + $0x68] sm:$0xff] %v511
      %544 = vst [vmem:[%s199 + $0x70] sm:$0xff] %v512
      %545 = vst [vmem:[%s199 + $0x78] sm:$0xff] %v513
      %546 = vst [vmem:[%s199 + $0x80] sm:$0xff] %v514
      %547 = vst [vmem:[%s199 + $0x88] sm:$0xff] %v515
      %548 = vst [vmem:[%s199 + $0x90] sm:$0xff] %v516
      %549 = vst [vmem:[%s199 + $0x98] sm:$0xff] %v517
      %550 = vst [vmem:[%s199 + $0xa0] sm:$0xff] %v518
      %551 = vst [vmem:[%s199 + $0xa8] sm:$0xff] %v519
      %552 = vst [vmem:[%s199 + $0xb0] sm:$0xff] %v520
      %553 = vst [vmem:[%s199 + $0xb8] sm:$0xff] %v521
      %554 = vst [vmem:[%s199 + $0xc0] sm:$0xff] %v522
      %555 = vst [vmem:[%s199 + $0xc8] sm:$0xff] %v523
      %556 = vst [vmem:[%s199 + $0xd0] sm:$0xff] %v524
      %557 = vst [vmem:[%s199 + $0xd8] sm:$0xff] %v525
      %558 = vst [vmem:[%s199 + $0xe0] sm:$0xff] %v526
      %559 = vst [vmem:[%s199 + $0xe8] sm:$0xff] %v527
      %560 = vst [vmem:[%s199 + $0xf0] sm:$0xff] %v528
      %561 = vst [vmem:[%s199 + $0xf8] sm:$0xff] %v529
      %s562 = smul.u32 32, %s15
      %p563 = scmp.lt.s32.totalorder %s562, 63
      %s564 = scalar_select %p563, %s562, 63
      %s565 = smul.addr %s564, 8
      %s566 = scalar_lea.vmem %s4, %s565
      // Predicated region
      $region37: #{_lambda_.14} parent=35 // pred_check
        %p567 = pneg %p122
      $region38: #{_lambda_.14} parent=35 // pred_check_branch
        %569 = sbr.rel (%p567) target = $region40
      $region39: #{_lambda_.14} parent=35 // pred_region
        %s570 = smul.u32 32, %s15
      $region40: #{_lambda_.14} parent=35 // pred_fallthru
        _
    $region36: #{_lambda_.14} parent=5 // pred_fallthru
      _
    %p571 = scmp.le.s32.totalorder 2, %s10
    // Predicated region
    $region41: #{_lambda_.14} parent=5 // pred_check
      %p572 = pneg %p571
    $region42: #{_lambda_.14} parent=5 // pred_check_branch
      %574 = sbr.rel (%p572) target = $region44
    $region43: #{_lambda_.14} parent=5 // pred_region
      %s575 = ssub.s32 %s10, 2
      // Predicated region
      $region45: #{_lambda_.14} parent=43 // pred_check
        %p576 = pneg %p128
      $region46: #{_lambda_.14} parent=43 // pred_check_branch
        %578 = sbr.rel (%p576) target = $region48
      $region47: #{_lambda_.14} parent=43 // pred_region
        %s579 = smul.u32 32, %s16
        %p580 = scmp.lt.s32.totalorder %s579, 63
        %s581 = scalar_select %p580, %s579, 63
        %s582 = smul.addr %s581, 8
        %s583 = scalar_lea.vmem %s4, %s582
      $region48: #{_lambda_.14} parent=43 // pred_fallthru
        _
    $region44: #{_lambda_.14} parent=5 // pred_fallthru
      _
  $region6: #{_lambda_.14} parent=0 // loop_footer
    %s14 = sadd.s32 1, %s10
  $region7: #{_lambda_.14} parent=0 // loop_footer_branch
    %9 = sbr.rel target = $region3
  $region8: #{_lambda_.14} parent=0 // loop_exit
    _

// kernel: _lambda_.16
$region0: #{_lambda_.16}
  #allocation0 [shape = 'u32[]', space=smem, size = 0x4, offset = 0x4, fixed_abs, tag = 'smem constant byte address 0x4 - core index']
  #allocation1 [shape = 'u32[72,128]{1,0:T(1,128)}', space=vmem, size = 0x9000, scoped, tag = 'internal scratch']
  %s0 = inlined_call_operand.vmem [shape: f32[512,128], index: 0, kind: input, shape index: {}]
  %s1 = inlined_call_operand.vmem [shape: f32[512,128], index: 1, kind: input, shape index: {}]
  %s2 = inlined_call_operand.vmem [shape: f32[512,128], index: 2, kind: output, shape index: {}]
  %s3 = sld [smem:[#allocation0]]
  $region41: #{_lambda_.16} parent=0
    _
  %s5 = ssub.s32 1, %s3
  %s6 = scalar_select 0, %s5, %s3
  loop: start=0, step=1, limit=4
  $region2: #{_lambda_.16} parent=0 // loop_pre_header
    _
  $region3: #{_lambda_.16} parent=0 // loop_header
    %s8 = sphi 0, %s12
    %p9 = scmp.ge.s32.totalorder %s8, 4
    %s18 = sphi 0, %s20
    %s21 = sphi 0, %s18
    %s22 = sphi 0, %s21
    %s38 = sphi 0, %s22
    %s44 = sphi 0, %s46
    %s47 = sphi 0, %s44
    %s48 = sphi 0, %s47
    %s64 = sphi 0, %s48
    %s70 = sphi 0, %s72
    %s73 = sphi 0, %s70
    %s74 = sphi 0, %s73
    %s90 = sphi 0, %s74
  $region4: #{_lambda_.16} parent=0 // loop_header_branch
    %11 = sbr.rel (%p9) target = $region8
  $region5: #{_lambda_.16} parent=0 // loop_body
    %s13 = ssub.s32 %s8, 1
    %s14 = ssub.s32 %s8, 2
    %s15 = sadd.s32 %s8, 1
    %s16 = ssub.s32 %s8, %s15
    %p17 = scmp.eq.s32.totalorder %s16, 0
    %s19 = sadd.s32 %s18, 1
    %s20 = scalar_select %p17, %s18, %s19
    %p23 = pneg %p17
    %p24 = scmp.eq.s32.totalorder %s8, 1
    %p25 = por %p23, %p24
    %p26 = scmp.ne.s32.totalorder %s18, %s21
    %p27 = scmp.eq.s32.totalorder %s8, 0
    %p28 = por %p26, %p27
    %p29 = scmp.ne.s32.totalorder %s18, %s21
    %p30 = scmp.eq.s32.totalorder %s13, 1
    %p31 = por %p29, %p30
    %p32 = scmp.ne.s32.totalorder %s21, %s22
    %p33 = scmp.eq.s32.totalorder %s13, 0
    %p34 = por %p32, %p33
    %p35 = scmp.ne.s32.totalorder %s21, %s22
    %p36 = scmp.eq.s32.totalorder %s14, 1
    %p37 = por %p35, %p36
    %p39 = scmp.ne.s32.totalorder %s22, %s38
    %p40 = scmp.eq.s32.totalorder %s14, 0
    %p41 = por %p39, %p40
    %s42 = ssub.s32 %s8, %s15
    %p43 = scmp.eq.s32.totalorder %s42, 0
    %s45 = sadd.s32 %s44, 1
    %s46 = scalar_select %p43, %s44, %s45
    %p49 = pneg %p43
    %p50 = scmp.eq.s32.totalorder %s8, 1
    %p51 = por %p49, %p50
    %p52 = scmp.ne.s32.totalorder %s44, %s47
    %p53 = scmp.eq.s32.totalorder %s8, 0
    %p54 = por %p52, %p53
    %p55 = scmp.ne.s32.totalorder %s44, %s47
    %p56 = scmp.eq.s32.totalorder %s13, 1
    %p57 = por %p55, %p56
    %p58 = scmp.ne.s32.totalorder %s47, %s48
    %p59 = scmp.eq.s32.totalorder %s13, 0
    %p60 = por %p58, %p59
    %p61 = scmp.ne.s32.totalorder %s47, %s48
    %p62 = scmp.eq.s32.totalorder %s14, 1
    %p63 = por %p61, %p62
    %p65 = scmp.ne.s32.totalorder %s48, %s64
    %p66 = scmp.eq.s32.totalorder %s14, 0
    %p67 = por %p65, %p66
    %s68 = ssub.s32 %s8, %s15
    %p69 = scmp.eq.s32.totalorder %s68, 0
    %s71 = sadd.s32 %s70, 1
    %s72 = scalar_select %p69, %s70, %s71
    %p75 = pneg %p69
    %p76 = scmp.eq.s32.totalorder %s8, 1
    %p77 = por %p75, %p76
    %p78 = scmp.ne.s32.totalorder %s70, %s73
    %p79 = scmp.eq.s32.totalorder %s8, 0
    %p80 = por %p78, %p79
    %p81 = scmp.ne.s32.totalorder %s70, %s73
    %p82 = scmp.eq.s32.totalorder %s13, 1
    %p83 = por %p81, %p82
    %p84 = scmp.ne.s32.totalorder %s73, %s74
    %p85 = scmp.eq.s32.totalorder %s13, 0
    %p86 = por %p84, %p85
    %p87 = scmp.ne.s32.totalorder %s73, %s74
    %p88 = scmp.eq.s32.totalorder %s14, 1
    %p89 = por %p87, %p88
    %p91 = scmp.ne.s32.totalorder %s74, %s90
    %p92 = scmp.eq.s32.totalorder %s14, 0
    %p93 = por %p91, %p92
    %p94 = scmp.le.s32.totalorder 1, %s8
    %p95 = scmp.lt.s32.totalorder %s8, 3
    %p96 = pnand %p94, %p95
    %p97 = pneg %p96
    // Predicated region
    $region9: #{_lambda_.16} parent=5 // pred_check
      _
    $region10: #{_lambda_.16} parent=5 // pred_check_branch
      %99 = sbr.rel (%p96) target = $region12
    $region11: #{_lambda_.16} parent=5 // pred_region
      %s100 = ssub.s32 %s8, 1
    $region12: #{_lambda_.16} parent=5 // pred_fallthru
      _
    %p101 = scmp.lt.s32.totalorder %s8, 2
    // Predicated region
    $region13: #{_lambda_.16} parent=5 // pred_check
      %p102 = pneg %p101
    $region14: #{_lambda_.16} parent=5 // pred_check_branch
      %104 = sbr.rel (%p102) target = $region16
    $region15: #{_lambda_.16} parent=5 // pred_region
      // Predicated region
      $region17: #{_lambda_.16} parent=15 // pred_check
        %p105 = pneg %p28
      $region18: #{_lambda_.16} parent=15 // pred_check_branch
        %107 = sbr.rel (%p105) target = $region20
      $region19: #{_lambda_.16} parent=15 // pred_region
        %s108 = smul.u32 32, %s8
        %p109 = scmp.lt.s32.totalorder %s108, 63
        %s110 = scalar_select %p109, %s108, 63
        %s111 = smul.addr %s110, 8
        %s112 = scalar_lea.vmem %s0, %s111
        %s113 = smul.u32 32, %s8
      $region20: #{_lambda_.16} parent=15 // pred_fallthru
        _
      // Predicated region
      $region21: #{_lambda_.16} parent=15 // pred_check
        %p114 = pneg %p54
      $region22: #{_lambda_.16} parent=15 // pred_check_branch
        %116 = sbr.rel (%p114) target = $region24
      $region23: #{_lambda_.16} parent=15 // pred_region
        %s117 = smul.u32 32, %s8
        %p118 = scmp.lt.s32.totalorder %s117, 63
        %s119 = scalar_select %p118, %s117, 63
        %s120 = smul.addr %s119, 8
        %s121 = scalar_lea.vmem %s1, %s120
        %s122 = smul.u32 32, %s8
      $region24: #{_lambda_.16} parent=15 // pred_fallthru
        _
    $region16: #{_lambda_.16} parent=5 // pred_fallthru
      _
    %p123 = scmp.le.s32.totalorder 1, %s8
    %p124 = scmp.lt.s32.totalorder %s8, 3
    %p125 = pnand %p123, %p124
    %p126 = pneg %p125
    // Predicated region
    $region25: #{_lambda_.16} parent=5 // pred_check
      _
    $region26: #{_lambda_.16} parent=5 // pred_check_branch
      %128 = sbr.rel (%p125) target = $region28
    $region27: #{_lambda_.16} parent=5 // pred_region
      %s129 = ssub.s32 %s8, 1
      %s130 = smul.u32 32, %s13
      %p131 = scmp.lt.s32.totalorder %s130, 63
      %s132 = scalar_select %p131, %s130, 63
      %s133 = smul.addr %s132, 8
      %s134 = scalar_lea.vmem %s0, %s133
      %p135 = pneg %p34
      %p136 = pneg %p31
      %s137 = smul.u32 32, %s13
      %p138 = scmp.lt.s32.totalorder %s137, 63
      %s139 = scalar_select %p138, %s137, 63
      %s140 = smul.addr %s139, 8
      %s141 = scalar_lea.vmem %s1, %s140
      %p142 = pneg %p60
      %p143 = pneg %p57
      %p144 = pneg %p86
      %p145 = pneg %p83
      %s146 = smul.u32 32, %s13
      %p147 = scmp.lt.s32.totalorder %s146, 63
      %s148 = scalar_select %p147, %s146, 63
      %s149 = smul.addr %s148, 8
      %s150 = scalar_lea.vmem %s2, %s149
      %s151 = smul.u32 32, %s13
      %p152 = scmp.lt.s32.totalorder %s151, 63
      %s153 = scalar_select %p152, %s151, 63
      %s154 = smul.addr %s153, 8
      %s155 = scalar_lea.vmem %s0, %s154
      %s156 = smul.u32 32, %s13
      %s157 = smul.u32 32, %s13
      %p158 = scmp.lt.s32.totalorder %s157, 63
      %s159 = scalar_select %p158, %s157, 63
      %s160 = smul.addr %s159, 8
      %s161 = scalar_lea.vmem %s1, %s160
      %s162 = smul.u32 32, %s13
      %s163 = smul.u32 32, %s13
      %p164 = scmp.lt.s32.totalorder %s163, 63
      %s165 = scalar_select %p164, %s163, 63
      %s166 = smul.addr %s165, 8
      %s167 = scalar_lea.vmem %s2, %s166
      %s168 = smul.u32 32, %s13
      %v169 = vld [vmem:[%s155] sm:$0xff]
      %v170 = vld [vmem:[%s155 + $0x8] sm:$0xff]
      %v171 = vld [vmem:[%s155 + $0x10] sm:$0xff]
      %v172 = vld [vmem:[%s155 + $0x18] sm:$0xff]
      %v173 = vld [vmem:[%s155 + $0x20] sm:$0xff]
      %v174 = vld [vmem:[%s155 + $0x28] sm:$0xff]
      %v175 = vld [vmem:[%s155 + $0x30] sm:$0xff]
      %v176 = vld [vmem:[%s155 + $0x38] sm:$0xff]
      %v177 = vld [vmem:[%s155 + $0x40] sm:$0xff]
      %v178 = vld [vmem:[%s155 + $0x48] sm:$0xff]
      %v179 = vld [vmem:[%s155 + $0x50] sm:$0xff]
      %v180 = vld [vmem:[%s155 + $0x58] sm:$0xff]
      %v181 = vld [vmem:[%s155 + $0x60] sm:$0xff]
      %v182 = vld [vmem:[%s155 + $0x68] sm:$0xff]
      %v183 = vld [vmem:[%s155 + $0x70] sm:$0xff]
      %v184 = vld [vmem:[%s155 + $0x78] sm:$0xff]
      %v185 = vld [vmem:[%s155 + $0x80] sm:$0xff]
      %v186 = vld [vmem:[%s155 + $0x88] sm:$0xff]
      %v187 = vld [vmem:[%s155 + $0x90] sm:$0xff]
      %v188 = vld [vmem:[%s155 + $0x98] sm:$0xff]
      %v189 = vld [vmem:[%s155 + $0xa0] sm:$0xff]
      %v190 = vld [vmem:[%s155 + $0xa8] sm:$0xff]
      %v191 = vld [vmem:[%s155 + $0xb0] sm:$0xff]
      %v192 = vld [vmem:[%s155 + $0xb8] sm:$0xff]
      %v193 = vld [vmem:[%s155 + $0xc0] sm:$0xff]
      %v194 = vld [vmem:[%s155 + $0xc8] sm:$0xff]
      %v195 = vld [vmem:[%s155 + $0xd0] sm:$0xff]
      %v196 = vld [vmem:[%s155 + $0xd8] sm:$0xff]
      %v197 = vld [vmem:[%s155 + $0xe0] sm:$0xff]
      %v198 = vld [vmem:[%s155 + $0xe8] sm:$0xff]
      %v199 = vld [vmem:[%s155 + $0xf0] sm:$0xff]
      %v200 = vld [vmem:[%s155 + $0xf8] sm:$0xff]
      %v201 = vld [vmem:[%s161] sm:$0xff]
      %v202 = vld [vmem:[%s161 + $0x8] sm:$0xff]
      %v203 = vld [vmem:[%s161 + $0x10] sm:$0xff]
      %v204 = vld [vmem:[%s161 + $0x18] sm:$0xff]
      %v205 = vld [vmem:[%s161 + $0x20] sm:$0xff]
      %v206 = vld [vmem:[%s161 + $0x28] sm:$0xff]
      %v207 = vld [vmem:[%s161 + $0x30] sm:$0xff]
      %v208 = vld [vmem:[%s161 + $0x38] sm:$0xff]
      %v209 = vld [vmem:[%s161 + $0x40] sm:$0xff]
      %v210 = vld [vmem:[%s161 + $0x48] sm:$0xff]
      %v211 = vld [vmem:[%s161 + $0x50] sm:$0xff]
      %v212 = vld [vmem:[%s161 + $0x58] sm:$0xff]
      %v213 = vld [vmem:[%s161 + $0x60] sm:$0xff]
      %v214 = vld [vmem:[%s161 + $0x68] sm:$0xff]
      %v215 = vld [vmem:[%s161 + $0x70] sm:$0xff]
      %v216 = vld [vmem:[%s161 + $0x78] sm:$0xff]
      %v217 = vld [vmem:[%s161 + $0x80] sm:$0xff]
      %v218 = vld [vmem:[%s161 + $0x88] sm:$0xff]
      %v219 = vld [vmem:[%s161 + $0x90] sm:$0xff]
      %v220 = vld [vmem:[%s161 + $0x98] sm:$0xff]
      %v221 = vld [vmem:[%s161 + $0xa0] sm:$0xff]
      %v222 = vld [vmem:[%s161 + $0xa8] sm:$0xff]
      %v223 = vld [vmem:[%s161 + $0xb0] sm:$0xff]
      %v224 = vld [vmem:[%s161 + $0xb8] sm:$0xff]
      %v225 = vld [vmem:[%s161 + $0xc0] sm:$0xff]
      %v226 = vld [vmem:[%s161 + $0xc8] sm:$0xff]
      %v227 = vld [vmem:[%s161 + $0xd0] sm:$0xff]
      %v228 = vld [vmem:[%s161 + $0xd8] sm:$0xff]
      %v229 = vld [vmem:[%s161 + $0xe0] sm:$0xff]
      %v230 = vld [vmem:[%s161 + $0xe8] sm:$0xff]
      %v231 = vld [vmem:[%s161 + $0xf0] sm:$0xff]
      %v232 = vld [vmem:[%s161 + $0xf8] sm:$0xff]
      %v233 = vadd.f32 %v169, %v201
      %v234 = vadd.f32 %v170, %v202
      %v235 = vadd.f32 %v171, %v203
      %v236 = vadd.f32 %v172, %v204
      %v237 = vadd.f32 %v173, %v205
      %v238 = vadd.f32 %v174, %v206
      %v239 = vadd.f32 %v175, %v207
      %v240 = vadd.f32 %v176, %v208
      %v241 = vadd.f32 %v177, %v209
      %v242 = vadd.f32 %v178, %v210
      %v243 = vadd.f32 %v179, %v211
      %v244 = vadd.f32 %v180, %v212
      %v245 = vadd.f32 %v181, %v213
      %v246 = vadd.f32 %v182, %v214
      %v247 = vadd.f32 %v183, %v215
      %v248 = vadd.f32 %v184, %v216
      %v249 = vadd.f32 %v185, %v217
      %v250 = vadd.f32 %v186, %v218
      %v251 = vadd.f32 %v187, %v219
      %v252 = vadd.f32 %v188, %v220
      %v253 = vadd.f32 %v189, %v221
      %v254 = vadd.f32 %v190, %v222
      %v255 = vadd.f32 %v191, %v223
      %v256 = vadd.f32 %v192, %v224
      %v257 = vadd.f32 %v193, %v225
      %v258 = vadd.f32 %v194, %v226
      %v259 = vadd.f32 %v195, %v227
      %v260 = vadd.f32 %v196, %v228
      %v261 = vadd.f32 %v197, %v229
      %v262 = vadd.f32 %v198, %v230
      %v263 = vadd.f32 %v199, %v231
      %v264 = vadd.f32 %v200, %v232
      %265 = vst [vmem:[%s167] sm:$0xff] %v233
      %266 = vst [vmem:[%s167 + $0x8] sm:$0xff] %v234
      %267 = vst [vmem:[%s167 + $0x10] sm:$0xff] %v235
      %268 = vst [vmem:[%s167 + $0x18] sm:$0xff] %v236
      %269 = vst [vmem:[%s167 + $0x20] sm:$0xff] %v237
      %270 = vst [vmem:[%s167 + $0x28] sm:$0xff] %v238
      %271 = vst [vmem:[%s167 + $0x30] sm:$0xff] %v239
      %272 = vst [vmem:[%s167 + $0x38] sm:$0xff] %v240
      %273 = vst [vmem:[%s167 + $0x40] sm:$0xff] %v241
      %274 = vst [vmem:[%s167 + $0x48] sm:$0xff] %v242
      %275 = vst [vmem:[%s167 + $0x50] sm:$0xff] %v243
      %276 = vst [vmem:[%s167 + $0x58] sm:$0xff] %v244
      %277 = vst [vmem:[%s167 + $0x60] sm:$0xff] %v245
      %278 = vst [vmem:[%s167 + $0x68] sm:$0xff] %v246
      %279 = vst [vmem:[%s167 + $0x70] sm:$0xff] %v247
      %280 = vst [vmem:[%s167 + $0x78] sm:$0xff] %v248
      %281 = vst [vmem:[%s167 + $0x80] sm:$0xff] %v249
      %282 = vst [vmem:[%s167 + $0x88] sm:$0xff] %v250
      %283 = vst [vmem:[%s167 + $0x90] sm:$0xff] %v251
      %284 = vst [vmem:[%s167 + $0x98] sm:$0xff] %v252
      %285 = vst [vmem:[%s167 + $0xa0] sm:$0xff] %v253
      %286 = vst [vmem:[%s167 + $0xa8] sm:$0xff] %v254
      %287 = vst [vmem:[%s167 + $0xb0] sm:$0xff] %v255
      %288 = vst [vmem:[%s167 + $0xb8] sm:$0xff] %v256
      %289 = vst [vmem:[%s167 + $0xc0] sm:$0xff] %v257
      %290 = vst [vmem:[%s167 + $0xc8] sm:$0xff] %v258
      %291 = vst [vmem:[%s167 + $0xd0] sm:$0xff] %v259
      %292 = vst [vmem:[%s167 + $0xd8] sm:$0xff] %v260
      %293 = vst [vmem:[%s167 + $0xe0] sm:$0xff] %v261
      %294 = vst [vmem:[%s167 + $0xe8] sm:$0xff] %v262
      %295 = vst [vmem:[%s167 + $0xf0] sm:$0xff] %v263
      %296 = vst [vmem:[%s167 + $0xf8] sm:$0xff] %v264
      %s297 = smul.u32 32, %s13
      %p298 = scmp.lt.s32.totalorder %s297, 63
      %s299 = scalar_select %p298, %s297, 63
      %s300 = smul.addr %s299, 8
      %s301 = scalar_lea.vmem %s2, %s300
      // Predicated region
      $region29: #{_lambda_.16} parent=27 // pred_check
        %p302 = pneg %p83
      $region30: #{_lambda_.16} parent=27 // pred_check_branch
        %304 = sbr.rel (%p302) target = $region32
      $region31: #{_lambda_.16} parent=27 // pred_region
        %s305 = smul.u32 32, %s13
      $region32: #{_lambda_.16} parent=27 // pred_fallthru
        _
    $region28: #{_lambda_.16} parent=5 // pred_fallthru
      _
    %p306 = scmp.le.s32.totalorder 2, %s8
    // Predicated region
    $region33: #{_lambda_.16} parent=5 // pred_check
      %p307 = pneg %p306
    $region34: #{_lambda_.16} parent=5 // pred_check_branch
      %309 = sbr.rel (%p307) target = $region36
    $region35: #{_lambda_.16} parent=5 // pred_region
      %s310 = ssub.s32 %s8, 2
      // Predicated region
      $region37: #{_lambda_.16} parent=35 // pred_check
        %p311 = pneg %p89
      $region38: #{_lambda_.16} parent=35 // pred_check_branch
        %313 = sbr.rel (%p311) target = $region40
      $region39: #{_lambda_.16} parent=35 // pred_region
        %s314 = smul.u32 32, %s14
        %p315 = scmp.lt.s32.totalorder %s314, 63
        %s316 = scalar_select %p315, %s314, 63
        %s317 = smul.addr %s316, 8
        %s318 = scalar_lea.vmem %s2, %s317
      $region40: #{_lambda_.16} parent=35 // pred_fallthru
        _
    $region36: #{_lambda_.16} parent=5 // pred_fallthru
      _
  $region6: #{_lambda_.16} parent=0 // loop_footer
    %s12 = sadd.s32 1, %s8
  $region7: #{_lambda_.16} parent=0 // loop_footer_branch
    %7 = sbr.rel target = $region3
  $region8: #{_lambda_.16} parent=0 // loop_exit
    _

// kernel: _lambda_.17
$region0: #{_lambda_.17}
  #allocation0 [shape = 'u32[]', space=smem, size = 0x4, offset = 0x4, fixed_abs, tag = 'smem constant byte address 0x4 - core index']
  #allocation1 [shape = 'u32[72,128]{1,0:T(1,128)}', space=vmem, size = 0x9000, scoped, tag = 'internal scratch']
  %s0 = inlined_call_operand.vmem [shape: f32[128,128], index: 0, kind: input, shape index: {}]
  %s1 = inlined_call_operand.vmem [shape: f32[128,128], index: 1, kind: input, shape index: {}]
  %s2 = inlined_call_operand.vmem [shape: f32[128,128], index: 2, kind: input, shape index: {}]
  %s3 = inlined_call_operand.vmem [shape: f32[128,128], index: 3, kind: input, shape index: {}]
  %s4 = inlined_call_operand.vmem [shape: f32[128,128], index: 4, kind: output, shape index: {}]
  %s5 = sld [smem:[#allocation0]]
  $region26: #{_lambda_.17} parent=0
    _
  %s7 = ssub.s32 1, %s5
  %s8 = scalar_select 0, %s7, %s5
  // Predicated region
  $region2: #{_lambda_.17} parent=0 // pred_check
    _
  $region3: #{_lambda_.17} parent=0 // pred_check_branch
    %10 = sbr.rel (0) target = $region5
  $region4: #{_lambda_.17} parent=0 // pred_region
    _
  $region5: #{_lambda_.17} parent=0 // pred_fallthru
    _
  // Predicated region
  $region6: #{_lambda_.17} parent=0 // pred_check
    _
  $region7: #{_lambda_.17} parent=0 // pred_check_branch
    %12 = sbr.rel (0) target = $region9
  $region8: #{_lambda_.17} parent=0 // pred_region
    _
  $region9: #{_lambda_.17} parent=0 // pred_fallthru
    _
  // Predicated region
  $region10: #{_lambda_.17} parent=0 // pred_check
    _
  $region11: #{_lambda_.17} parent=0 // pred_check_branch
    %14 = sbr.rel (0) target = $region13
  $region12: #{_lambda_.17} parent=0 // pred_region
    _
  $region13: #{_lambda_.17} parent=0 // pred_fallthru
    _
  // Predicated region
  $region14: #{_lambda_.17} parent=0 // pred_check
    _
  $region15: #{_lambda_.17} parent=0 // pred_check_branch
    %16 = sbr.rel (0) target = $region17
  $region16: #{_lambda_.17} parent=0 // pred_region
    _
  $region17: #{_lambda_.17} parent=0 // pred_fallthru
    _
  %v17 = vld [vmem:[%s0] sm:$0xff]
  %v18 = vld [vmem:[%s0 + $0x8] sm:$0xff]
  %v19 = vld [vmem:[%s0 + $0x10] sm:$0xff]
  %v20 = vld [vmem:[%s0 + $0x18] sm:$0xff]
  %v21 = vld [vmem:[%s0 + $0x20] sm:$0xff]
  %v22 = vld [vmem:[%s0 + $0x28] sm:$0xff]
  %v23 = vld [vmem:[%s0 + $0x30] sm:$0xff]
  %v24 = vld [vmem:[%s0 + $0x38] sm:$0xff]
  %v25 = vld [vmem:[%s0 + $0x40] sm:$0xff]
  %v26 = vld [vmem:[%s0 + $0x48] sm:$0xff]
  %v27 = vld [vmem:[%s0 + $0x50] sm:$0xff]
  %v28 = vld [vmem:[%s0 + $0x58] sm:$0xff]
  %v29 = vld [vmem:[%s0 + $0x60] sm:$0xff]
  %v30 = vld [vmem:[%s0 + $0x68] sm:$0xff]
  %v31 = vld [vmem:[%s0 + $0x70] sm:$0xff]
  %v32 = vld [vmem:[%s0 + $0x78] sm:$0xff]
  %v33 = vld [vmem:[%s1] sm:$0xff]
  %v34 = vld [vmem:[%s1 + $0x8] sm:$0xff]
  %v35 = vld [vmem:[%s1 + $0x10] sm:$0xff]
  %v36 = vld [vmem:[%s1 + $0x18] sm:$0xff]
  %v37 = vld [vmem:[%s1 + $0x20] sm:$0xff]
  %v38 = vld [vmem:[%s1 + $0x28] sm:$0xff]
  %v39 = vld [vmem:[%s1 + $0x30] sm:$0xff]
  %v40 = vld [vmem:[%s1 + $0x38] sm:$0xff]
  %v41 = vld [vmem:[%s1 + $0x40] sm:$0xff]
  %v42 = vld [vmem:[%s1 + $0x48] sm:$0xff]
  %v43 = vld [vmem:[%s1 + $0x50] sm:$0xff]
  %v44 = vld [vmem:[%s1 + $0x58] sm:$0xff]
  %v45 = vld [vmem:[%s1 + $0x60] sm:$0xff]
  %v46 = vld [vmem:[%s1 + $0x68] sm:$0xff]
  %v47 = vld [vmem:[%s1 + $0x70] sm:$0xff]
  %v48 = vld [vmem:[%s1 + $0x78] sm:$0xff]
  %v49 = vmax.f32 %v17, %v33
  %v50 = vmax.f32 %v18, %v34
  %v51 = vmax.f32 %v19, %v35
  %v52 = vmax.f32 %v20, %v36
  %v53 = vmax.f32 %v21, %v37
  %v54 = vmax.f32 %v22, %v38
  %v55 = vmax.f32 %v23, %v39
  %v56 = vmax.f32 %v24, %v40
  %v57 = vmax.f32 %v25, %v41
  %v58 = vmax.f32 %v26, %v42
  %v59 = vmax.f32 %v27, %v43
  %v60 = vmax.f32 %v28, %v44
  %v61 = vmax.f32 %v29, %v45
  %v62 = vmax.f32 %v30, %v46
  %v63 = vmax.f32 %v31, %v47
  %v64 = vmax.f32 %v32, %v48
  %v65 = vld [vmem:[%s2] sm:$0xff]
  %v66 = vld [vmem:[%s2 + $0x8] sm:$0xff]
  %v67 = vld [vmem:[%s2 + $0x10] sm:$0xff]
  %v68 = vld [vmem:[%s2 + $0x18] sm:$0xff]
  %v69 = vld [vmem:[%s2 + $0x20] sm:$0xff]
  %v70 = vld [vmem:[%s2 + $0x28] sm:$0xff]
  %v71 = vld [vmem:[%s2 + $0x30] sm:$0xff]
  %v72 = vld [vmem:[%s2 + $0x38] sm:$0xff]
  %v73 = vld [vmem:[%s2 + $0x40] sm:$0xff]
  %v74 = vld [vmem:[%s2 + $0x48] sm:$0xff]
  %v75 = vld [vmem:[%s2 + $0x50] sm:$0xff]
  %v76 = vld [vmem:[%s2 + $0x58] sm:$0xff]
  %v77 = vld [vmem:[%s2 + $0x60] sm:$0xff]
  %v78 = vld [vmem:[%s2 + $0x68] sm:$0xff]
  %v79 = vld [vmem:[%s2 + $0x70] sm:$0xff]
  %v80 = vld [vmem:[%s2 + $0x78] sm:$0xff]
  %v81 = vmax.f32 %v49, %v65
  %v82 = vmax.f32 %v50, %v66
  %v83 = vmax.f32 %v51, %v67
  %v84 = vmax.f32 %v52, %v68
  %v85 = vmax.f32 %v53, %v69
  %v86 = vmax.f32 %v54, %v70
  %v87 = vmax.f32 %v55, %v71
  %v88 = vmax.f32 %v56, %v72
  %v89 = vmax.f32 %v57, %v73
  %v90 = vmax.f32 %v58, %v74
  %v91 = vmax.f32 %v59, %v75
  %v92 = vmax.f32 %v60, %v76
  %v93 = vmax.f32 %v61, %v77
  %v94 = vmax.f32 %v62, %v78
  %v95 = vmax.f32 %v63, %v79
  %v96 = vmax.f32 %v64, %v80
  %v97 = vld [vmem:[%s3] sm:$0xff]
  %v98 = vld [vmem:[%s3 + $0x8] sm:$0xff]
  %v99 = vld [vmem:[%s3 + $0x10] sm:$0xff]
  %v100 = vld [vmem:[%s3 + $0x18] sm:$0xff]
  %v101 = vld [vmem:[%s3 + $0x20] sm:$0xff]
  %v102 = vld [vmem:[%s3 + $0x28] sm:$0xff]
  %v103 = vld [vmem:[%s3 + $0x30] sm:$0xff]
  %v104 = vld [vmem:[%s3 + $0x38] sm:$0xff]
  %v105 = vld [vmem:[%s3 + $0x40] sm:$0xff]
  %v106 = vld [vmem:[%s3 + $0x48] sm:$0xff]
  %v107 = vld [vmem:[%s3 + $0x50] sm:$0xff]
  %v108 = vld [vmem:[%s3 + $0x58] sm:$0xff]
  %v109 = vld [vmem:[%s3 + $0x60] sm:$0xff]
  %v110 = vld [vmem:[%s3 + $0x68] sm:$0xff]
  %v111 = vld [vmem:[%s3 + $0x70] sm:$0xff]
  %v112 = vld [vmem:[%s3 + $0x78] sm:$0xff]
  %v113 = vmax.f32 %v81, %v97
  %v114 = vmax.f32 %v82, %v98
  %v115 = vmax.f32 %v83, %v99
  %v116 = vmax.f32 %v84, %v100
  %v117 = vmax.f32 %v85, %v101
  %v118 = vmax.f32 %v86, %v102
  %v119 = vmax.f32 %v87, %v103
  %v120 = vmax.f32 %v88, %v104
  %v121 = vmax.f32 %v89, %v105
  %v122 = vmax.f32 %v90, %v106
  %v123 = vmax.f32 %v91, %v107
  %v124 = vmax.f32 %v92, %v108
  %v125 = vmax.f32 %v93, %v109
  %v126 = vmax.f32 %v94, %v110
  %v127 = vmax.f32 %v95, %v111
  %v128 = vmax.f32 %v96, %v112
  %129 = vst [vmem:[%s4] sm:$0xff] %v113
  %130 = vst [vmem:[%s4 + $0x8] sm:$0xff] %v114
  %131 = vst [vmem:[%s4 + $0x10] sm:$0xff] %v115
  %132 = vst [vmem:[%s4 + $0x18] sm:$0xff] %v116
  %133 = vst [vmem:[%s4 + $0x20] sm:$0xff] %v117
  %134 = vst [vmem:[%s4 + $0x28] sm:$0xff] %v118
  %135 = vst [vmem:[%s4 + $0x30] sm:$0xff] %v119
  %136 = vst [vmem:[%s4 + $0x38] sm:$0xff] %v120
  %137 = vst [vmem:[%s4 + $0x40] sm:$0xff] %v121
  %138 = vst [vmem:[%s4 + $0x48] sm:$0xff] %v122
  %139 = vst [vmem:[%s4 + $0x50] sm:$0xff] %v123
  %140 = vst [vmem:[%s4 + $0x58] sm:$0xff] %v124
  %141 = vst [vmem:[%s4 + $0x60] sm:$0xff] %v125
  %142 = vst [vmem:[%s4 + $0x68] sm:$0xff] %v126
  %143 = vst [vmem:[%s4 + $0x70] sm:$0xff] %v127
  %144 = vst [vmem:[%s4 + $0x78] sm:$0xff] %v128
  // Predicated region
  $region18: #{_lambda_.17} parent=0 // pred_check
    _
  $region19: #{_lambda_.17} parent=0 // pred_check_branch
    %146 = sbr.rel (0) target = $region21
  $region20: #{_lambda_.17} parent=0 // pred_region
    _
  $region21: #{_lambda_.17} parent=0 // pred_fallthru
    _
  // Predicated region
  $region22: #{_lambda_.17} parent=0 // pred_check
    _
  $region23: #{_lambda_.17} parent=0 // pred_check_branch
    %148 = sbr.rel (0) target = $region25
  $region24: #{_lambda_.17} parent=0 // pred_region
    _
  $region25: #{_lambda_.17} parent=0 // pred_fallthru
    _

// kernel: _lambda_.18
$region0: #{_lambda_.18}
  #allocation0 [shape = 'u32[]', space=smem, size = 0x4, offset = 0x4, fixed_abs, tag = 'smem constant byte address 0x4 - core index']
  #allocation1 [shape = 'u32[72,128]{1,0:T(1,128)}', space=vmem, size = 0x9000, scoped, tag = 'internal scratch']
  %s0 = inlined_call_operand.vmem [shape: f32[128,128], index: 0, kind: input, shape index: {}]
  %s1 = inlined_call_operand.vmem [shape: f32[128,128], index: 1, kind: input, shape index: {}]
  %s2 = inlined_call_operand.vmem [shape: f32[1,128], index: 2, kind: input, shape index: {}]
  %s3 = inlined_call_operand.vmem [shape: f32[1,128], index: 3, kind: input, shape index: {}]
  %s4 = inlined_call_operand.vmem [shape: f32[128,128], index: 4, kind: output, shape index: {}]
  %s5 = sld [smem:[#allocation0]]
  $region26: #{_lambda_.18} parent=0
    _
  %s7 = ssub.s32 1, %s5
  %s8 = scalar_select 0, %s7, %s5
  // Predicated region
  $region2: #{_lambda_.18} parent=0 // pred_check
    _
  $region3: #{_lambda_.18} parent=0 // pred_check_branch
    %10 = sbr.rel (0) target = $region5
  $region4: #{_lambda_.18} parent=0 // pred_region
    _
  $region5: #{_lambda_.18} parent=0 // pred_fallthru
    _
  // Predicated region
  $region6: #{_lambda_.18} parent=0 // pred_check
    _
  $region7: #{_lambda_.18} parent=0 // pred_check_branch
    %12 = sbr.rel (0) target = $region9
  $region8: #{_lambda_.18} parent=0 // pred_region
    _
  $region9: #{_lambda_.18} parent=0 // pred_fallthru
    _
  // Predicated region
  $region10: #{_lambda_.18} parent=0 // pred_check
    _
  $region11: #{_lambda_.18} parent=0 // pred_check_branch
    %14 = sbr.rel (0) target = $region13
  $region12: #{_lambda_.18} parent=0 // pred_region
    _
  $region13: #{_lambda_.18} parent=0 // pred_fallthru
    _
  // Predicated region
  $region14: #{_lambda_.18} parent=0 // pred_check
    _
  $region15: #{_lambda_.18} parent=0 // pred_check_branch
    %16 = sbr.rel (0) target = $region17
  $region16: #{_lambda_.18} parent=0 // pred_region
    _
  $region17: #{_lambda_.18} parent=0 // pred_fallthru
    _
  %v17 = vld [vmem:[%s0] sm:$0xff]
  %v18 = vld [vmem:[%s0 + $0x8] sm:$0xff]
  %v19 = vld [vmem:[%s0 + $0x10] sm:$0xff]
  %v20 = vld [vmem:[%s0 + $0x18] sm:$0xff]
  %v21 = vld [vmem:[%s0 + $0x20] sm:$0xff]
  %v22 = vld [vmem:[%s0 + $0x28] sm:$0xff]
  %v23 = vld [vmem:[%s0 + $0x30] sm:$0xff]
  %v24 = vld [vmem:[%s0 + $0x38] sm:$0xff]
  %v25 = vld [vmem:[%s0 + $0x40] sm:$0xff]
  %v26 = vld [vmem:[%s0 + $0x48] sm:$0xff]
  %v27 = vld [vmem:[%s0 + $0x50] sm:$0xff]
  %v28 = vld [vmem:[%s0 + $0x58] sm:$0xff]
  %v29 = vld [vmem:[%s0 + $0x60] sm:$0xff]
  %v30 = vld [vmem:[%s0 + $0x68] sm:$0xff]
  %v31 = vld [vmem:[%s0 + $0x70] sm:$0xff]
  %v32 = vld [vmem:[%s0 + $0x78] sm:$0xff]
  %v33 = vld [vmem:[%s1] sm:$0xff]
  %v34 = vld [vmem:[%s1 + $0x8] sm:$0xff]
  %v35 = vld [vmem:[%s1 + $0x10] sm:$0xff]
  %v36 = vld [vmem:[%s1 + $0x18] sm:$0xff]
  %v37 = vld [vmem:[%s1 + $0x20] sm:$0xff]
  %v38 = vld [vmem:[%s1 + $0x28] sm:$0xff]
  %v39 = vld [vmem:[%s1 + $0x30] sm:$0xff]
  %v40 = vld [vmem:[%s1 + $0x38] sm:$0xff]
  %v41 = vld [vmem:[%s1 + $0x40] sm:$0xff]
  %v42 = vld [vmem:[%s1 + $0x48] sm:$0xff]
  %v43 = vld [vmem:[%s1 + $0x50] sm:$0xff]
  %v44 = vld [vmem:[%s1 + $0x58] sm:$0xff]
  %v45 = vld [vmem:[%s1 + $0x60] sm:$0xff]
  %v46 = vld [vmem:[%s1 + $0x68] sm:$0xff]
  %v47 = vld [vmem:[%s1 + $0x70] sm:$0xff]
  %v48 = vld [vmem:[%s1 + $0x78] sm:$0xff]
  %49 = vmatpush.msra.mxu0 %v48
  %50 = vmatpush.msra.mxu0 %v47
  %51 = vmatpush.msra.mxu0 %v46
  %52 = vmatpush.msra.mxu0 %v45
  %53 = vmatpush.msra.mxu0 %v44
  %54 = vmatpush.msra.mxu0 %v43
  %55 = vmatpush.msra.mxu0 %v42
  %56 = vmatpush.msra.mxu0 %v41
  %57 = vmatpush.msra.mxu0 %v40
  %58 = vmatpush.msra.mxu0 %v39
  %59 = vmatpush.msra.mxu0 %v38
  %60 = vmatpush.msra.mxu0 %v37
  %61 = vmatpush.msra.mxu0 %v36
  %62 = vmatpush.msra.mxu0 %v35
  %63 = vmatpush.msra.mxu0 %v34
  %64 = vmatpush.msra.mxu0 %v33
  %65 = vmatmul.f32.gmra.mxu0 %v17
  %v66 = vpop.f32.mrf.mxu0
  %v67 = vadd.f32 0.0, %v66
  %68 = vmatmul.f32.gmra.mxu0 %v18
  %v69 = vpop.f32.mrf.mxu0
  %v70 = vadd.f32 0.0, %v69
  %71 = vmatmul.f32.gmra.mxu0 %v19
  %v72 = vpop.f32.mrf.mxu0
  %v73 = vadd.f32 0.0, %v72
  %74 = vmatmul.f32.gmra.mxu0 %v20
  %v75 = vpop.f32.mrf.mxu0
  %v76 = vadd.f32 0.0, %v75
  %77 = vmatmul.f32.gmra.mxu0 %v21
  %v78 = vpop.f32.mrf.mxu0
  %v79 = vadd.f32 0.0, %v78
  %80 = vmatmul.f32.gmra.mxu0 %v22
  %v81 = vpop.f32.mrf.mxu0
  %v82 = vadd.f32 0.0, %v81
  %83 = vmatmul.f32.gmra.mxu0 %v23
  %v84 = vpop.f32.mrf.mxu0
  %v85 = vadd.f32 0.0, %v84
  %86 = vmatmul.f32.gmra.mxu0 %v24
  %v87 = vpop.f32.mrf.mxu0
  %v88 = vadd.f32 0.0, %v87
  %89 = vmatmul.f32.gmra.mxu0 %v25
  %v90 = vpop.f32.mrf.mxu0
  %v91 = vadd.f32 0.0, %v90
  %92 = vmatmul.f32.gmra.mxu0 %v26
  %v93 = vpop.f32.mrf.mxu0
  %v94 = vadd.f32 0.0, %v93
  %95 = vmatmul.f32.gmra.mxu0 %v27
  %v96 = vpop.f32.mrf.mxu0
  %v97 = vadd.f32 0.0, %v96
  %98 = vmatmul.f32.gmra.mxu0 %v28
  %v99 = vpop.f32.mrf.mxu0
  %v100 = vadd.f32 0.0, %v99
  %101 = vmatmul.f32.gmra.mxu0 %v29
  %v102 = vpop.f32.mrf.mxu0
  %v103 = vadd.f32 0.0, %v102
  %104 = vmatmul.f32.gmra.mxu0 %v30
  %v105 = vpop.f32.mrf.mxu0
  %v106 = vadd.f32 0.0, %v105
  %107 = vmatmul.f32.gmra.mxu0 %v31
  %v108 = vpop.f32.mrf.mxu0
  %v109 = vadd.f32 0.0, %v108
  %110 = vmatmul.f32.gmra.mxu0 %v32
  %v111 = vpop.f32.mrf.mxu0
  %v112 = vadd.f32 0.0, %v111
  %113 = vdwg.mxu0
  %v114 = vld [vmem:[%s2] sm:$0x1]
  %v116 = vperm.slane %v114, 0
  %v118 = vmul.f32 %v67, %v116
  %v119 = vmul.f32 %v70, %v116
  %v120 = vmul.f32 %v73, %v116
  %v121 = vmul.f32 %v76, %v116
  %v122 = vmul.f32 %v79, %v116
  %v123 = vmul.f32 %v82, %v116
  %v124 = vmul.f32 %v85, %v116
  %v125 = vmul.f32 %v88, %v116
  %v126 = vmul.f32 %v91, %v116
  %v127 = vmul.f32 %v94, %v116
  %v128 = vmul.f32 %v97, %v116
  %v129 = vmul.f32 %v100, %v116
  %v130 = vmul.f32 %v103, %v116
  %v131 = vmul.f32 %v106, %v116
  %v132 = vmul.f32 %v109, %v116
  %v133 = vmul.f32 %v112, %v116
  %v134 = vld [vmem:[%s3] sm:$0x1]
  %v136 = vperm.slane %v134, 0
  %v138 = vadd.f32 %v118, %v136
  %v139 = vadd.f32 %v119, %v136
  %v140 = vadd.f32 %v120, %v136
  %v141 = vadd.f32 %v121, %v136
  %v142 = vadd.f32 %v122, %v136
  %v143 = vadd.f32 %v123, %v136
  %v144 = vadd.f32 %v124, %v136
  %v145 = vadd.f32 %v125, %v136
  %v146 = vadd.f32 %v126, %v136
  %v147 = vadd.f32 %v127, %v136
  %v148 = vadd.f32 %v128, %v136
  %v149 = vadd.f32 %v129, %v136
  %v150 = vadd.f32 %v130, %v136
  %v151 = vadd.f32 %v131, %v136
  %v152 = vadd.f32 %v132, %v136
  %v153 = vadd.f32 %v133, %v136
  %vm154 = vcmp.gt.f32.partialorder %v138, 0.0
  %vm155 = vcmp.gt.f32.partialorder %v139, 0.0
  %vm156 = vcmp.gt.f32.partialorder %v140, 0.0
  %vm157 = vcmp.gt.f32.partialorder %v141, 0.0
  %vm158 = vcmp.gt.f32.partialorder %v142, 0.0
  %vm159 = vcmp.gt.f32.partialorder %v143, 0.0
  %vm160 = vcmp.gt.f32.partialorder %v144, 0.0
  %vm161 = vcmp.gt.f32.partialorder %v145, 0.0
  %vm162 = vcmp.gt.f32.partialorder %v146, 0.0
  %vm163 = vcmp.gt.f32.partialorder %v147, 0.0
  %vm164 = vcmp.gt.f32.partialorder %v148, 0.0
  %vm165 = vcmp.gt.f32.partialorder %v149, 0.0
  %vm166 = vcmp.gt.f32.partialorder %v150, 0.0
  %vm167 = vcmp.gt.f32.partialorder %v151, 0.0
  %vm168 = vcmp.gt.f32.partialorder %v152, 0.0
  %vm169 = vcmp.gt.f32.partialorder %v153, 0.0
  %v170 = vmul.f32 %v138, 0.1
  %v171 = vmul.f32 %v139, 0.1
  %v172 = vmul.f32 %v140, 0.1
  %v173 = vmul.f32 %v141, 0.1
  %v174 = vmul.f32 %v142, 0.1
  %v175 = vmul.f32 %v143, 0.1
  %v176 = vmul.f32 %v144, 0.1
  %v177 = vmul.f32 %v145, 0.1
  %v178 = vmul.f32 %v146, 0.1
  %v179 = vmul.f32 %v147, 0.1
  %v180 = vmul.f32 %v148, 0.1
  %v181 = vmul.f32 %v149, 0.1
  %v182 = vmul.f32 %v150, 0.1
  %v183 = vmul.f32 %v151, 0.1
  %v184 = vmul.f32 %v152, 0.1
  %v185 = vmul.f32 %v153, 0.1
  %v186 = vsel %vm154, %v138, %v170
  %v187 = vsel %vm155, %v139, %v171
  %v188 = vsel %vm156, %v140, %v172
  %v189 = vsel %vm157, %v141, %v173
  %v190 = vsel %vm158, %v142, %v174
  %v191 = vsel %vm159, %v143, %v175
  %v192 = vsel %vm160, %v144, %v176
  %v193 = vsel %vm161, %v145, %v177
  %v194 = vsel %vm162, %v146, %v178
  %v195 = vsel %vm163, %v147, %v179
  %v196 = vsel %vm164, %v148, %v180
  %v197 = vsel %vm165, %v149, %v181
  %v198 = vsel %vm166, %v150, %v182
  %v199 = vsel %vm167, %v151, %v183
  %v200 = vsel %vm168, %v152, %v184
  %v201 = vsel %vm169, %v153, %v185
  %202 = vst [vmem:[%s4] sm:$0xff] %v186
  %203 = vst [vmem:[%s4 + $0x8] sm:$0xff] %v187
  %204 = vst [vmem:[%s4 + $0x10] sm:$0xff] %v188
  %205 = vst [vmem:[%s4 + $0x18] sm:$0xff] %v189
  %206 = vst [vmem:[%s4 + $0x20] sm:$0xff] %v190
  %207 = vst [vmem:[%s4 + $0x28] sm:$0xff] %v191
  %208 = vst [vmem:[%s4 + $0x30] sm:$0xff] %v192
  %209 = vst [vmem:[%s4 + $0x38] sm:$0xff] %v193
  %210 = vst [vmem:[%s4 + $0x40] sm:$0xff] %v194
  %211 = vst [vmem:[%s4 + $0x48] sm:$0xff] %v195
  %212 = vst [vmem:[%s4 + $0x50] sm:$0xff] %v196
  %213 = vst [vmem:[%s4 + $0x58] sm:$0xff] %v197
  %214 = vst [vmem:[%s4 + $0x60] sm:$0xff] %v198
  %215 = vst [vmem:[%s4 + $0x68] sm:$0xff] %v199
  %216 = vst [vmem:[%s4 + $0x70] sm:$0xff] %v200
  %217 = vst [vmem:[%s4 + $0x78] sm:$0xff] %v201
  // Predicated region
  $region18: #{_lambda_.18} parent=0 // pred_check
    _
  $region19: #{_lambda_.18} parent=0 // pred_check_branch
    %219 = sbr.rel (0) target = $region21
  $region20: #{_lambda_.18} parent=0 // pred_region
    _
  $region21: #{_lambda_.18} parent=0 // pred_fallthru
    _
  // Predicated region
  $region22: #{_lambda_.18} parent=0 // pred_check
    _
  $region23: #{_lambda_.18} parent=0 // pred_check_branch
    %221 = sbr.rel (0) target = $region25
  $region24: #{_lambda_.18} parent=0 // pred_region
    _
  $region25: #{_lambda_.18} parent=0 // pred_fallthru
    _

// kernel: _lambda_.21
$region0: #{_lambda_.21}
  #allocation0 [shape = 'u32[]', space=smem, size = 0x4, offset = 0x4, fixed_abs, tag = 'smem constant byte address 0x4 - core index']
  #allocation1 [shape = 'u32[72,128]{1,0:T(1,128)}', space=vmem, size = 0x9000, scoped, tag = 'internal scratch']
  %s0 = inlined_call_operand.vmem [shape: f32[128,384], index: 0, kind: input, shape index: {}]
  %s1 = inlined_call_operand.vmem [shape: f32[384,128], index: 1, kind: input, shape index: {}]
  %s2 = inlined_call_operand.vmem [shape: f32[1,128], index: 2, kind: input, shape index: {}]
  %s3 = inlined_call_operand.vmem [shape: f32[1,128], index: 3, kind: input, shape index: {}]
  %s4 = inlined_call_operand.vmem [shape: f32[128,128], index: 4, kind: output, shape index: {}]
  %s5 = sld [smem:[#allocation0]]
  $region26: #{_lambda_.21} parent=0
    _
  %s7 = ssub.s32 1, %s5
  %s8 = scalar_select 0, %s7, %s5
  // Predicated region
  $region2: #{_lambda_.21} parent=0 // pred_check
    _
  $region3: #{_lambda_.21} parent=0 // pred_check_branch
    %10 = sbr.rel (0) target = $region5
  $region4: #{_lambda_.21} parent=0 // pred_region
    _
  $region5: #{_lambda_.21} parent=0 // pred_fallthru
    _
  // Predicated region
  $region6: #{_lambda_.21} parent=0 // pred_check
    _
  $region7: #{_lambda_.21} parent=0 // pred_check_branch
    %12 = sbr.rel (0) target = $region9
  $region8: #{_lambda_.21} parent=0 // pred_region
    _
  $region9: #{_lambda_.21} parent=0 // pred_fallthru
    _
  // Predicated region
  $region10: #{_lambda_.21} parent=0 // pred_check
    _
  $region11: #{_lambda_.21} parent=0 // pred_check_branch
    %14 = sbr.rel (0) target = $region13
  $region12: #{_lambda_.21} parent=0 // pred_region
    _
  $region13: #{_lambda_.21} parent=0 // pred_fallthru
    _
  // Predicated region
  $region14: #{_lambda_.21} parent=0 // pred_check
    _
  $region15: #{_lambda_.21} parent=0 // pred_check_branch
    %16 = sbr.rel (0) target = $region17
  $region16: #{_lambda_.21} parent=0 // pred_region
    _
  $region17: #{_lambda_.21} parent=0 // pred_fallthru
    _
  %v17 = vld [vmem:[%s0] sm:$0xff]
  %v18 = vld [vmem:[%s0 + $0x8] sm:$0xff]
  %v19 = vld [vmem:[%s0 + $0x10] sm:$0xff]
  %v20 = vld [vmem:[%s0 + $0x18] sm:$0xff]
  %v21 = vld [vmem:[%s0 + $0x20] sm:$0xff]
  %v22 = vld [vmem:[%s0 + $0x28] sm:$0xff]
  %v23 = vld [vmem:[%s0 + $0x30] sm:$0xff]
  %v24 = vld [vmem:[%s0 + $0x38] sm:$0xff]
  %v25 = vld [vmem:[%s0 + $0x40] sm:$0xff]
  %v26 = vld [vmem:[%s0 + $0x48] sm:$0xff]
  %v27 = vld [vmem:[%s0 + $0x50] sm:$0xff]
  %v28 = vld [vmem:[%s0 + $0x58] sm:$0xff]
  %v29 = vld [vmem:[%s0 + $0x60] sm:$0xff]
  %v30 = vld [vmem:[%s0 + $0x68] sm:$0xff]
  %v31 = vld [vmem:[%s0 + $0x70] sm:$0xff]
  %v32 = vld [vmem:[%s0 + $0x78] sm:$0xff]
  %v33 = vld [vmem:[%s0 + $0x80] sm:$0xff]
  %v34 = vld [vmem:[%s0 + $0x88] sm:$0xff]
  %v35 = vld [vmem:[%s0 + $0x90] sm:$0xff]
  %v36 = vld [vmem:[%s0 + $0x98] sm:$0xff]
  %v37 = vld [vmem:[%s0 + $0xa0] sm:$0xff]
  %v38 = vld [vmem:[%s0 + $0xa8] sm:$0xff]
  %v39 = vld [vmem:[%s0 + $0xb0] sm:$0xff]
  %v40 = vld [vmem:[%s0 + $0xb8] sm:$0xff]
  %v41 = vld [vmem:[%s0 + $0xc0] sm:$0xff]
  %v42 = vld [vmem:[%s0 + $0xc8] sm:$0xff]
  %v43 = vld [vmem:[%s0 + $0xd0] sm:$0xff]
  %v44 = vld [vmem:[%s0 + $0xd8] sm:$0xff]
  %v45 = vld [vmem:[%s0 + $0xe0] sm:$0xff]
  %v46 = vld [vmem:[%s0 + $0xe8] sm:$0xff]
  %v47 = vld [vmem:[%s0 + $0xf0] sm:$0xff]
  %v48 = vld [vmem:[%s0 + $0xf8] sm:$0xff]
  %v49 = vld [vmem:[%s0 + $0x100] sm:$0xff]
  %v50 = vld [vmem:[%s0 + $0x108] sm:$0xff]
  %v51 = vld [vmem:[%s0 + $0x110] sm:$0xff]
  %v52 = vld [vmem:[%s0 + $0x118] sm:$0xff]
  %v53 = vld [vmem:[%s0 + $0x120] sm:$0xff]
  %v54 = vld [vmem:[%s0 + $0x128] sm:$0xff]
  %v55 = vld [vmem:[%s0 + $0x130] sm:$0xff]
  %v56 = vld [vmem:[%s0 + $0x138] sm:$0xff]
  %v57 = vld [vmem:[%s0 + $0x140] sm:$0xff]
  %v58 = vld [vmem:[%s0 + $0x148] sm:$0xff]
  %v59 = vld [vmem:[%s0 + $0x150] sm:$0xff]
  %v60 = vld [vmem:[%s0 + $0x158] sm:$0xff]
  %v61 = vld [vmem:[%s0 + $0x160] sm:$0xff]
  %v62 = vld [vmem:[%s0 + $0x168] sm:$0xff]
  %v63 = vld [vmem:[%s0 + $0x170] sm:$0xff]
  %v64 = vld [vmem:[%s0 + $0x178] sm:$0xff]
  %v65 = vld [vmem:[%s1] sm:$0xff]
  %v66 = vld [vmem:[%s1 + $0x8] sm:$0xff]
  %v67 = vld [vmem:[%s1 + $0x10] sm:$0xff]
  %v68 = vld [vmem:[%s1 + $0x18] sm:$0xff]
  %v69 = vld [vmem:[%s1 + $0x20] sm:$0xff]
  %v70 = vld [vmem:[%s1 + $0x28] sm:$0xff]
  %v71 = vld [vmem:[%s1 + $0x30] sm:$0xff]
  %v72 = vld [vmem:[%s1 + $0x38] sm:$0xff]
  %v73 = vld [vmem:[%s1 + $0x40] sm:$0xff]
  %v74 = vld [vmem:[%s1 + $0x48] sm:$0xff]
  %v75 = vld [vmem:[%s1 + $0x50] sm:$0xff]
  %v76 = vld [vmem:[%s1 + $0x58] sm:$0xff]
  %v77 = vld [vmem:[%s1 + $0x60] sm:$0xff]
  %v78 = vld [vmem:[%s1 + $0x68] sm:$0xff]
  %v79 = vld [vmem:[%s1 + $0x70] sm:$0xff]
  %v80 = vld [vmem:[%s1 + $0x78] sm:$0xff]
  %v81 = vld [vmem:[%s1 + $0x80] sm:$0xff]
  %v82 = vld [vmem:[%s1 + $0x88] sm:$0xff]
  %v83 = vld [vmem:[%s1 + $0x90] sm:$0xff]
  %v84 = vld [vmem:[%s1 + $0x98] sm:$0xff]
  %v85 = vld [vmem:[%s1 + $0xa0] sm:$0xff]
  %v86 = vld [vmem:[%s1 + $0xa8] sm:$0xff]
  %v87 = vld [vmem:[%s1 + $0xb0] sm:$0xff]
  %v88 = vld [vmem:[%s1 + $0xb8] sm:$0xff]
  %v89 = vld [vmem:[%s1 + $0xc0] sm:$0xff]
  %v90 = vld [vmem:[%s1 + $0xc8] sm:$0xff]
  %v91 = vld [vmem:[%s1 + $0xd0] sm:$0xff]
  %v92 = vld [vmem:[%s1 + $0xd8] sm:$0xff]
  %v93 = vld [vmem:[%s1 + $0xe0] sm:$0xff]
  %v94 = vld [vmem:[%s1 + $0xe8] sm:$0xff]
  %v95 = vld [vmem:[%s1 + $0xf0] sm:$0xff]
  %v96 = vld [vmem:[%s1 + $0xf8] sm:$0xff]
  %v97 = vld [vmem:[%s1 + $0x100] sm:$0xff]
  %v98 = vld [vmem:[%s1 + $0x108] sm:$0xff]
  %v99 = vld [vmem:[%s1 + $0x110] sm:$0xff]
  %v100 = vld [vmem:[%s1 + $0x118] sm:$0xff]
  %v101 = vld [vmem:[%s1 + $0x120] sm:$0xff]
  %v102 = vld [vmem:[%s1 + $0x128] sm:$0xff]
  %v103 = vld [vmem:[%s1 + $0x130] sm:$0xff]
  %v104 = vld [vmem:[%s1 + $0x138] sm:$0xff]
  %v105 = vld [vmem:[%s1 + $0x140] sm:$0xff]
  %v106 = vld [vmem:[%s1 + $0x148] sm:$0xff]
  %v107 = vld [vmem:[%s1 + $0x150] sm:$0xff]
  %v108 = vld [vmem:[%s1 + $0x158] sm:$0xff]
  %v109 = vld [vmem:[%s1 + $0x160] sm:$0xff]
  %v110 = vld [vmem:[%s1 + $0x168] sm:$0xff]
  %v111 = vld [vmem:[%s1 + $0x170] sm:$0xff]
  %v112 = vld [vmem:[%s1 + $0x178] sm:$0xff]
  %113 = vmatpush.msra.mxu0 %v80
  %114 = vmatpush.msra.mxu0 %v79
  %115 = vmatpush.msra.mxu0 %v78
  %116 = vmatpush.msra.mxu0 %v77
  %117 = vmatpush.msra.mxu0 %v76
  %118 = vmatpush.msra.mxu0 %v75
  %119 = vmatpush.msra.mxu0 %v74
  %120 = vmatpush.msra.mxu0 %v73
  %121 = vmatpush.msra.mxu0 %v72
  %122 = vmatpush.msra.mxu0 %v71
  %123 = vmatpush.msra.mxu0 %v70
  %124 = vmatpush.msra.mxu0 %v69
  %125 = vmatpush.msra.mxu0 %v68
  %126 = vmatpush.msra.mxu0 %v67
  %127 = vmatpush.msra.mxu0 %v66
  %128 = vmatpush.msra.mxu0 %v65
  %129 = vmatmul.f32.gmra.mxu0 %v17
  %v130 = vpop.f32.mrf.mxu0
  %v131 = vadd.f32 0.0, %v130
  %132 = vmatmul.f32.gmra.mxu0 %v20
  %v133 = vpop.f32.mrf.mxu0
  %v134 = vadd.f32 0.0, %v133
  %135 = vmatmul.f32.gmra.mxu0 %v23
  %v136 = vpop.f32.mrf.mxu0
  %v137 = vadd.f32 0.0, %v136
  %138 = vmatmul.f32.gmra.mxu0 %v26
  %v139 = vpop.f32.mrf.mxu0
  %v140 = vadd.f32 0.0, %v139
  %141 = vmatmul.f32.gmra.mxu0 %v29
  %v142 = vpop.f32.mrf.mxu0
  %v143 = vadd.f32 0.0, %v142
  %144 = vmatmul.f32.gmra.mxu0 %v32
  %v145 = vpop.f32.mrf.mxu0
  %v146 = vadd.f32 0.0, %v145
  %147 = vmatmul.f32.gmra.mxu0 %v35
  %v148 = vpop.f32.mrf.mxu0
  %v149 = vadd.f32 0.0, %v148
  %150 = vmatmul.f32.gmra.mxu0 %v38
  %v151 = vpop.f32.mrf.mxu0
  %v152 = vadd.f32 0.0, %v151
  %153 = vmatmul.f32.gmra.mxu0 %v41
  %v154 = vpop.f32.mrf.mxu0
  %v155 = vadd.f32 0.0, %v154
  %156 = vmatmul.f32.gmra.mxu0 %v44
  %v157 = vpop.f32.mrf.mxu0
  %v158 = vadd.f32 0.0, %v157
  %159 = vmatmul.f32.gmra.mxu0 %v47
  %v160 = vpop.f32.mrf.mxu0
  %v161 = vadd.f32 0.0, %v160
  %162 = vmatmul.f32.gmra.mxu0 %v50
  %v163 = vpop.f32.mrf.mxu0
  %v164 = vadd.f32 0.0, %v163
  %165 = vmatmul.f32.gmra.mxu0 %v53
  %v166 = vpop.f32.mrf.mxu0
  %v167 = vadd.f32 0.0, %v166
  %168 = vmatmul.f32.gmra.mxu0 %v56
  %v169 = vpop.f32.mrf.mxu0
  %v170 = vadd.f32 0.0, %v169
  %171 = vmatmul.f32.gmra.mxu0 %v59
  %v172 = vpop.f32.mrf.mxu0
  %v173 = vadd.f32 0.0, %v172
  %174 = vmatmul.f32.gmra.mxu0 %v62
  %v175 = vpop.f32.mrf.mxu0
  %v176 = vadd.f32 0.0, %v175
  %177 = vdwg.mxu0
  %178 = vmatpush.msra.mxu0 %v96
  %179 = vmatpush.msra.mxu0 %v95
  %180 = vmatpush.msra.mxu0 %v94
  %181 = vmatpush.msra.mxu0 %v93
  %182 = vmatpush.msra.mxu0 %v92
  %183 = vmatpush.msra.mxu0 %v91
  %184 = vmatpush.msra.mxu0 %v90
  %185 = vmatpush.msra.mxu0 %v89
  %186 = vmatpush.msra.mxu0 %v88
  %187 = vmatpush.msra.mxu0 %v87
  %188 = vmatpush.msra.mxu0 %v86
  %189 = vmatpush.msra.mxu0 %v85
  %190 = vmatpush.msra.mxu0 %v84
  %191 = vmatpush.msra.mxu0 %v83
  %192 = vmatpush.msra.mxu0 %v82
  %193 = vmatpush.msra.mxu0 %v81
  %194 = vmatmul.f32.gmra.mxu0 %v18
  %v195 = vpop.f32.mrf.mxu0
  %v196 = vadd.f32 %v131, %v195
  %197 = vmatmul.f32.gmra.mxu0 %v21
  %v198 = vpop.f32.mrf.mxu0
  %v199 = vadd.f32 %v134, %v198
  %200 = vmatmul.f32.gmra.mxu0 %v24
  %v201 = vpop.f32.mrf.mxu0
  %v202 = vadd.f32 %v137, %v201
  %203 = vmatmul.f32.gmra.mxu0 %v27
  %v204 = vpop.f32.mrf.mxu0
  %v205 = vadd.f32 %v140, %v204
  %206 = vmatmul.f32.gmra.mxu0 %v30
  %v207 = vpop.f32.mrf.mxu0
  %v208 = vadd.f32 %v143, %v207
  %209 = vmatmul.f32.gmra.mxu0 %v33
  %v210 = vpop.f32.mrf.mxu0
  %v211 = vadd.f32 %v146, %v210
  %212 = vmatmul.f32.gmra.mxu0 %v36
  %v213 = vpop.f32.mrf.mxu0
  %v214 = vadd.f32 %v149, %v213
  %215 = vmatmul.f32.gmra.mxu0 %v39
  %v216 = vpop.f32.mrf.mxu0
  %v217 = vadd.f32 %v152, %v216
  %218 = vmatmul.f32.gmra.mxu0 %v42
  %v219 = vpop.f32.mrf.mxu0
  %v220 = vadd.f32 %v155, %v219
  %221 = vmatmul.f32.gmra.mxu0 %v45
  %v222 = vpop.f32.mrf.mxu0
  %v223 = vadd.f32 %v158, %v222
  %224 = vmatmul.f32.gmra.mxu0 %v48
  %v225 = vpop.f32.mrf.mxu0
  %v226 = vadd.f32 %v161, %v225
  %227 = vmatmul.f32.gmra.mxu0 %v51
  %v228 = vpop.f32.mrf.mxu0
  %v229 = vadd.f32 %v164, %v228
  %230 = vmatmul.f32.gmra.mxu0 %v54
  %v231 = vpop.f32.mrf.mxu0
  %v232 = vadd.f32 %v167, %v231
  %233 = vmatmul.f32.gmra.mxu0 %v57
  %v234 = vpop.f32.mrf.mxu0
  %v235 = vadd.f32 %v170, %v234
  %236 = vmatmul.f32.gmra.mxu0 %v60
  %v237 = vpop.f32.mrf.mxu0
  %v238 = vadd.f32 %v173, %v237
  %239 = vmatmul.f32.gmra.mxu0 %v63
  %v240 = vpop.f32.mrf.mxu0
  %v241 = vadd.f32 %v176, %v240
  %242 = vdwg.mxu0
  %243 = vmatpush.msra.mxu0 %v112
  %244 = vmatpush.msra.mxu0 %v111
  %245 = vmatpush.msra.mxu0 %v110
  %246 = vmatpush.msra.mxu0 %v109
  %247 = vmatpush.msra.mxu0 %v108
  %248 = vmatpush.msra.mxu0 %v107
  %249 = vmatpush.msra.mxu0 %v106
  %250 = vmatpush.msra.mxu0 %v105
  %251 = vmatpush.msra.mxu0 %v104
  %252 = vmatpush.msra.mxu0 %v103
  %253 = vmatpush.msra.mxu0 %v102
  %254 = vmatpush.msra.mxu0 %v101
  %255 = vmatpush.msra.mxu0 %v100
  %256 = vmatpush.msra.mxu0 %v99
  %257 = vmatpush.msra.mxu0 %v98
  %258 = vmatpush.msra.mxu0 %v97
  %259 = vmatmul.f32.gmra.mxu0 %v19
  %v260 = vpop.f32.mrf.mxu0
  %v261 = vadd.f32 %v196, %v260
  %262 = vmatmul.f32.gmra.mxu0 %v22
  %v263 = vpop.f32.mrf.mxu0
  %v264 = vadd.f32 %v199, %v263
  %265 = vmatmul.f32.gmra.mxu0 %v25
  %v266 = vpop.f32.mrf.mxu0
  %v267 = vadd.f32 %v202, %v266
  %268 = vmatmul.f32.gmra.mxu0 %v28
  %v269 = vpop.f32.mrf.mxu0
  %v270 = vadd.f32 %v205, %v269
  %271 = vmatmul.f32.gmra.mxu0 %v31
  %v272 = vpop.f32.mrf.mxu0
  %v273 = vadd.f32 %v208, %v272
  %274 = vmatmul.f32.gmra.mxu0 %v34
  %v275 = vpop.f32.mrf.mxu0
  %v276 = vadd.f32 %v211, %v275
  %277 = vmatmul.f32.gmra.mxu0 %v37
  %v278 = vpop.f32.mrf.mxu0
  %v279 = vadd.f32 %v214, %v278
  %280 = vmatmul.f32.gmra.mxu0 %v40
  %v281 = vpop.f32.mrf.mxu0
  %v282 = vadd.f32 %v217, %v281
  %283 = vmatmul.f32.gmra.mxu0 %v43
  %v284 = vpop.f32.mrf.mxu0
  %v285 = vadd.f32 %v220, %v284
  %286 = vmatmul.f32.gmra.mxu0 %v46
  %v287 = vpop.f32.mrf.mxu0
  %v288 = vadd.f32 %v223, %v287
  %289 = vmatmul.f32.gmra.mxu0 %v49
  %v290 = vpop.f32.mrf.mxu0
  %v291 = vadd.f32 %v226, %v290
  %292 = vmatmul.f32.gmra.mxu0 %v52
  %v293 = vpop.f32.mrf.mxu0
  %v294 = vadd.f32 %v229, %v293
  %295 = vmatmul.f32.gmra.mxu0 %v55
  %v296 = vpop.f32.mrf.mxu0
  %v297 = vadd.f32 %v232, %v296
  %298 = vmatmul.f32.gmra.mxu0 %v58
  %v299 = vpop.f32.mrf.mxu0
  %v300 = vadd.f32 %v235, %v299
  %301 = vmatmul.f32.gmra.mxu0 %v61
  %v302 = vpop.f32.mrf.mxu0
  %v303 = vadd.f32 %v238, %v302
  %304 = vmatmul.f32.gmra.mxu0 %v64
  %v305 = vpop.f32.mrf.mxu0
  %v306 = vadd.f32 %v241, %v305
  %307 = vdwg.mxu0
  %v308 = vld [vmem:[%s2] sm:$0x1]
  %v310 = vperm.slane %v308, 0
  %v312 = vmul.f32 %v261, %v310
  %v313 = vmul.f32 %v264, %v310
  %v314 = vmul.f32 %v267, %v310
  %v315 = vmul.f32 %v270, %v310
  %v316 = vmul.f32 %v273, %v310
  %v317 = vmul.f32 %v276, %v310
  %v318 = vmul.f32 %v279, %v310
  %v319 = vmul.f32 %v282, %v310
  %v320 = vmul.f32 %v285, %v310
  %v321 = vmul.f32 %v288, %v310
  %v322 = vmul.f32 %v291, %v310
  %v323 = vmul.f32 %v294, %v310
  %v324 = vmul.f32 %v297, %v310
  %v325 = vmul.f32 %v300, %v310
  %v326 = vmul.f32 %v303, %v310
  %v327 = vmul.f32 %v306, %v310
  %v328 = vld [vmem:[%s3] sm:$0x1]
  %v330 = vperm.slane %v328, 0
  %v332 = vadd.f32 %v312, %v330
  %v333 = vadd.f32 %v313, %v330
  %v334 = vadd.f32 %v314, %v330
  %v335 = vadd.f32 %v315, %v330
  %v336 = vadd.f32 %v316, %v330
  %v337 = vadd.f32 %v317, %v330
  %v338 = vadd.f32 %v318, %v330
  %v339 = vadd.f32 %v319, %v330
  %v340 = vadd.f32 %v320, %v330
  %v341 = vadd.f32 %v321, %v330
  %v342 = vadd.f32 %v322, %v330
  %v343 = vadd.f32 %v323, %v330
  %v344 = vadd.f32 %v324, %v330
  %v345 = vadd.f32 %v325, %v330
  %v346 = vadd.f32 %v326, %v330
  %v347 = vadd.f32 %v327, %v330
  %vm348 = vcmp.gt.f32.partialorder %v332, 0.0
  %vm349 = vcmp.gt.f32.partialorder %v333, 0.0
  %vm350 = vcmp.gt.f32.partialorder %v334, 0.0
  %vm351 = vcmp.gt.f32.partialorder %v335, 0.0
  %vm352 = vcmp.gt.f32.partialorder %v336, 0.0
  %vm353 = vcmp.gt.f32.partialorder %v337, 0.0
  %vm354 = vcmp.gt.f32.partialorder %v338, 0.0
  %vm355 = vcmp.gt.f32.partialorder %v339, 0.0
  %vm356 = vcmp.gt.f32.partialorder %v340, 0.0
  %vm357 = vcmp.gt.f32.partialorder %v341, 0.0
  %vm358 = vcmp.gt.f32.partialorder %v342, 0.0
  %vm359 = vcmp.gt.f32.partialorder %v343, 0.0
  %vm360 = vcmp.gt.f32.partialorder %v344, 0.0
  %vm361 = vcmp.gt.f32.partialorder %v345, 0.0
  %vm362 = vcmp.gt.f32.partialorder %v346, 0.0
  %vm363 = vcmp.gt.f32.partialorder %v347, 0.0
  %v364 = vmul.f32 %v332, 0.1
  %v365 = vmul.f32 %v333, 0.1
  %v366 = vmul.f32 %v334, 0.1
  %v367 = vmul.f32 %v335, 0.1
  %v368 = vmul.f32 %v336, 0.1
  %v369 = vmul.f32 %v337, 0.1
  %v370 = vmul.f32 %v338, 0.1
  %v371 = vmul.f32 %v339, 0.1
  %v372 = vmul.f32 %v340, 0.1
  %v373 = vmul.f32 %v341, 0.1
  %v374 = vmul.f32 %v342, 0.1
  %v375 = vmul.f32 %v343, 0.1
  %v376 = vmul.f32 %v344, 0.1
  %v377 = vmul.f32 %v345, 0.1
  %v378 = vmul.f32 %v346, 0.1
  %v379 = vmul.f32 %v347, 0.1
  %v380 = vsel %vm348, %v332, %v364
  %v381 = vsel %vm349, %v333, %v365
  %v382 = vsel %vm350, %v334, %v366
  %v383 = vsel %vm351, %v335, %v367
  %v384 = vsel %vm352, %v336, %v368
  %v385 = vsel %vm353, %v337, %v369
  %v386 = vsel %vm354, %v338, %v370
  %v387 = vsel %vm355, %v339, %v371
  %v388 = vsel %vm356, %v340, %v372
  %v389 = vsel %vm357, %v341, %v373
  %v390 = vsel %vm358, %v342, %v374
  %v391 = vsel %vm359, %v343, %v375
  %v392 = vsel %vm360, %v344, %v376
  %v393 = vsel %vm361, %v345, %v377
  %v394 = vsel %vm362, %v346, %v378
  %v395 = vsel %vm363, %v347, %v379
  %396 = vst [vmem:[%s4] sm:$0xff] %v380
  %397 = vst [vmem:[%s4 + $0x8] sm:$0xff] %v381
  %398 = vst [vmem:[%s4 + $0x10] sm:$0xff] %v382
  %399 = vst [vmem:[%s4 + $0x18] sm:$0xff] %v383
  %400 = vst [vmem:[%s4 + $0x20] sm:$0xff] %v384
  %401 = vst [vmem:[%s4 + $0x28] sm:$0xff] %v385
  %402 = vst [vmem:[%s4 + $0x30] sm:$0xff] %v386
  %403 = vst [vmem:[%s4 + $0x38] sm:$0xff] %v387
  %404 = vst [vmem:[%s4 + $0x40] sm:$0xff] %v388
  %405 = vst [vmem:[%s4 + $0x48] sm:$0xff] %v389
  %406 = vst [vmem:[%s4 + $0x50] sm:$0xff] %v390
  %407 = vst [vmem:[%s4 + $0x58] sm:$0xff] %v391
  %408 = vst [vmem:[%s4 + $0x60] sm:$0xff] %v392
  %409 = vst [vmem:[%s4 + $0x68] sm:$0xff] %v393
  %410 = vst [vmem:[%s4 + $0x70] sm:$0xff] %v394
  %411 = vst [vmem:[%s4 + $0x78] sm:$0xff] %v395
  // Predicated region
  $region18: #{_lambda_.21} parent=0 // pred_check
    _
  $region19: #{_lambda_.21} parent=0 // pred_check_branch
    %413 = sbr.rel (0) target = $region21
  $region20: #{_lambda_.21} parent=0 // pred_region
    _
  $region21: #{_lambda_.21} parent=0 // pred_fallthru
    _
  // Predicated region
  $region22: #{_lambda_.21} parent=0 // pred_check
    _
  $region23: #{_lambda_.21} parent=0 // pred_check_branch
    %415 = sbr.rel (0) target = $region25
  $region24: #{_lambda_.21} parent=0 // pred_region
    _
  $region25: #{_lambda_.21} parent=0 // pred_fallthru
    _

// kernel: _lambda_.22
$region0: #{_lambda_.22}
  #allocation0 [shape = 'u32[]', space=smem, size = 0x4, offset = 0x4, fixed_abs, tag = 'smem constant byte address 0x4 - core index']
  #allocation1 [shape = 'u32[72,128]{1,0:T(1,128)}', space=vmem, size = 0x9000, scoped, tag = 'internal scratch']
  %s0 = inlined_call_operand.vmem [shape: f32[128,128], index: 0, kind: input, shape index: {}]
  %s1 = inlined_call_operand.vmem [shape: f32[128,128], index: 1, kind: input, shape index: {}]
  %s2 = inlined_call_operand.vmem [shape: f32[1,128], index: 2, kind: input, shape index: {}]
  %s3 = inlined_call_operand.vmem [shape: f32[1,128], index: 3, kind: input, shape index: {}]
  %s4 = inlined_call_operand.vmem [shape: f32[128,128], index: 4, kind: input, shape index: {}]
  %s5 = inlined_call_operand.vmem [shape: f32[128,128], index: 5, kind: output, shape index: {}]
  %s6 = sld [smem:[#allocation0]]
  $region30: #{_lambda_.22} parent=0
    _
  %s8 = ssub.s32 1, %s6
  %s9 = scalar_select 0, %s8, %s6
  // Predicated region
  $region2: #{_lambda_.22} parent=0 // pred_check
    _
  $region3: #{_lambda_.22} parent=0 // pred_check_branch
    %11 = sbr.rel (0) target = $region5
  $region4: #{_lambda_.22} parent=0 // pred_region
    _
  $region5: #{_lambda_.22} parent=0 // pred_fallthru
    _
  // Predicated region
  $region6: #{_lambda_.22} parent=0 // pred_check
    _
  $region7: #{_lambda_.22} parent=0 // pred_check_branch
    %13 = sbr.rel (0) target = $region9
  $region8: #{_lambda_.22} parent=0 // pred_region
    _
  $region9: #{_lambda_.22} parent=0 // pred_fallthru
    _
  // Predicated region
  $region10: #{_lambda_.22} parent=0 // pred_check
    _
  $region11: #{_lambda_.22} parent=0 // pred_check_branch
    %15 = sbr.rel (0) target = $region13
  $region12: #{_lambda_.22} parent=0 // pred_region
    _
  $region13: #{_lambda_.22} parent=0 // pred_fallthru
    _
  // Predicated region
  $region14: #{_lambda_.22} parent=0 // pred_check
    _
  $region15: #{_lambda_.22} parent=0 // pred_check_branch
    %17 = sbr.rel (0) target = $region17
  $region16: #{_lambda_.22} parent=0 // pred_region
    _
  $region17: #{_lambda_.22} parent=0 // pred_fallthru
    _
  // Predicated region
  $region18: #{_lambda_.22} parent=0 // pred_check
    _
  $region19: #{_lambda_.22} parent=0 // pred_check_branch
    %19 = sbr.rel (0) target = $region21
  $region20: #{_lambda_.22} parent=0 // pred_region
    _
  $region21: #{_lambda_.22} parent=0 // pred_fallthru
    _
  %v20 = vld [vmem:[%s0] sm:$0xff]
  %v21 = vld [vmem:[%s0 + $0x8] sm:$0xff]
  %v22 = vld [vmem:[%s0 + $0x10] sm:$0xff]
  %v23 = vld [vmem:[%s0 + $0x18] sm:$0xff]
  %v24 = vld [vmem:[%s0 + $0x20] sm:$0xff]
  %v25 = vld [vmem:[%s0 + $0x28] sm:$0xff]
  %v26 = vld [vmem:[%s0 + $0x30] sm:$0xff]
  %v27 = vld [vmem:[%s0 + $0x38] sm:$0xff]
  %v28 = vld [vmem:[%s0 + $0x40] sm:$0xff]
  %v29 = vld [vmem:[%s0 + $0x48] sm:$0xff]
  %v30 = vld [vmem:[%s0 + $0x50] sm:$0xff]
  %v31 = vld [vmem:[%s0 + $0x58] sm:$0xff]
  %v32 = vld [vmem:[%s0 + $0x60] sm:$0xff]
  %v33 = vld [vmem:[%s0 + $0x68] sm:$0xff]
  %v34 = vld [vmem:[%s0 + $0x70] sm:$0xff]
  %v35 = vld [vmem:[%s0 + $0x78] sm:$0xff]
  %v36 = vld [vmem:[%s1] sm:$0xff]
  %v37 = vld [vmem:[%s1 + $0x8] sm:$0xff]
  %v38 = vld [vmem:[%s1 + $0x10] sm:$0xff]
  %v39 = vld [vmem:[%s1 + $0x18] sm:$0xff]
  %v40 = vld [vmem:[%s1 + $0x20] sm:$0xff]
  %v41 = vld [vmem:[%s1 + $0x28] sm:$0xff]
  %v42 = vld [vmem:[%s1 + $0x30] sm:$0xff]
  %v43 = vld [vmem:[%s1 + $0x38] sm:$0xff]
  %v44 = vld [vmem:[%s1 + $0x40] sm:$0xff]
  %v45 = vld [vmem:[%s1 + $0x48] sm:$0xff]
  %v46 = vld [vmem:[%s1 + $0x50] sm:$0xff]
  %v47 = vld [vmem:[%s1 + $0x58] sm:$0xff]
  %v48 = vld [vmem:[%s1 + $0x60] sm:$0xff]
  %v49 = vld [vmem:[%s1 + $0x68] sm:$0xff]
  %v50 = vld [vmem:[%s1 + $0x70] sm:$0xff]
  %v51 = vld [vmem:[%s1 + $0x78] sm:$0xff]
  %52 = vmatpush.msra.mxu0 %v51
  %53 = vmatpush.msra.mxu0 %v50
  %54 = vmatpush.msra.mxu0 %v49
  %55 = vmatpush.msra.mxu0 %v48
  %56 = vmatpush.msra.mxu0 %v47
  %57 = vmatpush.msra.mxu0 %v46
  %58 = vmatpush.msra.mxu0 %v45
  %59 = vmatpush.msra.mxu0 %v44
  %60 = vmatpush.msra.mxu0 %v43
  %61 = vmatpush.msra.mxu0 %v42
  %62 = vmatpush.msra.mxu0 %v41
  %63 = vmatpush.msra.mxu0 %v40
  %64 = vmatpush.msra.mxu0 %v39
  %65 = vmatpush.msra.mxu0 %v38
  %66 = vmatpush.msra.mxu0 %v37
  %67 = vmatpush.msra.mxu0 %v36
  %68 = vmatmul.f32.gmra.mxu0 %v20
  %v69 = vpop.f32.mrf.mxu0
  %v70 = vadd.f32 0.0, %v69
  %71 = vmatmul.f32.gmra.mxu0 %v21
  %v72 = vpop.f32.mrf.mxu0
  %v73 = vadd.f32 0.0, %v72
  %74 = vmatmul.f32.gmra.mxu0 %v22
  %v75 = vpop.f32.mrf.mxu0
  %v76 = vadd.f32 0.0, %v75
  %77 = vmatmul.f32.gmra.mxu0 %v23
  %v78 = vpop.f32.mrf.mxu0
  %v79 = vadd.f32 0.0, %v78
  %80 = vmatmul.f32.gmra.mxu0 %v24
  %v81 = vpop.f32.mrf.mxu0
  %v82 = vadd.f32 0.0, %v81
  %83 = vmatmul.f32.gmra.mxu0 %v25
  %v84 = vpop.f32.mrf.mxu0
  %v85 = vadd.f32 0.0, %v84
  %86 = vmatmul.f32.gmra.mxu0 %v26
  %v87 = vpop.f32.mrf.mxu0
  %v88 = vadd.f32 0.0, %v87
  %89 = vmatmul.f32.gmra.mxu0 %v27
  %v90 = vpop.f32.mrf.mxu0
  %v91 = vadd.f32 0.0, %v90
  %92 = vmatmul.f32.gmra.mxu0 %v28
  %v93 = vpop.f32.mrf.mxu0
  %v94 = vadd.f32 0.0, %v93
  %95 = vmatmul.f32.gmra.mxu0 %v29
  %v96 = vpop.f32.mrf.mxu0
  %v97 = vadd.f32 0.0, %v96
  %98 = vmatmul.f32.gmra.mxu0 %v30
  %v99 = vpop.f32.mrf.mxu0
  %v100 = vadd.f32 0.0, %v99
  %101 = vmatmul.f32.gmra.mxu0 %v31
  %v102 = vpop.f32.mrf.mxu0
  %v103 = vadd.f32 0.0, %v102
  %104 = vmatmul.f32.gmra.mxu0 %v32
  %v105 = vpop.f32.mrf.mxu0
  %v106 = vadd.f32 0.0, %v105
  %107 = vmatmul.f32.gmra.mxu0 %v33
  %v108 = vpop.f32.mrf.mxu0
  %v109 = vadd.f32 0.0, %v108
  %110 = vmatmul.f32.gmra.mxu0 %v34
  %v111 = vpop.f32.mrf.mxu0
  %v112 = vadd.f32 0.0, %v111
  %113 = vmatmul.f32.gmra.mxu0 %v35
  %v114 = vpop.f32.mrf.mxu0
  %v115 = vadd.f32 0.0, %v114
  %116 = vdwg.mxu0
  %v117 = vld [vmem:[%s2] sm:$0x1]
  %v119 = vperm.slane %v117, 0
  %v121 = vmul.f32 %v70, %v119
  %v122 = vmul.f32 %v73, %v119
  %v123 = vmul.f32 %v76, %v119
  %v124 = vmul.f32 %v79, %v119
  %v125 = vmul.f32 %v82, %v119
  %v126 = vmul.f32 %v85, %v119
  %v127 = vmul.f32 %v88, %v119
  %v128 = vmul.f32 %v91, %v119
  %v129 = vmul.f32 %v94, %v119
  %v130 = vmul.f32 %v97, %v119
  %v131 = vmul.f32 %v100, %v119
  %v132 = vmul.f32 %v103, %v119
  %v133 = vmul.f32 %v106, %v119
  %v134 = vmul.f32 %v109, %v119
  %v135 = vmul.f32 %v112, %v119
  %v136 = vmul.f32 %v115, %v119
  %v137 = vld [vmem:[%s3] sm:$0x1]
  %v139 = vperm.slane %v137, 0
  %v141 = vadd.f32 %v121, %v139
  %v142 = vadd.f32 %v122, %v139
  %v143 = vadd.f32 %v123, %v139
  %v144 = vadd.f32 %v124, %v139
  %v145 = vadd.f32 %v125, %v139
  %v146 = vadd.f32 %v126, %v139
  %v147 = vadd.f32 %v127, %v139
  %v148 = vadd.f32 %v128, %v139
  %v149 = vadd.f32 %v129, %v139
  %v150 = vadd.f32 %v130, %v139
  %v151 = vadd.f32 %v131, %v139
  %v152 = vadd.f32 %v132, %v139
  %v153 = vadd.f32 %v133, %v139
  %v154 = vadd.f32 %v134, %v139
  %v155 = vadd.f32 %v135, %v139
  %v156 = vadd.f32 %v136, %v139
  %v157 = vld [vmem:[%s4] sm:$0xff]
  %v158 = vld [vmem:[%s4 + $0x8] sm:$0xff]
  %v159 = vld [vmem:[%s4 + $0x10] sm:$0xff]
  %v160 = vld [vmem:[%s4 + $0x18] sm:$0xff]
  %v161 = vld [vmem:[%s4 + $0x20] sm:$0xff]
  %v162 = vld [vmem:[%s4 + $0x28] sm:$0xff]
  %v163 = vld [vmem:[%s4 + $0x30] sm:$0xff]
  %v164 = vld [vmem:[%s4 + $0x38] sm:$0xff]
  %v165 = vld [vmem:[%s4 + $0x40] sm:$0xff]
  %v166 = vld [vmem:[%s4 + $0x48] sm:$0xff]
  %v167 = vld [vmem:[%s4 + $0x50] sm:$0xff]
  %v168 = vld [vmem:[%s4 + $0x58] sm:$0xff]
  %v169 = vld [vmem:[%s4 + $0x60] sm:$0xff]
  %v170 = vld [vmem:[%s4 + $0x68] sm:$0xff]
  %v171 = vld [vmem:[%s4 + $0x70] sm:$0xff]
  %v172 = vld [vmem:[%s4 + $0x78] sm:$0xff]
  %v173 = vadd.f32 %v141, %v157
  %v174 = vadd.f32 %v142, %v158
  %v175 = vadd.f32 %v143, %v159
  %v176 = vadd.f32 %v144, %v160
  %v177 = vadd.f32 %v145, %v161
  %v178 = vadd.f32 %v146, %v162
  %v179 = vadd.f32 %v147, %v163
  %v180 = vadd.f32 %v148, %v164
  %v181 = vadd.f32 %v149, %v165
  %v182 = vadd.f32 %v150, %v166
  %v183 = vadd.f32 %v151, %v167
  %v184 = vadd.f32 %v152, %v168
  %v185 = vadd.f32 %v153, %v169
  %v186 = vadd.f32 %v154, %v170
  %v187 = vadd.f32 %v155, %v171
  %v188 = vadd.f32 %v156, %v172
  %189 = vst [vmem:[%s5] sm:$0xff] %v173
  %190 = vst [vmem:[%s5 + $0x8] sm:$0xff] %v174
  %191 = vst [vmem:[%s5 + $0x10] sm:$0xff] %v175
  %192 = vst [vmem:[%s5 + $0x18] sm:$0xff] %v176
  %193 = vst [vmem:[%s5 + $0x20] sm:$0xff] %v177
  %194 = vst [vmem:[%s5 + $0x28] sm:$0xff] %v178
  %195 = vst [vmem:[%s5 + $0x30] sm:$0xff] %v179
  %196 = vst [vmem:[%s5 + $0x38] sm:$0xff] %v180
  %197 = vst [vmem:[%s5 + $0x40] sm:$0xff] %v181
  %198 = vst [vmem:[%s5 + $0x48] sm:$0xff] %v182
  %199 = vst [vmem:[%s5 + $0x50] sm:$0xff] %v183
  %200 = vst [vmem:[%s5 + $0x58] sm:$0xff] %v184
  %201 = vst [vmem:[%s5 + $0x60] sm:$0xff] %v185
  %202 = vst [vmem:[%s5 + $0x68] sm:$0xff] %v186
  %203 = vst [vmem:[%s5 + $0x70] sm:$0xff] %v187
  %204 = vst [vmem:[%s5 + $0x78] sm:$0xff] %v188
  // Predicated region
  $region22: #{_lambda_.22} parent=0 // pred_check
    _
  $region23: #{_lambda_.22} parent=0 // pred_check_branch
    %206 = sbr.rel (0) target = $region25
  $region24: #{_lambda_.22} parent=0 // pred_region
    _
  $region25: #{_lambda_.22} parent=0 // pred_fallthru
    _
  // Predicated region
  $region26: #{_lambda_.22} parent=0 // pred_check
    _
  $region27: #{_lambda_.22} parent=0 // pred_check_branch
    %208 = sbr.rel (0) target = $region29
  $region28: #{_lambda_.22} parent=0 // pred_region
    _
  $region29: #{_lambda_.22} parent=0 // pred_fallthru
    _

// kernel: _lambda_.26
$region0: #{_lambda_.26}
  #allocation0 [shape = 'u32[]', space=smem, size = 0x4, offset = 0x4, fixed_abs, tag = 'smem constant byte address 0x4 - core index']
  #allocation1 [shape = 'u32[72,128]{1,0:T(1,128)}', space=vmem, size = 0x9000, scoped, tag = 'internal scratch']
  %s0 = inlined_call_operand.vmem [shape: f32[512,128], index: 0, kind: input, shape index: {}]
  %s1 = inlined_call_operand.vmem [shape: f32[512,128], index: 1, kind: input, shape index: {}]
  %s2 = inlined_call_operand.vmem [shape: f32[256,128], index: 2, kind: input, shape index: {}]
  %s3 = inlined_call_operand.vmem [shape: f32[1,128], index: 3, kind: input, shape index: {}]
  %s4 = inlined_call_operand.vmem [shape: f32[1,128], index: 4, kind: input, shape index: {}]
  %s5 = inlined_call_operand.vmem [shape: f32[512,128], index: 5, kind: output, shape index: {}]
  %s6 = sld [smem:[#allocation0]]
  $region53: #{_lambda_.26} parent=0
    _
  %s8 = ssub.s32 1, %s6
  %s9 = scalar_select 0, %s8, %s6
  loop: start=0, step=1, limit=4
  $region2: #{_lambda_.26} parent=0 // loop_pre_header
    _
  $region3: #{_lambda_.26} parent=0 // loop_header
    %s11 = sphi 0, %s15
    %p12 = scmp.ge.s32.totalorder %s11, 4
    %s21 = sphi 0, %s23
    %s24 = sphi 0, %s21
    %s25 = sphi 0, %s24
    %s41 = sphi 0, %s25
    %s47 = sphi 0, %s49
    %s50 = sphi 0, %s47
    %s51 = sphi 0, %s50
    %s67 = sphi 0, %s51
    %s71 = sphi 0, %s71
    %s73 = sphi 0, %s71
    %s74 = sphi 0, %s73
    %s88 = sphi 0, %s74
    %s92 = sphi 0, %s92
    %s94 = sphi 0, %s92
    %s95 = sphi 0, %s94
    %s109 = sphi 0, %s95
    %s113 = sphi 0, %s113
    %s115 = sphi 0, %s113
    %s116 = sphi 0, %s115
    %s130 = sphi 0, %s116
    %s136 = sphi 0, %s138
    %s139 = sphi 0, %s136
    %s140 = sphi 0, %s139
    %s156 = sphi 0, %s140
  $region4: #{_lambda_.26} parent=0 // loop_header_branch
    %14 = sbr.rel (%p12) target = $region8
  $region5: #{_lambda_.26} parent=0 // loop_body
    %s16 = ssub.s32 %s11, 1
    %s17 = ssub.s32 %s11, 2
    %s18 = sadd.s32 %s11, 1
    %s19 = ssub.s32 %s11, %s18
    %p20 = scmp.eq.s32.totalorder %s19, 0
    %s22 = sadd.s32 %s21, 1
    %s23 = scalar_select %p20, %s21, %s22
    %p26 = pneg %p20
    %p27 = scmp.eq.s32.totalorder %s11, 1
    %p28 = por %p26, %p27
    %p29 = scmp.ne.s32.totalorder %s21, %s24
    %p30 = scmp.eq.s32.totalorder %s11, 0
    %p31 = por %p29, %p30
    %p32 = scmp.ne.s32.totalorder %s21, %s24
    %p33 = scmp.eq.s32.totalorder %s16, 1
    %p34 = por %p32, %p33
    %p35 = scmp.ne.s32.totalorder %s24, %s25
    %p36 = scmp.eq.s32.totalorder %s16, 0
    %p37 = por %p35, %p36
    %p38 = scmp.ne.s32.totalorder %s24, %s25
    %p39 = scmp.eq.s32.totalorder %s17, 1
    %p40 = por %p38, %p39
    %p42 = scmp.ne.s32.totalorder %s25, %s41
    %p43 = scmp.eq.s32.totalorder %s17, 0
    %p44 = por %p42, %p43
    %s45 = ssub.s32 %s11, %s18
    %p46 = scmp.eq.s32.totalorder %s45, 0
    %s48 = sadd.s32 %s47, 1
    %s49 = scalar_select %p46, %s47, %s48
    %p52 = pneg %p46
    %p53 = scmp.eq.s32.totalorder %s11, 1
    %p54 = por %p52, %p53
    %p55 = scmp.ne.s32.totalorder %s47, %s50
    %p56 = scmp.eq.s32.totalorder %s11, 0
    %p57 = por %p55, %p56
    %p58 = scmp.ne.s32.totalorder %s47, %s50
    %p59 = scmp.eq.s32.totalorder %s16, 1
    %p60 = por %p58, %p59
    %p61 = scmp.ne.s32.totalorder %s50, %s51
    %p62 = scmp.eq.s32.totalorder %s16, 0
    %p63 = por %p61, %p62
    %p64 = scmp.ne.s32.totalorder %s50, %s51
    %p65 = scmp.eq.s32.totalorder %s17, 1
    %p66 = por %p64, %p65
    %p68 = scmp.ne.s32.totalorder %s51, %s67
    %p69 = scmp.eq.s32.totalorder %s17, 0
    %p70 = por %p68, %p69
    %s72 = sadd.s32 %s71, 1
    %p75 = scmp.eq.s32.totalorder %s11, 1
    %p76 = scmp.ne.s32.totalorder %s71, %s73
    %p77 = scmp.eq.s32.totalorder %s11, 0
    %p78 = por %p76, %p77
    %p79 = scmp.ne.s32.totalorder %s71, %s73
    %p80 = scmp.eq.s32.totalorder %s16, 1
    %p81 = por %p79, %p80
    %p82 = scmp.ne.s32.totalorder %s73, %s74
    %p83 = scmp.eq.s32.totalorder %s16, 0
    %p84 = por %p82, %p83
    %p85 = scmp.ne.s32.totalorder %s73, %s74
    %p86 = scmp.eq.s32.totalorder %s17, 1
    %p87 = por %p85, %p86
    %p89 = scmp.ne.s32.totalorder %s74, %s88
    %p90 = scmp.eq.s32.totalorder %s17, 0
    %p91 = por %p89, %p90
    %s93 = sadd.s32 %s92, 1
    %p96 = scmp.eq.s32.totalorder %s11, 1
    %p97 = scmp.ne.s32.totalorder %s92, %s94
    %p98 = scmp.eq.s32.totalorder %s11, 0
    %p99 = por %p97, %p98
    %p100 = scmp.ne.s32.totalorder %s92, %s94
    %p101 = scmp.eq.s32.totalorder %s16, 1
    %p102 = por %p100, %p101
    %p103 = scmp.ne.s32.totalorder %s94, %s95
    %p104 = scmp.eq.s32.totalorder %s16, 0
    %p105 = por %p103, %p104
    %p106 = scmp.ne.s32.totalorder %s94, %s95
    %p107 = scmp.eq.s32.totalorder %s17, 1
    %p108 = por %p106, %p107
    %p110 = scmp.ne.s32.totalorder %s95, %s109
    %p111 = scmp.eq.s32.totalorder %s17, 0
    %p112 = por %p110, %p111
    %s114 = sadd.s32 %s113, 1
    %p117 = scmp.eq.s32.totalorder %s11, 1
    %p118 = scmp.ne.s32.totalorder %s113, %s115
    %p119 = scmp.eq.s32.totalorder %s11, 0
    %p120 = por %p118, %p119
    %p121 = scmp.ne.s32.totalorder %s113, %s115
    %p122 = scmp.eq.s32.totalorder %s16, 1
    %p123 = por %p121, %p122
    %p124 = scmp.ne.s32.totalorder %s115, %s116
    %p125 = scmp.eq.s32.totalorder %s16, 0
    %p126 = por %p124, %p125
    %p127 = scmp.ne.s32.totalorder %s115, %s116
    %p128 = scmp.eq.s32.totalorder %s17, 1
    %p129 = por %p127, %p128
    %p131 = scmp.ne.s32.totalorder %s116, %s130
    %p132 = scmp.eq.s32.totalorder %s17, 0
    %p133 = por %p131, %p132
    %s134 = ssub.s32 %s11, %s18
    %p135 = scmp.eq.s32.totalorder %s134, 0
    %s137 = sadd.s32 %s136, 1
    %s138 = scalar_select %p135, %s136, %s137
    %p141 = pneg %p135
    %p142 = scmp.eq.s32.totalorder %s11, 1
    %p143 = por %p141, %p142
    %p144 = scmp.ne.s32.totalorder %s136, %s139
    %p145 = scmp.eq.s32.totalorder %s11, 0
    %p146 = por %p144, %p145
    %p147 = scmp.ne.s32.totalorder %s136, %s139
    %p148 = scmp.eq.s32.totalorder %s16, 1
    %p149 = por %p147, %p148
    %p150 = scmp.ne.s32.totalorder %s139, %s140
    %p151 = scmp.eq.s32.totalorder %s16, 0
    %p152 = por %p150, %p151
    %p153 = scmp.ne.s32.totalorder %s139, %s140
    %p154 = scmp.eq.s32.totalorder %s17, 1
    %p155 = por %p153, %p154
    %p157 = scmp.ne.s32.totalorder %s140, %s156
    %p158 = scmp.eq.s32.totalorder %s17, 0
    %p159 = por %p157, %p158
    %p160 = scmp.le.s32.totalorder 1, %s11
    %p161 = scmp.lt.s32.totalorder %s11, 3
    %p162 = pnand %p160, %p161
    %p163 = pneg %p162
    // Predicated region
    $region9: #{_lambda_.26} parent=5 // pred_check
      _
    $region10: #{_lambda_.26} parent=5 // pred_check_branch
      %165 = sbr.rel (%p162) target = $region12
    $region11: #{_lambda_.26} parent=5 // pred_region
      %s166 = ssub.s32 %s11, 1
      // Predicated region
      $region13: #{_lambda_.26} parent=11 // pred_check
        %p167 = pneg %p84
      $region14: #{_lambda_.26} parent=11 // pred_check_branch
        %169 = sbr.rel (%p167) target = $region16
      $region15: #{_lambda_.26} parent=11 // pred_region
        _
      $region16: #{_lambda_.26} parent=11 // pred_fallthru
        _
      // Predicated region
      $region17: #{_lambda_.26} parent=11 // pred_check
        %p170 = pneg %p105
      $region18: #{_lambda_.26} parent=11 // pred_check_branch
        %172 = sbr.rel (%p170) target = $region20
      $region19: #{_lambda_.26} parent=11 // pred_region
        _
      $region20: #{_lambda_.26} parent=11 // pred_fallthru
        _
      // Predicated region
      $region21: #{_lambda_.26} parent=11 // pred_check
        %p173 = pneg %p126
      $region22: #{_lambda_.26} parent=11 // pred_check_branch
        %175 = sbr.rel (%p173) target = $region24
      $region23: #{_lambda_.26} parent=11 // pred_region
        _
      $region24: #{_lambda_.26} parent=11 // pred_fallthru
        _
    $region12: #{_lambda_.26} parent=5 // pred_fallthru
      _
    %p176 = scmp.lt.s32.totalorder %s11, 2
    // Predicated region
    $region25: #{_lambda_.26} parent=5 // pred_check
      %p177 = pneg %p176
    $region26: #{_lambda_.26} parent=5 // pred_check_branch
      %179 = sbr.rel (%p177) target = $region28
    $region27: #{_lambda_.26} parent=5 // pred_region
      // Predicated region
      $region29: #{_lambda_.26} parent=27 // pred_check
        %p180 = pneg %p31
      $region30: #{_lambda_.26} parent=27 // pred_check_branch
        %182 = sbr.rel (%p180) target = $region32
      $region31: #{_lambda_.26} parent=27 // pred_region
        %s183 = smul.u32 32, %s11
        %p184 = scmp.lt.s32.totalorder %s183, 63
        %s185 = scalar_select %p184, %s183, 63
        %s186 = smul.addr %s185, 8
        %s187 = scalar_lea.vmem %s0, %s186
        %s188 = smul.u32 32, %s11
      $region32: #{_lambda_.26} parent=27 // pred_fallthru
        _
      // Predicated region
      $region33: #{_lambda_.26} parent=27 // pred_check
        %p189 = pneg %p57
      $region34: #{_lambda_.26} parent=27 // pred_check_branch
        %191 = sbr.rel (%p189) target = $region36
      $region35: #{_lambda_.26} parent=27 // pred_region
        %s192 = smul.u32 32, %s11
        %p193 = scmp.lt.s32.totalorder %s192, 63
        %s194 = scalar_select %p193, %s192, 63
        %s195 = smul.addr %s194, 8
        %s196 = scalar_lea.vmem %s1, %s195
        %s197 = smul.u32 32, %s11
      $region36: #{_lambda_.26} parent=27 // pred_fallthru
        _
    $region28: #{_lambda_.26} parent=5 // pred_fallthru
      _
    %p198 = scmp.le.s32.totalorder 1, %s11
    %p199 = scmp.lt.s32.totalorder %s11, 3
    %p200 = pnand %p198, %p199
    %p201 = pneg %p200
    // Predicated region
    $region37: #{_lambda_.26} parent=5 // pred_check
      _
    $region38: #{_lambda_.26} parent=5 // pred_check_branch
      %203 = sbr.rel (%p200) target = $region40
    $region39: #{_lambda_.26} parent=5 // pred_region
      %s204 = ssub.s32 %s11, 1
      %s205 = smul.u32 32, %s16
      %p206 = scmp.lt.s32.totalorder %s205, 63
      %s207 = scalar_select %p206, %s205, 63
      %s208 = smul.addr %s207, 8
      %s209 = scalar_lea.vmem %s0, %s208
      %p210 = pneg %p37
      %p211 = pneg %p34
      %s212 = smul.u32 32, %s16
      %p213 = scmp.lt.s32.totalorder %s212, 63
      %s214 = scalar_select %p213, %s212, 63
      %s215 = smul.addr %s214, 8
      %s216 = scalar_lea.vmem %s1, %s215
      %p217 = pneg %p63
      %p218 = pneg %p60
      %p219 = pneg %p84
      %p220 = pneg %p81
      %p221 = pneg %p105
      %p222 = pneg %p102
      %p223 = pneg %p126
      %p224 = pneg %p123
      %p225 = pneg %p152
      %p226 = pneg %p149
      %s227 = smul.u32 32, %s16
      %p228 = scmp.lt.s32.totalorder %s227, 63
      %s229 = scalar_select %p228, %s227, 63
      %s230 = smul.addr %s229, 8
      %s231 = scalar_lea.vmem %s5, %s230
      %s232 = smul.u32 32, %s16
      %p233 = scmp.lt.s32.totalorder %s232, 63
      %s234 = scalar_select %p233, %s232, 63
      %s235 = smul.addr %s234, 8
      %s236 = scalar_lea.vmem %s0, %s235
      %s237 = smul.u32 32, %s16
      %s238 = smul.u32 32, %s16
      %p239 = scmp.lt.s32.totalorder %s238, 63
      %s240 = scalar_select %p239, %s238, 63
      %s241 = smul.addr %s240, 8
      %s242 = scalar_lea.vmem %s1, %s241
      %s243 = smul.u32 32, %s16
      %s244 = smul.u32 32, %s16
      %p245 = scmp.lt.s32.totalorder %s244, 63
      %s246 = scalar_select %p245, %s244, 63
      %s247 = smul.addr %s246, 8
      %s248 = scalar_lea.vmem %s5, %s247
      %s249 = smul.u32 32, %s16
      %v250 = vld [vmem:[%s236] sm:$0xff]
      %v251 = vld [vmem:[%s236 + $0x8] sm:$0xff]
      %v252 = vld [vmem:[%s236 + $0x10] sm:$0xff]
      %v253 = vld [vmem:[%s236 + $0x18] sm:$0xff]
      %v254 = vld [vmem:[%s236 + $0x20] sm:$0xff]
      %v255 = vld [vmem:[%s236 + $0x28] sm:$0xff]
      %v256 = vld [vmem:[%s236 + $0x30] sm:$0xff]
      %v257 = vld [vmem:[%s236 + $0x38] sm:$0xff]
      %v258 = vld [vmem:[%s236 + $0x40] sm:$0xff]
      %v259 = vld [vmem:[%s236 + $0x48] sm:$0xff]
      %v260 = vld [vmem:[%s236 + $0x50] sm:$0xff]
      %v261 = vld [vmem:[%s236 + $0x58] sm:$0xff]
      %v262 = vld [vmem:[%s236 + $0x60] sm:$0xff]
      %v263 = vld [vmem:[%s236 + $0x68] sm:$0xff]
      %v264 = vld [vmem:[%s236 + $0x70] sm:$0xff]
      %v265 = vld [vmem:[%s236 + $0x78] sm:$0xff]
      %v266 = vld [vmem:[%s236 + $0x80] sm:$0xff]
      %v267 = vld [vmem:[%s236 + $0x88] sm:$0xff]
      %v268 = vld [vmem:[%s236 + $0x90] sm:$0xff]
      %v269 = vld [vmem:[%s236 + $0x98] sm:$0xff]
      %v270 = vld [vmem:[%s236 + $0xa0] sm:$0xff]
      %v271 = vld [vmem:[%s236 + $0xa8] sm:$0xff]
      %v272 = vld [vmem:[%s236 + $0xb0] sm:$0xff]
      %v273 = vld [vmem:[%s236 + $0xb8] sm:$0xff]
      %v274 = vld [vmem:[%s236 + $0xc0] sm:$0xff]
      %v275 = vld [vmem:[%s236 + $0xc8] sm:$0xff]
      %v276 = vld [vmem:[%s236 + $0xd0] sm:$0xff]
      %v277 = vld [vmem:[%s236 + $0xd8] sm:$0xff]
      %v278 = vld [vmem:[%s236 + $0xe0] sm:$0xff]
      %v279 = vld [vmem:[%s236 + $0xe8] sm:$0xff]
      %v280 = vld [vmem:[%s236 + $0xf0] sm:$0xff]
      %v281 = vld [vmem:[%s236 + $0xf8] sm:$0xff]
      %v282 = vld [vmem:[%s2] sm:$0xff]
      %v283 = vld [vmem:[%s2 + $0x8] sm:$0xff]
      %v284 = vld [vmem:[%s2 + $0x10] sm:$0xff]
      %v285 = vld [vmem:[%s2 + $0x18] sm:$0xff]
      %v286 = vld [vmem:[%s2 + $0x20] sm:$0xff]
      %v287 = vld [vmem:[%s2 + $0x28] sm:$0xff]
      %v288 = vld [vmem:[%s2 + $0x30] sm:$0xff]
      %v289 = vld [vmem:[%s2 + $0x38] sm:$0xff]
      %v290 = vld [vmem:[%s2 + $0x40] sm:$0xff]
      %v291 = vld [vmem:[%s2 + $0x48] sm:$0xff]
      %v292 = vld [vmem:[%s2 + $0x50] sm:$0xff]
      %v293 = vld [vmem:[%s2 + $0x58] sm:$0xff]
      %v294 = vld [vmem:[%s2 + $0x60] sm:$0xff]
      %v295 = vld [vmem:[%s2 + $0x68] sm:$0xff]
      %v296 = vld [vmem:[%s2 + $0x70] sm:$0xff]
      %v297 = vld [vmem:[%s2 + $0x78] sm:$0xff]
      %v298 = vld [vmem:[%s242] sm:$0xff]
      %v299 = vld [vmem:[%s242 + $0x8] sm:$0xff]
      %v300 = vld [vmem:[%s242 + $0x10] sm:$0xff]
      %v301 = vld [vmem:[%s242 + $0x18] sm:$0xff]
      %v302 = vld [vmem:[%s242 + $0x20] sm:$0xff]
      %v303 = vld [vmem:[%s242 + $0x28] sm:$0xff]
      %v304 = vld [vmem:[%s242 + $0x30] sm:$0xff]
      %v305 = vld [vmem:[%s242 + $0x38] sm:$0xff]
      %v306 = vld [vmem:[%s242 + $0x40] sm:$0xff]
      %v307 = vld [vmem:[%s242 + $0x48] sm:$0xff]
      %v308 = vld [vmem:[%s242 + $0x50] sm:$0xff]
      %v309 = vld [vmem:[%s242 + $0x58] sm:$0xff]
      %v310 = vld [vmem:[%s242 + $0x60] sm:$0xff]
      %v311 = vld [vmem:[%s242 + $0x68] sm:$0xff]
      %v312 = vld [vmem:[%s242 + $0x70] sm:$0xff]
      %v313 = vld [vmem:[%s242 + $0x78] sm:$0xff]
      %v314 = vld [vmem:[%s242 + $0x80] sm:$0xff]
      %v315 = vld [vmem:[%s242 + $0x88] sm:$0xff]
      %v316 = vld [vmem:[%s242 + $0x90] sm:$0xff]
      %v317 = vld [vmem:[%s242 + $0x98] sm:$0xff]
      %v318 = vld [vmem:[%s242 + $0xa0] sm:$0xff]
      %v319 = vld [vmem:[%s242 + $0xa8] sm:$0xff]
      %v320 = vld [vmem:[%s242 + $0xb0] sm:$0xff]
      %v321 = vld [vmem:[%s242 + $0xb8] sm:$0xff]
      %v322 = vld [vmem:[%s242 + $0xc0] sm:$0xff]
      %v323 = vld [vmem:[%s242 + $0xc8] sm:$0xff]
      %v324 = vld [vmem:[%s242 + $0xd0] sm:$0xff]
      %v325 = vld [vmem:[%s242 + $0xd8] sm:$0xff]
      %v326 = vld [vmem:[%s242 + $0xe0] sm:$0xff]
      %v327 = vld [vmem:[%s242 + $0xe8] sm:$0xff]
      %v328 = vld [vmem:[%s242 + $0xf0] sm:$0xff]
      %v329 = vld [vmem:[%s242 + $0xf8] sm:$0xff]
      %v330 = vld [vmem:[%s2 + $0x80] sm:$0xff]
      %v331 = vld [vmem:[%s2 + $0x88] sm:$0xff]
      %v332 = vld [vmem:[%s2 + $0x90] sm:$0xff]
      %v333 = vld [vmem:[%s2 + $0x98] sm:$0xff]
      %v334 = vld [vmem:[%s2 + $0xa0] sm:$0xff]
      %v335 = vld [vmem:[%s2 + $0xa8] sm:$0xff]
      %v336 = vld [vmem:[%s2 + $0xb0] sm:$0xff]
      %v337 = vld [vmem:[%s2 + $0xb8] sm:$0xff]
      %v338 = vld [vmem:[%s2 + $0xc0] sm:$0xff]
      %v339 = vld [vmem:[%s2 + $0xc8] sm:$0xff]
      %v340 = vld [vmem:[%s2 + $0xd0] sm:$0xff]
      %v341 = vld [vmem:[%s2 + $0xd8] sm:$0xff]
      %v342 = vld [vmem:[%s2 + $0xe0] sm:$0xff]
      %v343 = vld [vmem:[%s2 + $0xe8] sm:$0xff]
      %v344 = vld [vmem:[%s2 + $0xf0] sm:$0xff]
      %v345 = vld [vmem:[%s2 + $0xf8] sm:$0xff]
      %346 = vmatpush.msra.mxu0 %v345
      %347 = vmatpush.msra.mxu0 %v344
      %348 = vmatpush.msra.mxu0 %v343
      %349 = vmatpush.msra.mxu0 %v342
      %350 = vmatpush.msra.mxu0 %v341
      %351 = vmatpush.msra.mxu0 %v340
      %352 = vmatpush.msra.mxu0 %v339
      %353 = vmatpush.msra.mxu0 %v338
      %354 = vmatpush.msra.mxu0 %v337
      %355 = vmatpush.msra.mxu0 %v336
      %356 = vmatpush.msra.mxu0 %v335
      %357 = vmatpush.msra.mxu0 %v334
      %358 = vmatpush.msra.mxu0 %v333
      %359 = vmatpush.msra.mxu0 %v332
      %360 = vmatpush.msra.mxu0 %v331
      %361 = vmatpush.msra.mxu0 %v330
      %362 = vmatmul.f32.gmra.mxu0 %v298
      %v363 = vpop.f32.mrf.mxu0
      %v364 = vadd.f32 0.0, %v363
      %365 = vmatmul.f32.gmra.mxu0 %v299
      %v366 = vpop.f32.mrf.mxu0
      %v367 = vadd.f32 0.0, %v366
      %368 = vmatmul.f32.gmra.mxu0 %v300
      %v369 = vpop.f32.mrf.mxu0
      %v370 = vadd.f32 0.0, %v369
      %371 = vmatmul.f32.gmra.mxu0 %v301
      %v372 = vpop.f32.mrf.mxu0
      %v373 = vadd.f32 0.0, %v372
      %374 = vmatmul.f32.gmra.mxu0 %v302
      %v375 = vpop.f32.mrf.mxu0
      %v376 = vadd.f32 0.0, %v375
      %377 = vmatmul.f32.gmra.mxu0 %v303
      %v378 = vpop.f32.mrf.mxu0
      %v379 = vadd.f32 0.0, %v378
      %380 = vmatmul.f32.gmra.mxu0 %v304
      %v381 = vpop.f32.mrf.mxu0
      %v382 = vadd.f32 0.0, %v381
      %383 = vmatmul.f32.gmra.mxu0 %v305
      %v384 = vpop.f32.mrf.mxu0
      %v385 = vadd.f32 0.0, %v384
      %386 = vmatmul.f32.gmra.mxu0 %v306
      %v387 = vpop.f32.mrf.mxu0
      %v388 = vadd.f32 0.0, %v387
      %389 = vmatmul.f32.gmra.mxu0 %v307
      %v390 = vpop.f32.mrf.mxu0
      %v391 = vadd.f32 0.0, %v390
      %392 = vmatmul.f32.gmra.mxu0 %v308
      %v393 = vpop.f32.mrf.mxu0
      %v394 = vadd.f32 0.0, %v393
      %395 = vmatmul.f32.gmra.mxu0 %v309
      %v396 = vpop.f32.mrf.mxu0
      %v397 = vadd.f32 0.0, %v396
      %398 = vmatmul.f32.gmra.mxu0 %v310
      %v399 = vpop.f32.mrf.mxu0
      %v400 = vadd.f32 0.0, %v399
      %401 = vmatmul.f32.gmra.mxu0 %v311
      %v402 = vpop.f32.mrf.mxu0
      %v403 = vadd.f32 0.0, %v402
      %404 = vmatmul.f32.gmra.mxu0 %v312
      %v405 = vpop.f32.mrf.mxu0
      %v406 = vadd.f32 0.0, %v405
      %407 = vmatmul.f32.gmra.mxu0 %v313
      %v408 = vpop.f32.mrf.mxu0
      %v409 = vadd.f32 0.0, %v408
      %410 = vmatmul.f32.gmra.mxu0 %v314
      %v411 = vpop.f32.mrf.mxu0
      %v412 = vadd.f32 0.0, %v411
      %413 = vmatmul.f32.gmra.mxu0 %v315
      %v414 = vpop.f32.mrf.mxu0
      %v415 = vadd.f32 0.0, %v414
      %416 = vmatmul.f32.gmra.mxu0 %v316
      %v417 = vpop.f32.mrf.mxu0
      %v418 = vadd.f32 0.0, %v417
      %419 = vmatmul.f32.gmra.mxu0 %v317
      %v420 = vpop.f32.mrf.mxu0
      %v421 = vadd.f32 0.0, %v420
      %422 = vmatmul.f32.gmra.mxu0 %v318
      %v423 = vpop.f32.mrf.mxu0
      %v424 = vadd.f32 0.0, %v423
      %425 = vmatmul.f32.gmra.mxu0 %v319
      %v426 = vpop.f32.mrf.mxu0
      %v427 = vadd.f32 0.0, %v426
      %428 = vmatmul.f32.gmra.mxu0 %v320
      %v429 = vpop.f32.mrf.mxu0
      %v430 = vadd.f32 0.0, %v429
      %431 = vmatmul.f32.gmra.mxu0 %v321
      %v432 = vpop.f32.mrf.mxu0
      %v433 = vadd.f32 0.0, %v432
      %434 = vmatmul.f32.gmra.mxu0 %v322
      %v435 = vpop.f32.mrf.mxu0
      %v436 = vadd.f32 0.0, %v435
      %437 = vmatmul.f32.gmra.mxu0 %v323
      %v438 = vpop.f32.mrf.mxu0
      %v439 = vadd.f32 0.0, %v438
      %440 = vmatmul.f32.gmra.mxu0 %v324
      %v441 = vpop.f32.mrf.mxu0
      %v442 = vadd.f32 0.0, %v441
      %443 = vmatmul.f32.gmra.mxu0 %v325
      %v444 = vpop.f32.mrf.mxu0
      %v445 = vadd.f32 0.0, %v444
      %446 = vmatmul.f32.gmra.mxu0 %v326
      %v447 = vpop.f32.mrf.mxu0
      %v448 = vadd.f32 0.0, %v447
      %449 = vmatmul.f32.gmra.mxu0 %v327
      %v450 = vpop.f32.mrf.mxu0
      %v451 = vadd.f32 0.0, %v450
      %452 = vmatmul.f32.gmra.mxu0 %v328
      %v453 = vpop.f32.mrf.mxu0
      %v454 = vadd.f32 0.0, %v453
      %455 = vmatmul.f32.gmra.mxu0 %v329
      %v456 = vpop.f32.mrf.mxu0
      %v457 = vadd.f32 0.0, %v456
      %458 = vdwg.mxu0
      %459 = vmatpush.msra.mxu0 %v297
      %460 = vmatpush.msra.mxu0 %v296
      %461 = vmatpush.msra.mxu0 %v295
      %462 = vmatpush.msra.mxu0 %v294
      %463 = vmatpush.msra.mxu0 %v293
      %464 = vmatpush.msra.mxu0 %v292
      %465 = vmatpush.msra.mxu0 %v291
      %466 = vmatpush.msra.mxu0 %v290
      %467 = vmatpush.msra.mxu0 %v289
      %468 = vmatpush.msra.mxu0 %v288
      %469 = vmatpush.msra.mxu0 %v287
      %470 = vmatpush.msra.mxu0 %v286
      %471 = vmatpush.msra.mxu0 %v285
      %472 = vmatpush.msra.mxu0 %v284
      %473 = vmatpush.msra.mxu0 %v283
      %474 = vmatpush.msra.mxu0 %v282
      %475 = vmatmul.f32.gmra.mxu0 %v250
      %v476 = vpop.f32.mrf.mxu0
      %v477 = vadd.f32 %v364, %v476
      %478 = vmatmul.f32.gmra.mxu0 %v251
      %v479 = vpop.f32.mrf.mxu0
      %v480 = vadd.f32 %v367, %v479
      %481 = vmatmul.f32.gmra.mxu0 %v252
      %v482 = vpop.f32.mrf.mxu0
      %v483 = vadd.f32 %v370, %v482
      %484 = vmatmul.f32.gmra.mxu0 %v253
      %v485 = vpop.f32.mrf.mxu0
      %v486 = vadd.f32 %v373, %v485
      %487 = vmatmul.f32.gmra.mxu0 %v254
      %v488 = vpop.f32.mrf.mxu0
      %v489 = vadd.f32 %v376, %v488
      %490 = vmatmul.f32.gmra.mxu0 %v255
      %v491 = vpop.f32.mrf.mxu0
      %v492 = vadd.f32 %v379, %v491
      %493 = vmatmul.f32.gmra.mxu0 %v256
      %v494 = vpop.f32.mrf.mxu0
      %v495 = vadd.f32 %v382, %v494
      %496 = vmatmul.f32.gmra.mxu0 %v257
      %v497 = vpop.f32.mrf.mxu0
      %v498 = vadd.f32 %v385, %v497
      %499 = vmatmul.f32.gmra.mxu0 %v258
      %v500 = vpop.f32.mrf.mxu0
      %v501 = vadd.f32 %v388, %v500
      %502 = vmatmul.f32.gmra.mxu0 %v259
      %v503 = vpop.f32.mrf.mxu0
      %v504 = vadd.f32 %v391, %v503
      %505 = vmatmul.f32.gmra.mxu0 %v260
      %v506 = vpop.f32.mrf.mxu0
      %v507 = vadd.f32 %v394, %v506
      %508 = vmatmul.f32.gmra.mxu0 %v261
      %v509 = vpop.f32.mrf.mxu0
      %v510 = vadd.f32 %v397, %v509
      %511 = vmatmul.f32.gmra.mxu0 %v262
      %v512 = vpop.f32.mrf.mxu0
      %v513 = vadd.f32 %v400, %v512
      %514 = vmatmul.f32.gmra.mxu0 %v263
      %v515 = vpop.f32.mrf.mxu0
      %v516 = vadd.f32 %v403, %v515
      %517 = vmatmul.f32.gmra.mxu0 %v264
      %v518 = vpop.f32.mrf.mxu0
      %v519 = vadd.f32 %v406, %v518
      %520 = vmatmul.f32.gmra.mxu0 %v265
      %v521 = vpop.f32.mrf.mxu0
      %v522 = vadd.f32 %v409, %v521
      %523 = vmatmul.f32.gmra.mxu0 %v266
      %v524 = vpop.f32.mrf.mxu0
      %v525 = vadd.f32 %v412, %v524
      %526 = vmatmul.f32.gmra.mxu0 %v267
      %v527 = vpop.f32.mrf.mxu0
      %v528 = vadd.f32 %v415, %v527
      %529 = vmatmul.f32.gmra.mxu0 %v268
      %v530 = vpop.f32.mrf.mxu0
      %v531 = vadd.f32 %v418, %v530
      %532 = vmatmul.f32.gmra.mxu0 %v269
      %v533 = vpop.f32.mrf.mxu0
      %v534 = vadd.f32 %v421, %v533
      %535 = vmatmul.f32.gmra.mxu0 %v270
      %v536 = vpop.f32.mrf.mxu0
      %v537 = vadd.f32 %v424, %v536
      %538 = vmatmul.f32.gmra.mxu0 %v271
      %v539 = vpop.f32.mrf.mxu0
      %v540 = vadd.f32 %v427, %v539
      %541 = vmatmul.f32.gmra.mxu0 %v272
      %v542 = vpop.f32.mrf.mxu0
      %v543 = vadd.f32 %v430, %v542
      %544 = vmatmul.f32.gmra.mxu0 %v273
      %v545 = vpop.f32.mrf.mxu0
      %v546 = vadd.f32 %v433, %v545
      %547 = vmatmul.f32.gmra.mxu0 %v274
      %v548 = vpop.f32.mrf.mxu0
      %v549 = vadd.f32 %v436, %v548
      %550 = vmatmul.f32.gmra.mxu0 %v275
      %v551 = vpop.f32.mrf.mxu0
      %v552 = vadd.f32 %v439, %v551
      %553 = vmatmul.f32.gmra.mxu0 %v276
      %v554 = vpop.f32.mrf.mxu0
      %v555 = vadd.f32 %v442, %v554
      %556 = vmatmul.f32.gmra.mxu0 %v277
      %v557 = vpop.f32.mrf.mxu0
      %v558 = vadd.f32 %v445, %v557
      %559 = vmatmul.f32.gmra.mxu0 %v278
      %v560 = vpop.f32.mrf.mxu0
      %v561 = vadd.f32 %v448, %v560
      %562 = vmatmul.f32.gmra.mxu0 %v279
      %v563 = vpop.f32.mrf.mxu0
      %v564 = vadd.f32 %v451, %v563
      %565 = vmatmul.f32.gmra.mxu0 %v280
      %v566 = vpop.f32.mrf.mxu0
      %v567 = vadd.f32 %v454, %v566
      %568 = vmatmul.f32.gmra.mxu0 %v281
      %v569 = vpop.f32.mrf.mxu0
      %v570 = vadd.f32 %v457, %v569
      %571 = vdwg.mxu0
      %v572 = vld [vmem:[%s3] sm:$0x1]
      %v574 = vperm.slane %v572, 0
      %v576 = vmul.f32 %v477, %v574
      %v577 = vmul.f32 %v480, %v574
      %v578 = vmul.f32 %v483, %v574
      %v579 = vmul.f32 %v486, %v574
      %v580 = vmul.f32 %v489, %v574
      %v581 = vmul.f32 %v492, %v574
      %v582 = vmul.f32 %v495, %v574
      %v583 = vmul.f32 %v498, %v574
      %v584 = vmul.f32 %v501, %v574
      %v585 = vmul.f32 %v504, %v574
      %v586 = vmul.f32 %v507, %v574
      %v587 = vmul.f32 %v510, %v574
      %v588 = vmul.f32 %v513, %v574
      %v589 = vmul.f32 %v516, %v574
      %v590 = vmul.f32 %v519, %v574
      %v591 = vmul.f32 %v522, %v574
      %v592 = vmul.f32 %v525, %v574
      %v593 = vmul.f32 %v528, %v574
      %v594 = vmul.f32 %v531, %v574
      %v595 = vmul.f32 %v534, %v574
      %v596 = vmul.f32 %v537, %v574
      %v597 = vmul.f32 %v540, %v574
      %v598 = vmul.f32 %v543, %v574
      %v599 = vmul.f32 %v546, %v574
      %v600 = vmul.f32 %v549, %v574
      %v601 = vmul.f32 %v552, %v574
      %v602 = vmul.f32 %v555, %v574
      %v603 = vmul.f32 %v558, %v574
      %v604 = vmul.f32 %v561, %v574
      %v605 = vmul.f32 %v564, %v574
      %v606 = vmul.f32 %v567, %v574
      %v607 = vmul.f32 %v570, %v574
      %v608 = vld [vmem:[%s4] sm:$0x1]
      %v610 = vperm.slane %v608, 0
      %v612 = vadd.f32 %v576, %v610
      %v613 = vadd.f32 %v577, %v610
      %v614 = vadd.f32 %v578, %v610
      %v615 = vadd.f32 %v579, %v610
      %v616 = vadd.f32 %v580, %v610
      %v617 = vadd.f32 %v581, %v610
      %v618 = vadd.f32 %v582, %v610
      %v619 = vadd.f32 %v583, %v610
      %v620 = vadd.f32 %v584, %v610
      %v621 = vadd.f32 %v585, %v610
      %v622 = vadd.f32 %v586, %v610
      %v623 = vadd.f32 %v587, %v610
      %v624 = vadd.f32 %v588, %v610
      %v625 = vadd.f32 %v589, %v610
      %v626 = vadd.f32 %v590, %v610
      %v627 = vadd.f32 %v591, %v610
      %v628 = vadd.f32 %v592, %v610
      %v629 = vadd.f32 %v593, %v610
      %v630 = vadd.f32 %v594, %v610
      %v631 = vadd.f32 %v595, %v610
      %v632 = vadd.f32 %v596, %v610
      %v633 = vadd.f32 %v597, %v610
      %v634 = vadd.f32 %v598, %v610
      %v635 = vadd.f32 %v599, %v610
      %v636 = vadd.f32 %v600, %v610
      %v637 = vadd.f32 %v601, %v610
      %v638 = vadd.f32 %v602, %v610
      %v639 = vadd.f32 %v603, %v610
      %v640 = vadd.f32 %v604, %v610
      %v641 = vadd.f32 %v605, %v610
      %v642 = vadd.f32 %v606, %v610
      %v643 = vadd.f32 %v607, %v610
      %644 = vst [vmem:[%s248] sm:$0xff] %v612
      %645 = vst [vmem:[%s248 + $0x8] sm:$0xff] %v613
      %646 = vst [vmem:[%s248 + $0x10] sm:$0xff] %v614
      %647 = vst [vmem:[%s248 + $0x18] sm:$0xff] %v615
      %648 = vst [vmem:[%s248 + $0x20] sm:$0xff] %v616
      %649 = vst [vmem:[%s248 + $0x28] sm:$0xff] %v617
      %650 = vst [vmem:[%s248 + $0x30] sm:$0xff] %v618
      %651 = vst [vmem:[%s248 + $0x38] sm:$0xff] %v619
      %652 = vst [vmem:[%s248 + $0x40] sm:$0xff] %v620
      %653 = vst [vmem:[%s248 + $0x48] sm:$0xff] %v621
      %654 = vst [vmem:[%s248 + $0x50] sm:$0xff] %v622
      %655 = vst [vmem:[%s248 + $0x58] sm:$0xff] %v623
      %656 = vst [vmem:[%s248 + $0x60] sm:$0xff] %v624
      %657 = vst [vmem:[%s248 + $0x68] sm:$0xff] %v625
      %658 = vst [vmem:[%s248 + $0x70] sm:$0xff] %v626
      %659 = vst [vmem:[%s248 + $0x78] sm:$0xff] %v627
      %660 = vst [vmem:[%s248 + $0x80] sm:$0xff] %v628
      %661 = vst [vmem:[%s248 + $0x88] sm:$0xff] %v629
      %662 = vst [vmem:[%s248 + $0x90] sm:$0xff] %v630
      %663 = vst [vmem:[%s248 + $0x98] sm:$0xff] %v631
      %664 = vst [vmem:[%s248 + $0xa0] sm:$0xff] %v632
      %665 = vst [vmem:[%s248 + $0xa8] sm:$0xff] %v633
      %666 = vst [vmem:[%s248 + $0xb0] sm:$0xff] %v634
      %667 = vst [vmem:[%s248 + $0xb8] sm:$0xff] %v635
      %668 = vst [vmem:[%s248 + $0xc0] sm:$0xff] %v636
      %669 = vst [vmem:[%s248 + $0xc8] sm:$0xff] %v637
      %670 = vst [vmem:[%s248 + $0xd0] sm:$0xff] %v638
      %671 = vst [vmem:[%s248 + $0xd8] sm:$0xff] %v639
      %672 = vst [vmem:[%s248 + $0xe0] sm:$0xff] %v640
      %673 = vst [vmem:[%s248 + $0xe8] sm:$0xff] %v641
      %674 = vst [vmem:[%s248 + $0xf0] sm:$0xff] %v642
      %675 = vst [vmem:[%s248 + $0xf8] sm:$0xff] %v643
      %s676 = smul.u32 32, %s16
      %p677 = scmp.lt.s32.totalorder %s676, 63
      %s678 = scalar_select %p677, %s676, 63
      %s679 = smul.addr %s678, 8
      %s680 = scalar_lea.vmem %s5, %s679
      // Predicated region
      $region41: #{_lambda_.26} parent=39 // pred_check
        %p681 = pneg %p149
      $region42: #{_lambda_.26} parent=39 // pred_check_branch
        %683 = sbr.rel (%p681) target = $region44
      $region43: #{_lambda_.26} parent=39 // pred_region
        %s684 = smul.u32 32, %s16
      $region44: #{_lambda_.26} parent=39 // pred_fallthru
        _
    $region40: #{_lambda_.26} parent=5 // pred_fallthru
      _
    %p685 = scmp.le.s32.totalorder 2, %s11
    // Predicated region
    $region45: #{_lambda_.26} parent=5 // pred_check
      %p686 = pneg %p685
    $region46: #{_lambda_.26} parent=5 // pred_check_branch
      %688 = sbr.rel (%p686) target = $region48
    $region47: #{_lambda_.26} parent=5 // pred_region
      %s689 = ssub.s32 %s11, 2
      // Predicated region
      $region49: #{_lambda_.26} parent=47 // pred_check
        %p690 = pneg %p155
      $region50: #{_lambda_.26} parent=47 // pred_check_branch
        %692 = sbr.rel (%p690) target = $region52
      $region51: #{_lambda_.26} parent=47 // pred_region
        %s693 = smul.u32 32, %s17
        %p694 = scmp.lt.s32.totalorder %s693, 63
        %s695 = scalar_select %p694, %s693, 63
        %s696 = smul.addr %s695, 8
        %s697 = scalar_lea.vmem %s5, %s696
      $region52: #{_lambda_.26} parent=47 // pred_fallthru
        _
    $region48: #{_lambda_.26} parent=5 // pred_fallthru
      _
  $region6: #{_lambda_.26} parent=0 // loop_footer
    %s15 = sadd.s32 1, %s11
  $region7: #{_lambda_.26} parent=0 // loop_footer_branch
    %10 = sbr.rel target = $region3
  $region8: #{_lambda_.26} parent=0 // loop_exit
    _

// kernel: _lambda_.27
$region0: #{_lambda_.27}
  #allocation0 [shape = 'u32[]', space=smem, size = 0x4, offset = 0x4, fixed_abs, tag = 'smem constant byte address 0x4 - core index']
  #allocation1 [shape = 'u32[72,128]{1,0:T(1,128)}', space=vmem, size = 0x9000, scoped, tag = 'internal scratch']
  %s0 = inlined_call_operand.vmem [shape: f32[3,7,512], index: 0, kind: input, shape index: {}]
  %s1 = inlined_call_operand.vmem [shape: f32[1,1,512], index: 1, kind: input, shape index: {}]
  %s2 = inlined_call_operand.vmem [shape: f32[1,1,512], index: 2, kind: input, shape index: {}]
  %s3 = inlined_call_operand.vmem [shape: f32[3,1,1], index: 3, kind: input, shape index: {}]
  %s4 = inlined_call_operand.vmem [shape: f32[3,1,1], index: 4, kind: input, shape index: {}]
  %s5 = inlined_call_operand.vmem [shape: f32[3,7,512], index: 5, kind: output, shape index: {}]
  %s6 = sld [smem:[#allocation0]]
  $region95: #{_lambda_.27} parent=0
    _
  %s8 = ssub.s32 1, %s6
  %s9 = scalar_select 0, %s8, %s6
  $region1: #{_lambda_.27} parent=0
    #allocation2 [shape = 'u8[49152]{0}', space=vmem, size = 0xc000, scoped, tag = 'input window, operand 0']
    #allocation3 [shape = 'u8[49152]{0}', space=vmem, size = 0xc000, scoped, tag = 'output window, operand 0']
    loop: start=0, step=1, limit=4
    $region2: #{_lambda_.27} parent=1 // loop_pre_header
      _
    $region3: #{_lambda_.27} parent=1 // loop_header
      %s11 = sphi 0, %s15
      %p12 = scmp.ge.s32.totalorder %s11, 4
      %s21 = sphi 0, %s23
      %s24 = sphi 0, %s21
      %s25 = sphi 0, %s24
      %s41 = sphi 0, %s25
      %s47 = sphi 0, %s49
      %s50 = sphi 0, %s47
      %s51 = sphi 0, %s50
      %s67 = sphi 0, %s51
      %s73 = sphi 0, %s75
      %s76 = sphi 0, %s73
      %s77 = sphi 0, %s76
      %s93 = sphi 0, %s77
      %s97 = sphi 0, %s97
      %s99 = sphi 0, %s97
      %s100 = sphi 0, %s99
      %s114 = sphi 0, %s100
      %s118 = sphi 0, %s118
      %s120 = sphi 0, %s118
      %s121 = sphi 0, %s120
      %s135 = sphi 0, %s121
      %s141 = sphi 0, %s143
      %s144 = sphi 0, %s141
      %s145 = sphi 0, %s144
      %s161 = sphi 0, %s145
    $region4: #{_lambda_.27} parent=1 // loop_header_branch
      %14 = sbr.rel (%p12) target = $region8
    $region5: #{_lambda_.27} parent=1 // loop_body
      %s16 = ssub.s32 %s11, 1
      %s17 = ssub.s32 %s11, 2
      %s18 = sadd.s32 %s11, 1
      %s19 = ssub.s32 %s11, %s18
      %p20 = scmp.eq.s32.totalorder %s19, 0
      %s22 = sadd.s32 %s21, 1
      %s23 = scalar_select %p20, %s21, %s22
      %p26 = pneg %p20
      %p27 = scmp.eq.s32.totalorder %s11, 1
      %p28 = por %p26, %p27
      %p29 = scmp.ne.s32.totalorder %s21, %s24
      %p30 = scmp.eq.s32.totalorder %s11, 0
      %p31 = por %p29, %p30
      %p32 = scmp.ne.s32.totalorder %s21, %s24
      %p33 = scmp.eq.s32.totalorder %s16, 1
      %p34 = por %p32, %p33
      %p35 = scmp.ne.s32.totalorder %s24, %s25
      %p36 = scmp.eq.s32.totalorder %s16, 0
      %p37 = por %p35, %p36
      %p38 = scmp.ne.s32.totalorder %s24, %s25
      %p39 = scmp.eq.s32.totalorder %s17, 1
      %p40 = por %p38, %p39
      %p42 = scmp.ne.s32.totalorder %s25, %s41
      %p43 = scmp.eq.s32.totalorder %s17, 0
      %p44 = por %p42, %p43
      %s45 = ssub.s32 %s11, %s18
      %p46 = scmp.eq.s32.totalorder %s45, 0
      %s48 = sadd.s32 %s47, 1
      %s49 = scalar_select %p46, %s47, %s48
      %p52 = pneg %p46
      %p53 = scmp.eq.s32.totalorder %s11, 1
      %p54 = por %p52, %p53
      %p55 = scmp.ne.s32.totalorder %s47, %s50
      %p56 = scmp.eq.s32.totalorder %s11, 0
      %p57 = por %p55, %p56
      %p58 = scmp.ne.s32.totalorder %s47, %s50
      %p59 = scmp.eq.s32.totalorder %s16, 1
      %p60 = por %p58, %p59
      %p61 = scmp.ne.s32.totalorder %s50, %s51
      %p62 = scmp.eq.s32.totalorder %s16, 0
      %p63 = por %p61, %p62
      %p64 = scmp.ne.s32.totalorder %s50, %s51
      %p65 = scmp.eq.s32.totalorder %s17, 1
      %p66 = por %p64, %p65
      %p68 = scmp.ne.s32.totalorder %s51, %s67
      %p69 = scmp.eq.s32.totalorder %s17, 0
      %p70 = por %p68, %p69
      %s71 = ssub.s32 %s11, %s18
      %p72 = scmp.eq.s32.totalorder %s71, 0
      %s74 = sadd.s32 %s73, 1
      %s75 = scalar_select %p72, %s73, %s74
      %p78 = pneg %p72
      %p79 = scmp.eq.s32.totalorder %s11, 1
      %p80 = por %p78, %p79
      %p81 = scmp.ne.s32.totalorder %s73, %s76
      %p82 = scmp.eq.s32.totalorder %s11, 0
      %p83 = por %p81, %p82
      %p84 = scmp.ne.s32.totalorder %s73, %s76
      %p85 = scmp.eq.s32.totalorder %s16, 1
      %p86 = por %p84, %p85
      %p87 = scmp.ne.s32.totalorder %s76, %s77
      %p88 = scmp.eq.s32.totalorder %s16, 0
      %p89 = por %p87, %p88
      %p90 = scmp.ne.s32.totalorder %s76, %s77
      %p91 = scmp.eq.s32.totalorder %s17, 1
      %p92 = por %p90, %p91
      %p94 = scmp.ne.s32.totalorder %s77, %s93
      %p95 = scmp.eq.s32.totalorder %s17, 0
      %p96 = por %p94, %p95
      %s98 = sadd.s32 %s97, 1
      %p101 = scmp.eq.s32.totalorder %s11, 1
      %p102 = scmp.ne.s32.totalorder %s97, %s99
      %p103 = scmp.eq.s32.totalorder %s11, 0
      %p104 = por %p102, %p103
      %p105 = scmp.ne.s32.totalorder %s97, %s99
      %p106 = scmp.eq.s32.totalorder %s16, 1
      %p107 = por %p105, %p106
      %p108 = scmp.ne.s32.totalorder %s99, %s100
      %p109 = scmp.eq.s32.totalorder %s16, 0
      %p110 = por %p108, %p109
      %p111 = scmp.ne.s32.totalorder %s99, %s100
      %p112 = scmp.eq.s32.totalorder %s17, 1
      %p113 = por %p111, %p112
      %p115 = scmp.ne.s32.totalorder %s100, %s114
      %p116 = scmp.eq.s32.totalorder %s17, 0
      %p117 = por %p115, %p116
      %s119 = sadd.s32 %s118, 1
      %p122 = scmp.eq.s32.totalorder %s11, 1
      %p123 = scmp.ne.s32.totalorder %s118, %s120
      %p124 = scmp.eq.s32.totalorder %s11, 0
      %p125 = por %p123, %p124
      %p126 = scmp.ne.s32.totalorder %s118, %s120
      %p127 = scmp.eq.s32.totalorder %s16, 1
      %p128 = por %p126, %p127
      %p129 = scmp.ne.s32.totalorder %s120, %s121
      %p130 = scmp.eq.s32.totalorder %s16, 0
      %p131 = por %p129, %p130
      %p132 = scmp.ne.s32.totalorder %s120, %s121
      %p133 = scmp.eq.s32.totalorder %s17, 1
      %p134 = por %p132, %p133
      %p136 = scmp.ne.s32.totalorder %s121, %s135
      %p137 = scmp.eq.s32.totalorder %s17, 0
      %p138 = por %p136, %p137
      %s139 = ssub.s32 %s11, %s18
      %p140 = scmp.eq.s32.totalorder %s139, 0
      %s142 = sadd.s32 %s141, 1
      %s143 = scalar_select %p140, %s141, %s142
      %p146 = pneg %p140
      %p147 = scmp.eq.s32.totalorder %s11, 1
      %p148 = por %p146, %p147
      %p149 = scmp.ne.s32.totalorder %s141, %s144
      %p150 = scmp.eq.s32.totalorder %s11, 0
      %p151 = por %p149, %p150
      %p152 = scmp.ne.s32.totalorder %s141, %s144
      %p153 = scmp.eq.s32.totalorder %s16, 1
      %p154 = por %p152, %p153
      %p155 = scmp.ne.s32.totalorder %s144, %s145
      %p156 = scmp.eq.s32.totalorder %s16, 0
      %p157 = por %p155, %p156
      %p158 = scmp.ne.s32.totalorder %s144, %s145
      %p159 = scmp.eq.s32.totalorder %s17, 1
      %p160 = por %p158, %p159
      %p162 = scmp.ne.s32.totalorder %s145, %s161
      %p163 = scmp.eq.s32.totalorder %s17, 0
      %p164 = por %p162, %p163
      %p165 = scmp.le.s32.totalorder 1, %s11
      %p166 = scmp.lt.s32.totalorder %s11, 3
      %p167 = pnand %p165, %p166
      %p168 = pneg %p167
      // Predicated region
      $region9: #{_lambda_.27} parent=5 // pred_check
        _
      $region10: #{_lambda_.27} parent=5 // pred_check_branch
        %170 = sbr.rel (%p167) target = $region12
      $region11: #{_lambda_.27} parent=5 // pred_region
        %s171 = ssub.s32 %s11, 1
        // Predicated region
        $region13: #{_lambda_.27} parent=11 // pred_check
          %p172 = pneg %p110
        $region14: #{_lambda_.27} parent=11 // pred_check_branch
          %174 = sbr.rel (%p172) target = $region16
        $region15: #{_lambda_.27} parent=11 // pred_region
          _
        $region16: #{_lambda_.27} parent=11 // pred_fallthru
          _
        // Predicated region
        $region17: #{_lambda_.27} parent=11 // pred_check
          %p175 = pneg %p131
        $region18: #{_lambda_.27} parent=11 // pred_check_branch
          %177 = sbr.rel (%p175) target = $region20
        $region19: #{_lambda_.27} parent=11 // pred_region
          _
        $region20: #{_lambda_.27} parent=11 // pred_fallthru
          _
      $region12: #{_lambda_.27} parent=5 // pred_fallthru
        _
      %p178 = scmp.lt.s32.totalorder %s11, 2
      // Predicated region
      $region21: #{_lambda_.27} parent=5 // pred_check
        %p179 = pneg %p178
      $region22: #{_lambda_.27} parent=5 // pred_check_branch
        %181 = sbr.rel (%p179) target = $region24
      $region23: #{_lambda_.27} parent=5 // pred_region
        // Predicated region
        $region25: #{_lambda_.27} parent=23 // pred_check
          %p182 = pneg %p31
        $region26: #{_lambda_.27} parent=23 // pred_check_branch
          %184 = sbr.rel (%p182) target = $region28
        $region27: #{_lambda_.27} parent=23 // pred_region
          %s185 = sand.u32 %s21, 1
          %s186 = sand.u32 %s21, 1
          %s187 = smul.addr %s186, 48
          %s188 = scalar_lea.vmem [#allocation2], %s187
          %s189 = smul.u32 2, %s11
          %s190 = smul.addr %s189, 8
          %s191 = scalar_lea.vmem %s0, %s190
          // Predicated region
          $region29: #{_lambda_.27} parent=27 // pred_check
            _
          $region30: #{_lambda_.27} parent=27 // pred_check_branch
            %193 = sbr.rel (0) target = $region32
          $region31: #{_lambda_.27} parent=27 // pred_region
            // Predicated region
            $region33: #{_lambda_.27} parent=31 // pred_check
              _
            $region34: #{_lambda_.27} parent=31 // pred_check_branch
              %195 = sbr.rel (0) target = $region36
            $region35: #{_lambda_.27} parent=31 // pred_region
              loop: start=0, step=1, limit=1
              $region37: #{_lambda_.27} parent=35 // loop_pre_header
                _
              $region38: #{_lambda_.27} parent=35 // loop_header
                %s197 = sphi 0, %s201
                %p198 = scmp.ge.s32.totalorder %s197, 1
                %s202 = sphi %s191, %s191
                %s203 = sphi %s188, %s188
              $region39: #{_lambda_.27} parent=35 // loop_header_branch
                %200 = sbr.rel (%p198) target = $region43
              $region40: #{_lambda_.27} parent=35 // loop_body
                %v204 = vld [vmem:[%s202] sm:$0xff]
                %205 = vst [vmem:[%s203] sm:$0xff] %v204
                %v206 = vld [vmem:[%s202 + $0x8] sm:$0xff]
                %207 = vst [vmem:[%s203 + $0x8] sm:$0xff] %v206
                %v208 = vld [vmem:[%s202 + $0x20] sm:$0xff]
                %209 = vst [vmem:[%s203 + $0x10] sm:$0xff] %v208
                %v210 = vld [vmem:[%s202 + $0x28] sm:$0xff]
                %211 = vst [vmem:[%s203 + $0x18] sm:$0xff] %v210
                %v212 = vld [vmem:[%s202 + $0x40] sm:$0xff]
                %213 = vst [vmem:[%s203 + $0x20] sm:$0xff] %v212
                %v214 = vld [vmem:[%s202 + $0x48] sm:$0xff]
                %215 = vst [vmem:[%s203 + $0x28] sm:$0xff] %v214
              $region41: #{_lambda_.27} parent=35 // loop_footer
                %s201 = sadd.s32 1, %s197
              $region42: #{_lambda_.27} parent=35 // loop_footer_branch
                %196 = sbr.rel target = $region38
              $region43: #{_lambda_.27} parent=35 // loop_exit
                _
            $region36: #{_lambda_.27} parent=31 // pred_fallthru
              _
            // Predicated region
            $region44: #{_lambda_.27} parent=31 // pred_check
              _
            $region45: #{_lambda_.27} parent=31 // pred_check_branch
              %217 = sbr.rel target = $region47
            $region46: #{_lambda_.27} parent=31 // pred_region
              _
            $region47: #{_lambda_.27} parent=31 // pred_fallthru
              _
          $region32: #{_lambda_.27} parent=27 // pred_fallthru
            _
          %218 = vnop
        $region28: #{_lambda_.27} parent=23 // pred_fallthru
          _
        // Predicated region
        $region48: #{_lambda_.27} parent=23 // pred_check
          %p219 = pneg %p57
        $region49: #{_lambda_.27} parent=23 // pred_check_branch
          %221 = sbr.rel (%p219) target = $region51
        $region50: #{_lambda_.27} parent=23 // pred_region
          %s222 = smul.u32 2, %s11
          %p223 = scmp.lt.s32.totalorder %s222, 3
          %s224 = scalar_select %p223, %s222, 3
          %s225 = scalar_lea.vmem %s1, %s224
          %s226 = smul.u32 2, %s11
        $region51: #{_lambda_.27} parent=23 // pred_fallthru
          _
        // Predicated region
        $region52: #{_lambda_.27} parent=23 // pred_check
          %p227 = pneg %p83
        $region53: #{_lambda_.27} parent=23 // pred_check_branch
          %229 = sbr.rel (%p227) target = $region55
        $region54: #{_lambda_.27} parent=23 // pred_region
          %s230 = smul.u32 2, %s11
          %p231 = scmp.lt.s32.totalorder %s230, 3
          %s232 = scalar_select %p231, %s230, 3
          %s233 = scalar_lea.vmem %s2, %s232
          %s234 = smul.u32 2, %s11
        $region55: #{_lambda_.27} parent=23 // pred_fallthru
          _
      $region24: #{_lambda_.27} parent=5 // pred_fallthru
        _
      %p235 = scmp.le.s32.totalorder 1, %s11
      %p236 = scmp.lt.s32.totalorder %s11, 3
      %p237 = pnand %p235, %p236
      %p238 = pneg %p237
      // Predicated region
      $region56: #{_lambda_.27} parent=5 // pred_check
        _
      $region57: #{_lambda_.27} parent=5 // pred_check_branch
        %240 = sbr.rel (%p237) target = $region59
      $region58: #{_lambda_.27} parent=5 // pred_region
        %s241 = ssub.s32 %s11, 1
        %s242 = sand.u32 %s24, 1
        %s243 = sand.u32 %s24, 1
        %s244 = smul.addr %s243, 48
        %s245 = scalar_lea.vmem [#allocation2], %s244
        // Predicated region
        $region60: #{_lambda_.27} parent=58 // pred_check
          %p246 = pneg %p37
        $region61: #{_lambda_.27} parent=58 // pred_check_branch
          %248 = sbr.rel (%p246) target = $region63
        $region62: #{_lambda_.27} parent=58 // pred_region
          _
        $region63: #{_lambda_.27} parent=58 // pred_fallthru
          _
        %s249 = sand.u32 %s24, 1
        %s250 = sand.u32 %s24, 1
        %s251 = smul.addr %s250, 48
        %s252 = scalar_lea.vmem [#allocation2], %s251
        %p253 = pneg %p37
        %p254 = pneg %p34
        %s255 = smul.u32 2, %s16
        %p256 = scmp.lt.s32.totalorder %s255, 3
        %s257 = scalar_select %p256, %s255, 3
        %s258 = scalar_lea.vmem %s1, %s257
        %p259 = pneg %p63
        %p260 = pneg %p60
        %s261 = smul.u32 2, %s16
        %p262 = scmp.lt.s32.totalorder %s261, 3
        %s263 = scalar_select %p262, %s261, 3
        %s264 = scalar_lea.vmem %s2, %s263
        %p265 = pneg %p89
        %p266 = pneg %p86
        %p267 = pneg %p110
        %p268 = pneg %p107
        %p269 = pneg %p131
        %p270 = pneg %p128
        %p271 = pneg %p157
        %p272 = pneg %p154
        %s273 = sand.u32 %s144, 1
        %s274 = sand.u32 %s144, 1
        %s275 = smul.addr %s274, 48
        %s276 = scalar_lea.vmem [#allocation3], %s275
        %s277 = smul.u32 2, %s16
        %s278 = smul.u32 2, %s16
        %p279 = scmp.lt.s32.totalorder %s278, 3
        %s280 = scalar_select %p279, %s278, 3
        %s281 = scalar_lea.vmem %s1, %s280
        %s282 = smul.u32 2, %s16
        %s283 = smul.u32 2, %s16
        %p284 = scmp.lt.s32.totalorder %s283, 3
        %s285 = scalar_select %p284, %s283, 3
        %s286 = scalar_lea.vmem %s2, %s285
        %s287 = smul.u32 2, %s16
        %s288 = smul.u32 2, %s16
        %v289 = vld [vmem:[%s245] sm:$0x7f]
        %v290 = vld [vmem:[%s245 + $0x8] sm:$0x7f]
        %v291 = vld [vmem:[%s245 + $0x10] sm:$0x7f]
        %v292 = vld [vmem:[%s245 + $0x18] sm:$0x7f]
        %v293 = vld [vmem:[%s245 + $0x20] sm:$0x7f]
        %v294 = vld [vmem:[%s245 + $0x28] sm:$0x7f]
        %v295 = vsub.f32 0.0, %v289
        %v296 = vsub.f32 0.0, %v290
        %v297 = vsub.f32 0.0, %v291
        %v298 = vsub.f32 0.0, %v292
        %v299 = vsub.f32 0.0, %v293
        %v300 = vsub.f32 0.0, %v294
        %v301 = vmul.f32 %v295, 1.442695
        %v302 = vpow.pop %v301
        %v303 = vmul.f32 %v296, 1.442695
        %v304 = vpow.pop %v303
        %v305 = vmul.f32 %v297, 1.442695
        %v306 = vpow.pop %v305
        %v307 = vmul.f32 %v298, 1.442695
        %v308 = vpow.pop %v307
        %v309 = vmul.f32 %v299, 1.442695
        %v310 = vpow.pop %v309
        %v311 = vmul.f32 %v300, 1.442695
        %v312 = vpow.pop %v311
        %v313 = vadd.f32 %v302, 1.0
        %v314 = vadd.f32 %v304, 1.0
        %v315 = vadd.f32 %v306, 1.0
        %v316 = vadd.f32 %v308, 1.0
        %v317 = vadd.f32 %v310, 1.0
        %v318 = vadd.f32 %v312, 1.0
        %v319 = vrcp.pop %v313
        %v320 = vmul.f32 %v313, %v319
        %v321 = vsub.f32 1.0, %v320
        %v322 = vmul.f32 %v319, %v321
        %v323 = vadd.f32 %v319, %v322
        %vm324 = vweird.f32 %v313
        %vm325 = vweird.f32 %v319
        %vm326 = vmor %vm324, %vm325
        %v327 = vsel %vm326, %v319, %v323
        %v328 = vand.u32 2147483647, %v313
        %vm329 = vcmp.eq.f32.partialorder %v328, 8.507059e+37
        %v330 = vand.u32 %v313, 2147483648
        %v331 = vor.u32 1.1754944e-38, %v330
        %v332 = vsel %vm329, %v331, %v327
        %v333 = vmul.f32 1.0, %v332
        %v334 = vrcp.pop %v314
        %v335 = vmul.f32 %v314, %v334
        %v336 = vsub.f32 1.0, %v335
        %v337 = vmul.f32 %v334, %v336
        %v338 = vadd.f32 %v334, %v337
        %vm339 = vweird.f32 %v314
        %vm340 = vweird.f32 %v334
        %vm341 = vmor %vm339, %vm340
        %v342 = vsel %vm341, %v334, %v338
        %v343 = vand.u32 2147483647, %v314
        %vm344 = vcmp.eq.f32.partialorder %v343, 8.507059e+37
        %v345 = vand.u32 %v314, 2147483648
        %v346 = vor.u32 1.1754944e-38, %v345
        %v347 = vsel %vm344, %v346, %v342
        %v348 = vmul.f32 1.0, %v347
        %v349 = vrcp.pop %v315
        %v350 = vmul.f32 %v315, %v349
        %v351 = vsub.f32 1.0, %v350
        %v352 = vmul.f32 %v349, %v351
        %v353 = vadd.f32 %v349, %v352
        %vm354 = vweird.f32 %v315
        %vm355 = vweird.f32 %v349
        %vm356 = vmor %vm354, %vm355
        %v357 = vsel %vm356, %v349, %v353
        %v358 = vand.u32 2147483647, %v315
        %vm359 = vcmp.eq.f32.partialorder %v358, 8.507059e+37
        %v360 = vand.u32 %v315, 2147483648
        %v361 = vor.u32 1.1754944e-38, %v360
        %v362 = vsel %vm359, %v361, %v357
        %v363 = vmul.f32 1.0, %v362
        %v364 = vrcp.pop %v316
        %v365 = vmul.f32 %v316, %v364
        %v366 = vsub.f32 1.0, %v365
        %v367 = vmul.f32 %v364, %v366
        %v368 = vadd.f32 %v364, %v367
        %vm369 = vweird.f32 %v316
        %vm370 = vweird.f32 %v364
        %vm371 = vmor %vm369, %vm370
        %v372 = vsel %vm371, %v364, %v368
        %v373 = vand.u32 2147483647, %v316
        %vm374 = vcmp.eq.f32.partialorder %v373, 8.507059e+37
        %v375 = vand.u32 %v316, 2147483648
        %v376 = vor.u32 1.1754944e-38, %v375
        %v377 = vsel %vm374, %v376, %v372
        %v378 = vmul.f32 1.0, %v377
        %v379 = vrcp.pop %v317
        %v380 = vmul.f32 %v317, %v379
        %v381 = vsub.f32 1.0, %v380
        %v382 = vmul.f32 %v379, %v381
        %v383 = vadd.f32 %v379, %v382
        %vm384 = vweird.f32 %v317
        %vm385 = vweird.f32 %v379
        %vm386 = vmor %vm384, %vm385
        %v387 = vsel %vm386, %v379, %v383
        %v388 = vand.u32 2147483647, %v317
        %vm389 = vcmp.eq.f32.partialorder %v388, 8.507059e+37
        %v390 = vand.u32 %v317, 2147483648
        %v391 = vor.u32 1.1754944e-38, %v390
        %v392 = vsel %vm389, %v391, %v387
        %v393 = vmul.f32 1.0, %v392
        %v394 = vrcp.pop %v318
        %v395 = vmul.f32 %v318, %v394
        %v396 = vsub.f32 1.0, %v395
        %v397 = vmul.f32 %v394, %v396
        %v398 = vadd.f32 %v394, %v397
        %vm399 = vweird.f32 %v318
        %vm400 = vweird.f32 %v394
        %vm401 = vmor %vm399, %vm400
        %v402 = vsel %vm401, %v394, %v398
        %v403 = vand.u32 2147483647, %v318
        %vm404 = vcmp.eq.f32.partialorder %v403, 8.507059e+37
        %v405 = vand.u32 %v318, 2147483648
        %v406 = vor.u32 1.1754944e-38, %v405
        %v407 = vsel %vm404, %v406, %v402
        %v408 = vmul.f32 1.0, %v407
        %vm409 = vcmask 1046528
        %v410 = vsel %vm409, %v289, -inf
        %v411 = vsel %vm409, %v291, -inf
        %v412 = vsel %vm409, %v293, -inf
        %v413 = vmax.f32 %v410, %v412
        %v414 = vmax.f32 %v413, %v411
        %v415 = vsel %vm409, %v290, -inf
        %v416 = vsel %vm409, %v292, -inf
        %v417 = vsel %vm409, %v294, -inf
        %v418 = vmax.f32 %v415, %v417
        %v419 = vmax.f32 %v418, %v416
        %v420 = vsub.f32 %v289, %v414
        %v421 = vsub.f32 %v290, %v419
        %v422 = vsub.f32 %v291, %v414
        %v423 = vsub.f32 %v292, %v419
        %v424 = vsub.f32 %v293, %v414
        %v425 = vsub.f32 %v294, %v419
        %v426 = vmul.f32 %v420, 1.442695
        %v427 = vpow.pop %v426
        %v428 = vmul.f32 %v421, 1.442695
        %v429 = vpow.pop %v428
        %v430 = vmul.f32 %v422, 1.442695
        %v431 = vpow.pop %v430
        %v432 = vmul.f32 %v423, 1.442695
        %v433 = vpow.pop %v432
        %v434 = vmul.f32 %v424, 1.442695
        %v435 = vpow.pop %v434
        %v436 = vmul.f32 %v425, 1.442695
        %v437 = vpow.pop %v436
        %v438 = vsel %vm409, %v427, 0.0
        %v439 = vsel %vm409, %v431, 0.0
        %v440 = vadd.f32 %v438, %v439
        %v441 = vsel %vm409, %v435, 0.0
        %v442 = vadd.f32 %v440, %v441
        %v443 = vsel %vm409, %v429, 0.0
        %v444 = vsel %vm409, %v433, 0.0
        %v445 = vadd.f32 %v443, %v444
        %v446 = vsel %vm409, %v437, 0.0
        %v447 = vadd.f32 %v445, %v446
        %v448 = vrcp.pop %v442
        %v449 = vmul.f32 %v442, %v448
        %v450 = vsub.f32 1.0, %v449
        %v451 = vmul.f32 %v448, %v450
        %v452 = vadd.f32 %v448, %v451
        %vm453 = vweird.f32 %v442
        %vm454 = vweird.f32 %v448
        %vm455 = vmor %vm453, %vm454
        %v456 = vsel %vm455, %v448, %v452
        %v457 = vand.u32 2147483647, %v442
        %vm458 = vcmp.eq.f32.partialorder %v457, 8.507059e+37
        %v459 = vand.u32 %v442, 2147483648
        %v460 = vor.u32 1.1754944e-38, %v459
        %v461 = vsel %vm458, %v460, %v456
        %v462 = vmul.f32 %v427, %v461
        %v463 = vrcp.pop %v447
        %v464 = vmul.f32 %v447, %v463
        %v465 = vsub.f32 1.0, %v464
        %v466 = vmul.f32 %v463, %v465
        %v467 = vadd.f32 %v463, %v466
        %vm468 = vweird.f32 %v447
        %vm469 = vweird.f32 %v463
        %vm470 = vmor %vm468, %vm469
        %v471 = vsel %vm470, %v463, %v467
        %v472 = vand.u32 2147483647, %v447
        %vm473 = vcmp.eq.f32.partialorder %v472, 8.507059e+37
        %v474 = vand.u32 %v447, 2147483648
        %v475 = vor.u32 1.1754944e-38, %v474
        %v476 = vsel %vm473, %v475, %v471
        %v477 = vmul.f32 %v429, %v476
        %v478 = vmul.f32 %v431, %v461
        %v479 = vmul.f32 %v433, %v476
        %v480 = vmul.f32 %v435, %v461
        %v481 = vmul.f32 %v437, %v476
        %v482 = vmul.f32 %v414, 1.442695
        %v483 = vpow.pop %v482
        %v484 = vmul.f32 %v419, 1.442695
        %v485 = vpow.pop %v484
        %v486 = vmul.f32 %v427, %v483
        %v487 = vmul.f32 %v429, %v485
        %v488 = vmul.f32 %v431, %v483
        %v489 = vmul.f32 %v433, %v485
        %v490 = vmul.f32 %v435, %v483
        %v491 = vmul.f32 %v437, %v485
        %v492 = vld [vmem:[%s281] sm:$0x3]
        %v494 = vperm.slane %v492, 0
        %v495 = vperm.slane %v492, 1
        %v498 = vadd.f32 %v333, %v494
        %v499 = vadd.f32 %v348, %v495
        %v500 = vadd.f32 %v363, %v494
        %v501 = vadd.f32 %v378, %v495
        %v502 = vadd.f32 %v393, %v494
        %v503 = vadd.f32 %v408, %v495
        %v504 = vld [vmem:[%s286] sm:$0x3]
        %v506 = vperm.slane %v504, 0
        %v507 = vperm.slane %v504, 1
        %v510 = vadd.f32 %v333, %v506
        %v511 = vadd.f32 %v348, %v507
        %v512 = vadd.f32 %v363, %v506
        %v513 = vadd.f32 %v378, %v507
        %v514 = vadd.f32 %v393, %v506
        %v515 = vadd.f32 %v408, %v507
        %v516 = vld [vmem:[%s3] sm:$0x1]
        %v517 = vld [vmem:[%s3 + $0x1] sm:$0x1]
        %v518 = vld [vmem:[%s3 + $0x2] sm:$0x1]
        %v522 = vperm.slane %v516, 0
        %v523 = vperm.slane %v517, 0
        %v524 = vperm.slane %v518, 0
        %525 = vset.pattern.permute.xlu0 0
        %526 = vperm.xlu0 %525, %v522
        %v527 = vpop.permute.xlu0 %526
        %529 = vset.pattern.permute.xlu0 0
        %530 = vperm.xlu0 %529, %v523
        %v531 = vpop.permute.xlu0 %530
        %533 = vset.pattern.permute.xlu0 0
        %534 = vperm.xlu0 %533, %v524
        %v535 = vpop.permute.xlu0 %534
        %v537 = vmul.f32 %v486, %v527
        %v538 = vmul.f32 %v487, %v527
        %v539 = vmul.f32 %v488, %v531
        %v540 = vmul.f32 %v489, %v531
        %v541 = vmul.f32 %v490, %v535
        %v542 = vmul.f32 %v491, %v535
        %v543 = vld [vmem:[%s4] sm:$0x1]
        %v544 = vld [vmem:[%s4 + $0x1] sm:$0x1]
        %v545 = vld [vmem:[%s4 + $0x2] sm:$0x1]
        %v549 = vperm.slane %v543, 0
        %v550 = vperm.slane %v544, 0
        %v551 = vperm.slane %v545, 0
        %552 = vset.pattern.permute.xlu0 0
        %553 = vperm.xlu0 %552, %v549
        %v554 = vpop.permute.xlu0 %553
        %556 = vset.pattern.permute.xlu0 0
        %557 = vperm.xlu0 %556, %v550
        %v558 = vpop.permute.xlu0 %557
        %560 = vset.pattern.permute.xlu0 0
        %561 = vperm.xlu0 %560, %v551
        %v562 = vpop.permute.xlu0 %561
        %v564 = vmul.f32 %v486, %v554
        %v565 = vmul.f32 %v487, %v554
        %v566 = vmul.f32 %v488, %v558
        %v567 = vmul.f32 %v489, %v558
        %v568 = vmul.f32 %v490, %v562
        %v569 = vmul.f32 %v491, %v562
        %v570 = vlaneseq
        %v571 = vshrl.u32 %v570, 7
        %vm572 = vcmp.eq.s32.totalorder %v571, 0
        %vm573 = vcmp.eq.s32.totalorder %v571, 1
        %vm574 = vcmp.eq.s32.totalorder %v571, 2
        %vm575 = vcmp.eq.s32.totalorder %v571, 3
        %vm576 = vcmp.eq.s32.totalorder %v571, 4
        %v577 = vsel %vm576, %v333, %v462
        %v578 = vsel %vm576, %v348, %v477
        %v579 = vsel %vm576, %v363, %v478
        %v580 = vsel %vm576, %v378, %v479
        %v581 = vsel %vm576, %v393, %v480
        %v582 = vsel %vm576, %v408, %v481
        %v583 = vsel %vm575, %v564, %v577
        %v584 = vsel %vm575, %v565, %v578
        %v585 = vsel %vm575, %v566, %v579
        %v586 = vsel %vm575, %v567, %v580
        %v587 = vsel %vm575, %v568, %v581
        %v588 = vsel %vm575, %v569, %v582
        %v589 = vsel %vm574, %v537, %v583
        %v590 = vsel %vm574, %v538, %v584
        %v591 = vsel %vm574, %v539, %v585
        %v592 = vsel %vm574, %v540, %v586
        %v593 = vsel %vm574, %v541, %v587
        %v594 = vsel %vm574, %v542, %v588
        %v595 = vsel %vm573, %v510, %v589
        %v596 = vsel %vm573, %v511, %v590
        %v597 = vsel %vm573, %v512, %v591
        %v598 = vsel %vm573, %v513, %v592
        %v599 = vsel %vm573, %v514, %v593
        %v600 = vsel %vm573, %v515, %v594
        %v601 = vsel %vm572, %v498, %v595
        %v602 = vsel %vm572, %v499, %v596
        %v603 = vsel %vm572, %v500, %v597
        %v604 = vsel %vm572, %v501, %v598
        %v605 = vsel %vm572, %v502, %v599
        %v606 = vsel %vm572, %v503, %v600
        %607 = vst [vmem:[%s276] sm:$0x7f] %v601
        %608 = vst [vmem:[%s276 + $0x8] sm:$0x7f] %v602
        %609 = vst [vmem:[%s276 + $0x10] sm:$0x7f] %v603
        %610 = vst [vmem:[%s276 + $0x18] sm:$0x7f] %v604
        %611 = vst [vmem:[%s276 + $0x20] sm:$0x7f] %v605
        %612 = vst [vmem:[%s276 + $0x28] sm:$0x7f] %v606
        %s613 = sand.u32 %s144, 1
        %s614 = sand.u32 %s144, 1
        %s615 = smul.addr %s614, 48
        %s616 = scalar_lea.vmem [#allocation3], %s615
        // Predicated region
        $region64: #{_lambda_.27} parent=58 // pred_check
          %p617 = pneg %p154
        $region65: #{_lambda_.27} parent=58 // pred_check_branch
          %619 = sbr.rel (%p617) target = $region67
        $region66: #{_lambda_.27} parent=58 // pred_region
          %s620 = smul.u32 2, %s16
          %s621 = smul.addr %s620, 8
          %s622 = scalar_lea.vmem %s5, %s621
          // Predicated region
          $region68: #{_lambda_.27} parent=66 // pred_check
            _
          $region69: #{_lambda_.27} parent=66 // pred_check_branch
            %624 = sbr.rel (0) target = $region71
          $region70: #{_lambda_.27} parent=66 // pred_region
            // Predicated region
            $region72: #{_lambda_.27} parent=70 // pred_check
              _
            $region73: #{_lambda_.27} parent=70 // pred_check_branch
              %626 = sbr.rel (0) target = $region75
            $region74: #{_lambda_.27} parent=70 // pred_region
              loop: start=0, step=1, limit=1
              $region76: #{_lambda_.27} parent=74 // loop_pre_header
                _
              $region77: #{_lambda_.27} parent=74 // loop_header
                %s628 = sphi 0, %s632
                %p629 = scmp.ge.s32.totalorder %s628, 1
                %s633 = sphi %s616, %s616
                %s634 = sphi %s622, %s622
              $region78: #{_lambda_.27} parent=74 // loop_header_branch
                %631 = sbr.rel (%p629) target = $region82
              $region79: #{_lambda_.27} parent=74 // loop_body
                %v635 = vld [vmem:[%s633] sm:$0xff]
                %636 = vst [vmem:[%s634] sm:$0xff] %v635
                %v637 = vld [vmem:[%s633 + $0x8] sm:$0xff]
                %638 = vst [vmem:[%s634 + $0x8] sm:$0xff] %v637
                %v639 = vld [vmem:[%s633 + $0x10] sm:$0xff]
                %640 = vst [vmem:[%s634 + $0x20] sm:$0xff] %v639
                %v641 = vld [vmem:[%s633 + $0x18] sm:$0xff]
                %642 = vst [vmem:[%s634 + $0x28] sm:$0xff] %v641
                %v643 = vld [vmem:[%s633 + $0x20] sm:$0xff]
                %644 = vst [vmem:[%s634 + $0x40] sm:$0xff] %v643
                %v645 = vld [vmem:[%s633 + $0x28] sm:$0xff]
                %646 = vst [vmem:[%s634 + $0x48] sm:$0xff] %v645
              $region80: #{_lambda_.27} parent=74 // loop_footer
                %s632 = sadd.s32 1, %s628
              $region81: #{_lambda_.27} parent=74 // loop_footer_branch
                %627 = sbr.rel target = $region77
              $region82: #{_lambda_.27} parent=74 // loop_exit
                _
            $region75: #{_lambda_.27} parent=70 // pred_fallthru
              _
            // Predicated region
            $region83: #{_lambda_.27} parent=70 // pred_check
              _
            $region84: #{_lambda_.27} parent=70 // pred_check_branch
              %648 = sbr.rel target = $region86
            $region85: #{_lambda_.27} parent=70 // pred_region
              _
            $region86: #{_lambda_.27} parent=70 // pred_fallthru
              _
          $region71: #{_lambda_.27} parent=66 // pred_fallthru
            _
          %649 = vnop
        $region67: #{_lambda_.27} parent=58 // pred_fallthru
          _
      $region59: #{_lambda_.27} parent=5 // pred_fallthru
        _
      %p650 = scmp.le.s32.totalorder 2, %s11
      // Predicated region
      $region87: #{_lambda_.27} parent=5 // pred_check
        %p651 = pneg %p650
      $region88: #{_lambda_.27} parent=5 // pred_check_branch
        %653 = sbr.rel (%p651) target = $region90
      $region89: #{_lambda_.27} parent=5 // pred_region
        %s654 = ssub.s32 %s11, 2
        // Predicated region
        $region91: #{_lambda_.27} parent=89 // pred_check
          %p655 = pneg %p160
        $region92: #{_lambda_.27} parent=89 // pred_check_branch
          %657 = sbr.rel (%p655) target = $region94
        $region93: #{_lambda_.27} parent=89 // pred_region
          %s658 = sand.u32 %s145, 1
          %s659 = sand.u32 %s145, 1
          %s660 = smul.addr %s659, 48
          %s661 = scalar_lea.vmem [#allocation3], %s660
        $region94: #{_lambda_.27} parent=89 // pred_fallthru
          _
      $region90: #{_lambda_.27} parent=5 // pred_fallthru
        _
    $region6: #{_lambda_.27} parent=1 // loop_footer
      %s15 = sadd.s32 1, %s11
    $region7: #{_lambda_.27} parent=1 // loop_footer_branch
      %10 = sbr.rel target = $region3
    $region8: #{_lambda_.27} parent=1 // loop_exit
      _

// kernel: _lambda_.23
$region0: #{_lambda_.23}
  #allocation0 [shape = 'u32[]', space=smem, size = 0x4, offset = 0x4, fixed_abs, tag = 'smem constant byte address 0x4 - core index']
  #allocation1 [shape = 'u32[72,128]{1,0:T(1,128)}', space=vmem, size = 0x9000, scoped, tag = 'internal scratch']
  %s0 = inlined_call_operand.vmem [shape: f32[128,128], index: 0, kind: input, shape index: {}]
  %s1 = inlined_call_operand.vmem [shape: f32[128,128], index: 1, kind: input, shape index: {}]
  %s2 = inlined_call_operand.vmem [shape: f32[1,128], index: 2, kind: input, shape index: {}]
  %s3 = inlined_call_operand.vmem [shape: f32[1,128], index: 3, kind: input, shape index: {}]
  %s4 = inlined_call_operand.vmem [shape: f32[128,128], index: 4, kind: output, shape index: {}]
  %s5 = sld [smem:[#allocation0]]
  $region26: #{_lambda_.23} parent=0
    _
  %s7 = ssub.s32 1, %s5
  %s8 = scalar_select 0, %s7, %s5
  // Predicated region
  $region2: #{_lambda_.23} parent=0 // pred_check
    _
  $region3: #{_lambda_.23} parent=0 // pred_check_branch
    %10 = sbr.rel (0) target = $region5
  $region4: #{_lambda_.23} parent=0 // pred_region
    _
  $region5: #{_lambda_.23} parent=0 // pred_fallthru
    _
  // Predicated region
  $region6: #{_lambda_.23} parent=0 // pred_check
    _
  $region7: #{_lambda_.23} parent=0 // pred_check_branch
    %12 = sbr.rel (0) target = $region9
  $region8: #{_lambda_.23} parent=0 // pred_region
    _
  $region9: #{_lambda_.23} parent=0 // pred_fallthru
    _
  // Predicated region
  $region10: #{_lambda_.23} parent=0 // pred_check
    _
  $region11: #{_lambda_.23} parent=0 // pred_check_branch
    %14 = sbr.rel (0) target = $region13
  $region12: #{_lambda_.23} parent=0 // pred_region
    _
  $region13: #{_lambda_.23} parent=0 // pred_fallthru
    _
  // Predicated region
  $region14: #{_lambda_.23} parent=0 // pred_check
    _
  $region15: #{_lambda_.23} parent=0 // pred_check_branch
    %16 = sbr.rel (0) target = $region17
  $region16: #{_lambda_.23} parent=0 // pred_region
    _
  $region17: #{_lambda_.23} parent=0 // pred_fallthru
    _
  %v17 = vld [vmem:[%s0] sm:$0xff]
  %v18 = vld [vmem:[%s0 + $0x8] sm:$0xff]
  %v19 = vld [vmem:[%s0 + $0x10] sm:$0xff]
  %v20 = vld [vmem:[%s0 + $0x18] sm:$0xff]
  %v21 = vld [vmem:[%s0 + $0x20] sm:$0xff]
  %v22 = vld [vmem:[%s0 + $0x28] sm:$0xff]
  %v23 = vld [vmem:[%s0 + $0x30] sm:$0xff]
  %v24 = vld [vmem:[%s0 + $0x38] sm:$0xff]
  %v25 = vld [vmem:[%s0 + $0x40] sm:$0xff]
  %v26 = vld [vmem:[%s0 + $0x48] sm:$0xff]
  %v27 = vld [vmem:[%s0 + $0x50] sm:$0xff]
  %v28 = vld [vmem:[%s0 + $0x58] sm:$0xff]
  %v29 = vld [vmem:[%s0 + $0x60] sm:$0xff]
  %v30 = vld [vmem:[%s0 + $0x68] sm:$0xff]
  %v31 = vld [vmem:[%s0 + $0x70] sm:$0xff]
  %v32 = vld [vmem:[%s0 + $0x78] sm:$0xff]
  %v33 = vld [vmem:[%s1] sm:$0xff]
  %v34 = vld [vmem:[%s1 + $0x8] sm:$0xff]
  %v35 = vld [vmem:[%s1 + $0x10] sm:$0xff]
  %v36 = vld [vmem:[%s1 + $0x18] sm:$0xff]
  %v37 = vld [vmem:[%s1 + $0x20] sm:$0xff]
  %v38 = vld [vmem:[%s1 + $0x28] sm:$0xff]
  %v39 = vld [vmem:[%s1 + $0x30] sm:$0xff]
  %v40 = vld [vmem:[%s1 + $0x38] sm:$0xff]
  %v41 = vld [vmem:[%s1 + $0x40] sm:$0xff]
  %v42 = vld [vmem:[%s1 + $0x48] sm:$0xff]
  %v43 = vld [vmem:[%s1 + $0x50] sm:$0xff]
  %v44 = vld [vmem:[%s1 + $0x58] sm:$0xff]
  %v45 = vld [vmem:[%s1 + $0x60] sm:$0xff]
  %v46 = vld [vmem:[%s1 + $0x68] sm:$0xff]
  %v47 = vld [vmem:[%s1 + $0x70] sm:$0xff]
  %v48 = vld [vmem:[%s1 + $0x78] sm:$0xff]
  %49 = vmatpush.msra.mxu0 %v48
  %50 = vmatpush.msra.mxu0 %v47
  %51 = vmatpush.msra.mxu0 %v46
  %52 = vmatpush.msra.mxu0 %v45
  %53 = vmatpush.msra.mxu0 %v44
  %54 = vmatpush.msra.mxu0 %v43
  %55 = vmatpush.msra.mxu0 %v42
  %56 = vmatpush.msra.mxu0 %v41
  %57 = vmatpush.msra.mxu0 %v40
  %58 = vmatpush.msra.mxu0 %v39
  %59 = vmatpush.msra.mxu0 %v38
  %60 = vmatpush.msra.mxu0 %v37
  %61 = vmatpush.msra.mxu0 %v36
  %62 = vmatpush.msra.mxu0 %v35
  %63 = vmatpush.msra.mxu0 %v34
  %64 = vmatpush.msra.mxu0 %v33
  %65 = vmatmul.f32.gmra.mxu0 %v17
  %v66 = vpop.f32.mrf.mxu0
  %v67 = vadd.f32 0.0, %v66
  %68 = vmatmul.f32.gmra.mxu0 %v18
  %v69 = vpop.f32.mrf.mxu0
  %v70 = vadd.f32 0.0, %v69
  %71 = vmatmul.f32.gmra.mxu0 %v19
  %v72 = vpop.f32.mrf.mxu0
  %v73 = vadd.f32 0.0, %v72
  %74 = vmatmul.f32.gmra.mxu0 %v20
  %v75 = vpop.f32.mrf.mxu0
  %v76 = vadd.f32 0.0, %v75
  %77 = vmatmul.f32.gmra.mxu0 %v21
  %v78 = vpop.f32.mrf.mxu0
  %v79 = vadd.f32 0.0, %v78
  %80 = vmatmul.f32.gmra.mxu0 %v22
  %v81 = vpop.f32.mrf.mxu0
  %v82 = vadd.f32 0.0, %v81
  %83 = vmatmul.f32.gmra.mxu0 %v23
  %v84 = vpop.f32.mrf.mxu0
  %v85 = vadd.f32 0.0, %v84
  %86 = vmatmul.f32.gmra.mxu0 %v24
  %v87 = vpop.f32.mrf.mxu0
  %v88 = vadd.f32 0.0, %v87
  %89 = vmatmul.f32.gmra.mxu0 %v25
  %v90 = vpop.f32.mrf.mxu0
  %v91 = vadd.f32 0.0, %v90
  %92 = vmatmul.f32.gmra.mxu0 %v26
  %v93 = vpop.f32.mrf.mxu0
  %v94 = vadd.f32 0.0, %v93
  %95 = vmatmul.f32.gmra.mxu0 %v27
  %v96 = vpop.f32.mrf.mxu0
  %v97 = vadd.f32 0.0, %v96
  %98 = vmatmul.f32.gmra.mxu0 %v28
  %v99 = vpop.f32.mrf.mxu0
  %v100 = vadd.f32 0.0, %v99
  %101 = vmatmul.f32.gmra.mxu0 %v29
  %v102 = vpop.f32.mrf.mxu0
  %v103 = vadd.f32 0.0, %v102
  %104 = vmatmul.f32.gmra.mxu0 %v30
  %v105 = vpop.f32.mrf.mxu0
  %v106 = vadd.f32 0.0, %v105
  %107 = vmatmul.f32.gmra.mxu0 %v31
  %v108 = vpop.f32.mrf.mxu0
  %v109 = vadd.f32 0.0, %v108
  %110 = vmatmul.f32.gmra.mxu0 %v32
  %v111 = vpop.f32.mrf.mxu0
  %v112 = vadd.f32 0.0, %v111
  %113 = vdwg.mxu0
  %v114 = vld [vmem:[%s2] sm:$0x1]
  %v116 = vperm.slane %v114, 0
  %v118 = vmul.f32 %v67, %v116
  %v119 = vmul.f32 %v70, %v116
  %v120 = vmul.f32 %v73, %v116
  %v121 = vmul.f32 %v76, %v116
  %v122 = vmul.f32 %v79, %v116
  %v123 = vmul.f32 %v82, %v116
  %v124 = vmul.f32 %v85, %v116
  %v125 = vmul.f32 %v88, %v116
  %v126 = vmul.f32 %v91, %v116
  %v127 = vmul.f32 %v94, %v116
  %v128 = vmul.f32 %v97, %v116
  %v129 = vmul.f32 %v100, %v116
  %v130 = vmul.f32 %v103, %v116
  %v131 = vmul.f32 %v106, %v116
  %v132 = vmul.f32 %v109, %v116
  %v133 = vmul.f32 %v112, %v116
  %v134 = vld [vmem:[%s3] sm:$0x1]
  %v136 = vperm.slane %v134, 0
  %v138 = vadd.f32 %v118, %v136
  %v139 = vadd.f32 %v119, %v136
  %v140 = vadd.f32 %v120, %v136
  %v141 = vadd.f32 %v121, %v136
  %v142 = vadd.f32 %v122, %v136
  %v143 = vadd.f32 %v123, %v136
  %v144 = vadd.f32 %v124, %v136
  %v145 = vadd.f32 %v125, %v136
  %v146 = vadd.f32 %v126, %v136
  %v147 = vadd.f32 %v127, %v136
  %v148 = vadd.f32 %v128, %v136
  %v149 = vadd.f32 %v129, %v136
  %v150 = vadd.f32 %v130, %v136
  %v151 = vadd.f32 %v131, %v136
  %v152 = vadd.f32 %v132, %v136
  %v153 = vadd.f32 %v133, %v136
  %154 = vst [vmem:[%s4] sm:$0xff] %v138
  %155 = vst [vmem:[%s4 + $0x8] sm:$0xff] %v139
  %156 = vst [vmem:[%s4 + $0x10] sm:$0xff] %v140
  %157 = vst [vmem:[%s4 + $0x18] sm:$0xff] %v141
  %158 = vst [vmem:[%s4 + $0x20] sm:$0xff] %v142
  %159 = vst [vmem:[%s4 + $0x28] sm:$0xff] %v143
  %160 = vst [vmem:[%s4 + $0x30] sm:$0xff] %v144
  %161 = vst [vmem:[%s4 + $0x38] sm:$0xff] %v145
  %162 = vst [vmem:[%s4 + $0x40] sm:$0xff] %v146
  %163 = vst [vmem:[%s4 + $0x48] sm:$0xff] %v147
  %164 = vst [vmem:[%s4 + $0x50] sm:$0xff] %v148
  %165 = vst [vmem:[%s4 + $0x58] sm:$0xff] %v149
  %166 = vst [vmem:[%s4 + $0x60] sm:$0xff] %v150
  %167 = vst [vmem:[%s4 + $0x68] sm:$0xff] %v151
  %168 = vst [vmem:[%s4 + $0x70] sm:$0xff] %v152
  %169 = vst [vmem:[%s4 + $0x78] sm:$0xff] %v153
  // Predicated region
  $region18: #{_lambda_.23} parent=0 // pred_check
    _
  $region19: #{_lambda_.23} parent=0 // pred_check_branch
    %171 = sbr.rel (0) target = $region21
  $region20: #{_lambda_.23} parent=0 // pred_region
    _
  $region21: #{_lambda_.23} parent=0 // pred_fallthru
    _
  // Predicated region
  $region22: #{_lambda_.23} parent=0 // pred_check
    _
  $region23: #{_lambda_.23} parent=0 // pred_check_branch
    %173 = sbr.rel (0) target = $region25
  $region24: #{_lambda_.23} parent=0 // pred_region
    _
  $region25: #{_lambda_.23} parent=0 // pred_fallthru
    _

// kernel: _lambda_.24
$region0: #{_lambda_.24}
  #allocation0 [shape = 'u32[]', space=smem, size = 0x4, offset = 0x4, fixed_abs, tag = 'smem constant byte address 0x4 - core index']
  #allocation1 [shape = 'u32[72,128]{1,0:T(1,128)}', space=vmem, size = 0x9000, scoped, tag = 'internal scratch']
  %s0 = inlined_call_operand.vmem [shape: f32[3,7,128], index: 0, kind: input, shape index: {}]
  %s1 = inlined_call_operand.vmem [shape: f32[1,1,128], index: 1, kind: input, shape index: {}]
  %s2 = inlined_call_operand.vmem [shape: f32[1,1,128], index: 2, kind: input, shape index: {}]
  %s3 = inlined_call_operand.vmem [shape: f32[3,1,1], index: 3, kind: input, shape index: {}]
  %s4 = inlined_call_operand.vmem [shape: f32[3,1,1], index: 4, kind: input, shape index: {}]
  %s5 = inlined_call_operand.vmem [shape: f32[3,7,128], index: 5, kind: output, shape index: {}]
  %s6 = sld [smem:[#allocation0]]
  $region30: #{_lambda_.24} parent=0
    _
  %s8 = ssub.s32 1, %s6
  %s9 = scalar_select 0, %s8, %s6
  // Predicated region
  $region2: #{_lambda_.24} parent=0 // pred_check
    _
  $region3: #{_lambda_.24} parent=0 // pred_check_branch
    %11 = sbr.rel (0) target = $region5
  $region4: #{_lambda_.24} parent=0 // pred_region
    _
  $region5: #{_lambda_.24} parent=0 // pred_fallthru
    _
  // Predicated region
  $region6: #{_lambda_.24} parent=0 // pred_check
    _
  $region7: #{_lambda_.24} parent=0 // pred_check_branch
    %13 = sbr.rel (0) target = $region9
  $region8: #{_lambda_.24} parent=0 // pred_region
    _
  $region9: #{_lambda_.24} parent=0 // pred_fallthru
    _
  // Predicated region
  $region10: #{_lambda_.24} parent=0 // pred_check
    _
  $region11: #{_lambda_.24} parent=0 // pred_check_branch
    %15 = sbr.rel (0) target = $region13
  $region12: #{_lambda_.24} parent=0 // pred_region
    _
  $region13: #{_lambda_.24} parent=0 // pred_fallthru
    _
  // Predicated region
  $region14: #{_lambda_.24} parent=0 // pred_check
    _
  $region15: #{_lambda_.24} parent=0 // pred_check_branch
    %17 = sbr.rel (0) target = $region17
  $region16: #{_lambda_.24} parent=0 // pred_region
    _
  $region17: #{_lambda_.24} parent=0 // pred_fallthru
    _
  // Predicated region
  $region18: #{_lambda_.24} parent=0 // pred_check
    _
  $region19: #{_lambda_.24} parent=0 // pred_check_branch
    %19 = sbr.rel (0) target = $region21
  $region20: #{_lambda_.24} parent=0 // pred_region
    _
  $region21: #{_lambda_.24} parent=0 // pred_fallthru
    _
  %v20 = vld [vmem:[%s0] sm:$0x7f]
  %v21 = vld [vmem:[%s0 + $0x8] sm:$0x7f]
  %v22 = vld [vmem:[%s0 + $0x10] sm:$0x7f]
  %v23 = vsub.f32 0.0, %v20
  %v24 = vsub.f32 0.0, %v21
  %v25 = vsub.f32 0.0, %v22
  %v26 = vmul.f32 %v23, 1.442695
  %v27 = vpow.pop %v26
  %v28 = vmul.f32 %v24, 1.442695
  %v29 = vpow.pop %v28
  %v30 = vmul.f32 %v25, 1.442695
  %v31 = vpow.pop %v30
  %v32 = vadd.f32 %v27, 1.0
  %v33 = vadd.f32 %v29, 1.0
  %v34 = vadd.f32 %v31, 1.0
  %v35 = vrcp.pop %v32
  %v36 = vmul.f32 %v32, %v35
  %v37 = vsub.f32 1.0, %v36
  %v38 = vmul.f32 %v35, %v37
  %v39 = vadd.f32 %v35, %v38
  %vm40 = vweird.f32 %v32
  %vm41 = vweird.f32 %v35
  %vm42 = vmor %vm40, %vm41
  %v43 = vsel %vm42, %v35, %v39
  %v44 = vand.u32 2147483647, %v32
  %vm45 = vcmp.eq.f32.partialorder %v44, 8.507059e+37
  %v46 = vand.u32 %v32, 2147483648
  %v47 = vor.u32 1.1754944e-38, %v46
  %v48 = vsel %vm45, %v47, %v43
  %v49 = vmul.f32 1.0, %v48
  %v50 = vrcp.pop %v33
  %v51 = vmul.f32 %v33, %v50
  %v52 = vsub.f32 1.0, %v51
  %v53 = vmul.f32 %v50, %v52
  %v54 = vadd.f32 %v50, %v53
  %vm55 = vweird.f32 %v33
  %vm56 = vweird.f32 %v50
  %vm57 = vmor %vm55, %vm56
  %v58 = vsel %vm57, %v50, %v54
  %v59 = vand.u32 2147483647, %v33
  %vm60 = vcmp.eq.f32.partialorder %v59, 8.507059e+37
  %v61 = vand.u32 %v33, 2147483648
  %v62 = vor.u32 1.1754944e-38, %v61
  %v63 = vsel %vm60, %v62, %v58
  %v64 = vmul.f32 1.0, %v63
  %v65 = vrcp.pop %v34
  %v66 = vmul.f32 %v34, %v65
  %v67 = vsub.f32 1.0, %v66
  %v68 = vmul.f32 %v65, %v67
  %v69 = vadd.f32 %v65, %v68
  %vm70 = vweird.f32 %v34
  %vm71 = vweird.f32 %v65
  %vm72 = vmor %vm70, %vm71
  %v73 = vsel %vm72, %v65, %v69
  %v74 = vand.u32 2147483647, %v34
  %vm75 = vcmp.eq.f32.partialorder %v74, 8.507059e+37
  %v76 = vand.u32 %v34, 2147483648
  %v77 = vor.u32 1.1754944e-38, %v76
  %v78 = vsel %vm75, %v77, %v73
  %v79 = vmul.f32 1.0, %v78
  %vm80 = vcmask 1046528
  %v81 = vsel %vm80, %v20, -inf
  %v82 = vsel %vm80, %v21, -inf
  %v83 = vsel %vm80, %v22, -inf
  %v84 = vmax.f32 %v81, %v82
  %v85 = vmax.f32 %v84, %v83
  %v86 = vsub.f32 %v20, %v85
  %v87 = vsub.f32 %v21, %v85
  %v88 = vsub.f32 %v22, %v85
  %v89 = vmul.f32 %v86, 1.442695
  %v90 = vpow.pop %v89
  %v91 = vmul.f32 %v87, 1.442695
  %v92 = vpow.pop %v91
  %v93 = vmul.f32 %v88, 1.442695
  %v94 = vpow.pop %v93
  %v95 = vsel %vm80, %v90, 0.0
  %v96 = vsel %vm80, %v92, 0.0
  %v97 = vadd.f32 %v95, %v96
  %v98 = vsel %vm80, %v94, 0.0
  %v99 = vadd.f32 %v97, %v98
  %v100 = vrcp.pop %v99
  %v101 = vmul.f32 %v99, %v100
  %v102 = vsub.f32 1.0, %v101
  %v103 = vmul.f32 %v100, %v102
  %v104 = vadd.f32 %v100, %v103
  %vm105 = vweird.f32 %v99
  %vm106 = vweird.f32 %v100
  %vm107 = vmor %vm105, %vm106
  %v108 = vsel %vm107, %v100, %v104
  %v109 = vand.u32 2147483647, %v99
  %vm110 = vcmp.eq.f32.partialorder %v109, 8.507059e+37
  %v111 = vand.u32 %v99, 2147483648
  %v112 = vor.u32 1.1754944e-38, %v111
  %v113 = vsel %vm110, %v112, %v108
  %v114 = vmul.f32 %v90, %v113
  %v115 = vmul.f32 %v92, %v113
  %v116 = vmul.f32 %v94, %v113
  %v117 = vmul.f32 %v85, 1.442695
  %v118 = vpow.pop %v117
  %v119 = vmul.f32 %v90, %v118
  %v120 = vmul.f32 %v92, %v118
  %v121 = vmul.f32 %v94, %v118
  %v122 = vld [vmem:[%s1] sm:$0x1]
  %v124 = vperm.slane %v122, 0
  %v126 = vadd.f32 %v49, %v124
  %v127 = vadd.f32 %v64, %v124
  %v128 = vadd.f32 %v79, %v124
  %v129 = vmul.f32 %v126, 2.0
  %v130 = vmul.f32 %v127, 2.0
  %v131 = vmul.f32 %v128, 2.0
  %v132 = vld [vmem:[%s2] sm:$0x1]
  %v134 = vperm.slane %v132, 0
  %v136 = vadd.f32 %v49, %v134
  %v137 = vadd.f32 %v64, %v134
  %v138 = vadd.f32 %v79, %v134
  %v139 = vmul.f32 %v136, 2.0
  %v140 = vmul.f32 %v137, 2.0
  %v141 = vmul.f32 %v138, 2.0
  %v142 = vld [vmem:[%s3] sm:$0x1]
  %v143 = vld [vmem:[%s3 + $0x1] sm:$0x1]
  %v144 = vld [vmem:[%s3 + $0x2] sm:$0x1]
  %v148 = vperm.slane %v142, 0
  %v149 = vperm.slane %v143, 0
  %v150 = vperm.slane %v144, 0
  %151 = vset.pattern.permute.xlu0 0
  %152 = vperm.xlu0 %151, %v148
  %v153 = vpop.permute.xlu0 %152
  %155 = vset.pattern.permute.xlu0 0
  %156 = vperm.xlu0 %155, %v149
  %v157 = vpop.permute.xlu0 %156
  %159 = vset.pattern.permute.xlu0 0
  %160 = vperm.xlu0 %159, %v150
  %v161 = vpop.permute.xlu0 %160
  %v163 = vmul.f32 %v119, %v153
  %v164 = vmul.f32 %v120, %v157
  %v165 = vmul.f32 %v121, %v161
  %v166 = vmul.f32 %v163, 2.0
  %v167 = vmul.f32 %v164, 2.0
  %v168 = vmul.f32 %v165, 2.0
  %v169 = vld [vmem:[%s4] sm:$0x1]
  %v170 = vld [vmem:[%s4 + $0x1] sm:$0x1]
  %v171 = vld [vmem:[%s4 + $0x2] sm:$0x1]
  %v175 = vperm.slane %v169, 0
  %v176 = vperm.slane %v170, 0
  %v177 = vperm.slane %v171, 0
  %178 = vset.pattern.permute.xlu0 0
  %179 = vperm.xlu0 %178, %v175
  %v180 = vpop.permute.xlu0 %179
  %182 = vset.pattern.permute.xlu0 0
  %183 = vperm.xlu0 %182, %v176
  %v184 = vpop.permute.xlu0 %183
  %186 = vset.pattern.permute.xlu0 0
  %187 = vperm.xlu0 %186, %v177
  %v188 = vpop.permute.xlu0 %187
  %v190 = vmul.f32 %v119, %v180
  %v191 = vmul.f32 %v120, %v184
  %v192 = vmul.f32 %v121, %v188
  %v193 = vmul.f32 %v190, 2.0
  %v194 = vmul.f32 %v191, 2.0
  %v195 = vmul.f32 %v192, 2.0
  %v196 = vlaneseq
  %v197 = vshrl.u32 %v196, 7
  %vm198 = vcmp.eq.s32.totalorder %v197, 0
  %vm199 = vcmp.eq.s32.totalorder %v197, 1
  %vm200 = vcmp.eq.s32.totalorder %v197, 2
  %vm201 = vcmp.eq.s32.totalorder %v197, 3
  %vm202 = vcmp.eq.s32.totalorder %v197, 4
  %v203 = vsel %vm202, %v49, %v114
  %v204 = vsel %vm202, %v64, %v115
  %v205 = vsel %vm202, %v79, %v116
  %v206 = vsel %vm201, %v193, %v203
  %v207 = vsel %vm201, %v194, %v204
  %v208 = vsel %vm201, %v195, %v205
  %v209 = vsel %vm200, %v166, %v206
  %v210 = vsel %vm200, %v167, %v207
  %v211 = vsel %vm200, %v168, %v208
  %v212 = vsel %vm199, %v139, %v209
  %v213 = vsel %vm199, %v140, %v210
  %v214 = vsel %vm199, %v141, %v211
  %v215 = vsel %vm198, %v129, %v212
  %v216 = vsel %vm198, %v130, %v213
  %v217 = vsel %vm198, %v131, %v214
  %218 = vst [vmem:[%s5] sm:$0x7f] %v215
  %219 = vst [vmem:[%s5 + $0x8] sm:$0x7f] %v216
  %220 = vst [vmem:[%s5 + $0x10] sm:$0x7f] %v217
  // Predicated region
  $region22: #{_lambda_.24} parent=0 // pred_check
    _
  $region23: #{_lambda_.24} parent=0 // pred_check_branch
    %222 = sbr.rel (0) target = $region25
  $region24: #{_lambda_.24} parent=0 // pred_region
    _
  $region25: #{_lambda_.24} parent=0 // pred_fallthru
    _
  // Predicated region
  $region26: #{_lambda_.24} parent=0 // pred_check
    _
  $region27: #{_lambda_.24} parent=0 // pred_check_branch
    %224 = sbr.rel (0) target = $region29
  $region28: #{_lambda_.24} parent=0 // pred_region
    _
  $region29: #{_lambda_.24} parent=0 // pred_fallthru
    _

</llo_original>
